<compile_context>
chip_gen: v7x
topology: tpu7x:2x2x1
jax: 0.10.0
libtpu: 0.0.40
codegen_flags: <defaults>
</compile_context>

<pallas_src>
import functools

import jax
import jax.numpy as jnp
from jax.experimental import pallas as pl
from jax.experimental.pallas import tpu as pltpu


# ----------------------------------------------------------------------------
# Pallas kernel
# ----------------------------------------------------------------------------
def _blending_kernel(n_seg, n_lin, n_src, *refs):
    """refs = (seg_0..seg_{n_seg-1},
               W0_seg_0..W0_seg_{n_seg-1}, b0,
               W1, b1, ..., W_{n_lin-1}, b_{n_lin-1},
               gw, mask, color2d, out)."""
    idx = 0
    seg_refs = refs[idx:idx + n_seg]; idx += n_seg
    w0_refs = refs[idx:idx + n_seg]; idx += n_seg
    b0_ref = refs[idx]; idx += 1
    lin_refs = refs[idx:idx + 2 * (n_lin - 1)]; idx += 2 * (n_lin - 1)
    gw_ref, mask_ref, color_ref, out_ref = refs[idx:idx + 4]

    # --- layer 0: split-K matmul over the (un-concatenated) input segments ---
    x = jnp.dot(seg_refs[0][...].astype(jnp.float32), w0_refs[0][...],
                preferred_element_type=jnp.float32)
    for s in range(1, n_seg):
        x = x + jnp.dot(seg_refs[s][...].astype(jnp.float32), w0_refs[s][...],
                        preferred_element_type=jnp.float32)
    x = x + b0_ref[...]
    if n_lin > 1:
        x = jnp.maximum(x, 0.0)                              # ReLU after layer 0

    # --- remaining Linear(+ReLU) layers (MXU matmuls) ---
    for l in range(1, n_lin):
        w = lin_refs[2 * (l - 1)][...]                       # (d_in_l, d_out_l)
        b = lin_refs[2 * (l - 1) + 1][...]                   # (1, d_out_l)
        x = jnp.dot(x, w, preferred_element_type=jnp.float32) + b
        if l < n_lin - 1:
            x = jnp.maximum(x, 0.0)

    # --- fused softmax over src views + mask renormalization ---
    # w = softmax(x+gw)*m / (sum(softmax(x+gw)*m) + 1e-8)
    #   = e*m / (sum(e*m) + 1e-8*sum(e))          (e = exp(shifted fused))
    fused = x + gw_ref[...]                                  # (tn, S) + (1, S)
    fused = fused - jnp.max(fused, axis=-1, keepdims=True)
    e = jnp.exp(fused)
    m = mask_ref[...].astype(jnp.float32)                    # (tn, S)
    em = e * m
    denom = (jnp.sum(em, axis=-1, keepdims=True)
             + 1e-8 * jnp.sum(e, axis=-1, keepdims=True))    # (tn, 1)
    w_pix = em * pl.reciprocal(denom, approx=False)          # exact, tiny column
    # TODO(synk): runtime NaN check + raise ("NaN encountered in gumbel softmax")
    # has no in-kernel equivalent; values are produced identically, check omitted.

    # --- weighted color blend on the 2-D (tn, 3S) color slab ---
    # color2d[:, 3*s + c] == pts_pixel_color[:, s, c]
    color2d = color_ref[...].astype(jnp.float32)             # (tn, 3S)
    blended = w_pix[:, 0:1] * color2d[:, 0:3]
    for s in range(1, n_src):
        blended = blended + w_pix[:, s:s + 1] * color2d[:, 3 * s:3 * (s + 1)]
    mask_sum = jnp.sum(m, axis=-1, keepdims=True)            # (tn, 1)
    out_ref[...] = jnp.concatenate([blended, mask_sum], axis=-1)


# ----------------------------------------------------------------------------
# Wrapper (glue + pallas_call)
# ----------------------------------------------------------------------------
def _cdiv(a, b):
    return -(-a // b)


def _padded_2d_bytes(shape, itemsize):
    rows = shape[0] if len(shape) >= 2 else 1
    cols = shape[-1]
    return _cdiv(rows, 8) * 8 * _cdiv(cols, 128) * 128 * itemsize


def blending_forward(points, normals, view_dirs, feature_vectors, ref_rel_idx,
                     pts_pixel_color, pts_pixel_mask, params, mode="idr",
                     max_tn=2048):
    # TODO(synk): multires_view > 0 positional-encoding embedder not implemented
    # (default module config uses embedview_fn=None).
    normals = jax.lax.stop_gradient(normals)                 # normals.detach()
    if mode == "idr":
        segments = [points, view_dirs, normals, feature_vectors]
    elif mode == "no_view_dir":
        segments = [points, normals, feature_vectors]
    elif mode == "no_normal":
        segments = [points, view_dirs, feature_vectors]
    else:
        raise ValueError(mode)

    N = points.shape[0]
    S = pts_pixel_mask.shape[-1]
    weights = params["weights"]                 # list of (W [din,dout], b [1,dout])
    n_lin = len(weights)

    # Split layer-0 weight rows per input segment (tiny, wrapper-side):
    # avoids materializing the concatenated [N, D0] activation in HBM.
    W0, b0 = weights[0]
    seg_dims = [int(s.shape[-1]) for s in segments]
    assert sum(seg_dims) == W0.shape[0]
    w0_slices, off = [], 0
    for d in seg_dims:
        w0_slices.append(W0[off:off + d, :])
        off += d

    # global_weights[ref_rel_idx : ref_rel_idx + 1] -> (1, S)
    gw = params["global_weights"]
    gw_row = jax.lax.dynamic_slice(gw, (ref_rel_idx, 0), (1, gw.shape[1]))

    # Free reshape of the contiguous (N, S, 3) color array -> lane-dense (N, 3S)
    color2d = pts_pixel_color.reshape(N, 3 * S)
    mask = pts_pixel_mask

    # --- VMEM-aware tile selection (lane padding + double buffering counted) ---
    def lane_pad(d):
        return _cdiv(d, 128) * 128

    row_bytes = 0                                   # per-row, per pipeline buffer
    for s in segments:
        row_bytes += lane_pad(s.shape[-1]) * s.dtype.itemsize
    row_bytes += lane_pad(S) * mask.dtype.itemsize
    row_bytes += lane_pad(3 * S) * color2d.dtype.itemsize
    row_bytes += lane_pad(4) * 4                    # merged f32 output

    pipeline_budget = 28 << 20                      # fits every gen's scoped VMEM
    cap = max(8, (pipeline_budget // (2 * row_bytes)) // 8 * 8)
    tn = min(max_tn, cap)
    # Keep >= ~8 grid steps when N allows (pipeline depth / megacore sharding),
    # but never shrink below 256 rows (per-step overhead) nor above round_up(N).
    per_step = _cdiv(_cdiv(N, 8), 8) * 8
    tn = min(tn, max(per_step, 256))
    tn = max(8, min(tn, _cdiv(N, 8) * 8))
    n_steps = _cdiv(N, tn)                          # ragged last block: no padding

    weight_bytes = 0
    for w in w0_slices:
        weight_bytes += _padded_2d_bytes(w.shape, w.dtype.itemsize)
    weight_bytes += _padded_2d_bytes(b0.shape, b0.dtype.itemsize)
    for (W, b) in weights[1:]:
        weight_bytes += _padded_2d_bytes(W.shape, W.dtype.itemsize)
        weight_bytes += _padded_2d_bytes(b.shape, b.dtype.itemsize)
    weight_bytes += _padded_2d_bytes(gw_row.shape, gw_row.dtype.itemsize)

    vmem_needed = 2 * tn * row_bytes + 2 * weight_bytes + (2 << 20)
    vmem_limit = int(min(48 << 20, max(24 << 20, vmem_needed)))

    grid = (n_steps,)
    flat_args, in_specs = [], []
    for s in segments:
        in_specs.append(pl.BlockSpec((tn, s.shape[-1]), lambda i: (i, 0)))
        flat_args.append(s)                          # native dtype; cast in VMEM
    for w in w0_slices:
        in_specs.append(pl.BlockSpec(w.shape, lambda i: (0, 0)))
        flat_args.append(w)
    in_specs.append(pl.BlockSpec(b0.shape, lambda i: (0, 0)))
    flat_args.append(b0)
    for (W, b) in weights[1:]:
        in_specs.append(pl.BlockSpec(W.shape, lambda i: (0, 0)))
        flat_args.append(W)
        in_specs.append(pl.BlockSpec(b.shape, lambda i: (0, 0)))
        flat_args.append(b)
    in_specs.append(pl.BlockSpec(gw_row.shape, lambda i: (0, 0)))
    flat_args.append(gw_row)
    in_specs.append(pl.BlockSpec((tn, S), lambda i: (i, 0)))
    flat_args.append(mask)                           # native dtype; cast in VMEM
    in_specs.append(pl.BlockSpec((tn, 3 * S), lambda i: (i, 0)))
    flat_args.append(color2d)                        # native dtype; cast in VMEM

    out_shape = jax.ShapeDtypeStruct((N, 4), jnp.float32)
    out_specs = pl.BlockSpec((tn, 4), lambda i: (i, 0))

    kernel = functools.partial(_blending_kernel, len(segments), n_lin, S)
    merged = pl.pallas_call(
        kernel,
        grid=grid,
        in_specs=in_specs,
        out_specs=out_specs,
        out_shape=out_shape,
        compiler_params=pltpu.CompilerParams(
            dimension_semantics=("parallel",),
            vmem_limit_bytes=vmem_limit),
    )(*flat_args)

    final_pixel_color = merged[:, :3]
    final_pixel_mask = merged[:, 3:4] > 0            # glue: bool compare of the sum
    return final_pixel_color, final_pixel_mask


# ----------------------------------------------------------------------------
# Deterministic parameter init (mirrors nn.Linear + weight_norm reparam)
# ----------------------------------------------------------------------------
def init_params(key, d_feature, d_in, d_out, d_hidden, n_layers,
                num_ref_views, num_src_views, weight_norm=True):
    assert d_out == num_src_views
    dims = [d_in + d_feature] + [d_hidden] * n_layers + [d_out]
    weights = []
    for l in range(len(dims) - 1):
        key, k1, k2 = jax.random.split(key, 3)
        fan_in = dims[l]
        bound = 1.0 / jnp.sqrt(jnp.float32(fan_in))
        V = jax.random.uniform(k1, (dims[l + 1], dims[l]),
                               minval=-bound, maxval=bound, dtype=jnp.float32)
        b = jax.random.uniform(k2, (dims[l + 1],),
                               minval=-bound, maxval=bound, dtype=jnp.float32)
        if weight_norm:
            # weight_norm: W = g * V / ||V||, g initialized to ||V|| per out row
            norm = jnp.linalg.norm(V, axis=1, keepdims=True)
            W = norm * V / norm
        else:
            W = V
        # store transposed for row-major [N, d_in] x [d_in, d_out] matmul
        weights.append((W.T.astype(jnp.float32),
                        b.reshape(1, -1).astype(jnp.float32)))
    global_weights = jnp.ones((num_ref_views, num_src_views), jnp.float32)
    return {"weights": weights, "global_weights": global_weights}


# ----------------------------------------------------------------------------
# Pure-JAX reference (for correctness check)
# ----------------------------------------------------------------------------
def blending_reference(points, normals, view_dirs, feature_vectors, ref_rel_idx,
                       pts_pixel_color, pts_pixel_mask, params, mode="idr"):
    if mode == "idr":
        x = jnp.concatenate([points, view_dirs, normals, feature_vectors], -1)
    elif mode == "no_view_dir":
        x = jnp.concatenate([points, normals, feature_vectors], -1)
    else:
        x = jnp.concatenate([points, view_dirs, feature_vectors], -1)
    ws = params["weights"]
    for l, (W, b) in enumerate(ws):
        x = x @ W + b
        if l < len(ws) - 1:
            x = jnp.maximum(x, 0.0)
    gw = params["global_weights"][ref_rel_idx:ref_rel_idx + 1]
    fused = gw + x
    wp = jax.nn.softmax(fused, axis=-1)
    m = pts_pixel_mask.astype(jnp.float32)
    wp = wp * m
    wp = wp / (jnp.sum(wp, axis=1, keepdims=True) + 1e-8)
    color = jnp.sum(pts_pixel_color.astype(jnp.float32) * wp[:, :, None], axis=1)
    mask = jnp.sum(m, axis=1, keepdims=True) > 0
    return color, mask


# ----------------------------------------------------------------------------
if __name__ == "__main__":
    # small, module-consistent shapes (N chosen to exercise grid + ragged block)
    N = 500                # -> tn=256, 2 grid steps, last block has 244 valid rows
    d_in = 9               # points(3) + view_dirs(3) + normals(3), mode='idr'
    d_feature = 32
    d_hidden = 32
    n_layers = 2
    num_ref_views = 4
    num_src_views = 8
    d_out = num_src_views
    mode = "idr"
    ref_rel_idx = 1

    key = jax.random.PRNGKey(0)
    kp, k1, k2, k3, k4, k5, k6 = jax.random.split(key, 7)

    params = init_params(kp, d_feature, d_in, d_out, d_hidden, n_layers,
                         num_ref_views, num_src_views, weight_norm=True)

    points = jax.random.normal(k1, (N, 3), jnp.float32)
    normals = jax.random.normal(k2, (N, 3), jnp.float32)
    view_dirs = jax.random.normal(k3, (N, 3), jnp.float32)
    feature_vectors = jax.random.normal(k4, (N, d_feature), jnp.float32)
    pts_pixel_color = jax.random.uniform(k5, (N, num_src_views, 3), jnp.float32)
    pts_pixel_mask = (jax.random.uniform(k6, (N, num_src_views)) > 0.3
                      ).astype(jnp.float32)

    out_color, out_mask = blending_forward(
        points, normals, view_dirs, feature_vectors, ref_rel_idx,
        pts_pixel_color, pts_pixel_mask, params, mode=mode)
    jax.block_until_ready(out_color)
    jax.block_until_ready(out_mask)

    ref_color, ref_mask = blending_reference(
        points, normals, view_dirs, feature_vectors, ref_rel_idx,
        pts_pixel_color, pts_pixel_mask, params, mode=mode)

    assert out_color.shape == (N, 3) and out_mask.shape == (N, 1)
    assert out_mask.dtype == jnp.bool_
    assert jnp.allclose(out_color, ref_color, atol=1e-5, rtol=1e-5)
    assert bool(jnp.all(out_mask == ref_mask))

    print("KERNEL_OK")
</pallas_src>

<mosaic_0001>
module attributes {stable_mosaic.version = 11 : i64} {
  func.func @_blending_kernel(%arg0: i32, %arg1: memref<256x3xf32, #tpu.memory_space<vmem>>, %arg2: memref<256x3xf32, #tpu.memory_space<vmem>>, %arg3: memref<256x3xf32, #tpu.memory_space<vmem>>, %arg4: memref<256x32xf32, #tpu.memory_space<vmem>>, %arg5: memref<3x32xf32, #tpu.memory_space<vmem>>, %arg6: memref<3x32xf32, #tpu.memory_space<vmem>>, %arg7: memref<3x32xf32, #tpu.memory_space<vmem>>, %arg8: memref<32x32xf32, #tpu.memory_space<vmem>>, %arg9: memref<1x32xf32, #tpu.memory_space<vmem>>, %arg10: memref<32x32xf32, #tpu.memory_space<vmem>>, %arg11: memref<1x32xf32, #tpu.memory_space<vmem>>, %arg12: memref<32x8xf32, #tpu.memory_space<vmem>>, %arg13: memref<1x8xf32, #tpu.memory_space<vmem>>, %arg14: memref<1x8xf32, #tpu.memory_space<vmem>>, %arg15: memref<256x8xf32, #tpu.memory_space<vmem>>, %arg16: memref<256x24xf32, #tpu.memory_space<vmem>>, %arg17: memref<256x4xf32, #tpu.memory_space<vmem>>) attributes {dimension_semantics = [#tpu.dimension_semantics<parallel>], iteration_bounds = array<i64: 2>, scalar_prefetch = 0 : i64, scratch_operands = 0 : i64, tpu.core_type = #tpu.core_type<tc>, window_params = [{transform_indices = @transform_0, window_bounds = array<i64: 256, 3>}, {transform_indices = @transform_1, window_bounds = array<i64: 256, 3>}, {transform_indices = @transform_2, window_bounds = array<i64: 256, 3>}, {transform_indices = @transform_3, window_bounds = array<i64: 256, 32>}, {pipeline_mode = #tpu.pipeline_mode<synchronous>, transform_indices = @transform_4, window_bounds = array<i64: 3, 32>}, {pipeline_mode = #tpu.pipeline_mode<synchronous>, transform_indices = @transform_5, window_bounds = array<i64: 3, 32>}, {pipeline_mode = #tpu.pipeline_mode<synchronous>, transform_indices = @transform_6, window_bounds = array<i64: 3, 32>}, {pipeline_mode = #tpu.pipeline_mode<synchronous>, transform_indices = @transform_7, window_bounds = array<i64: 32, 32>}, {pipeline_mode = #tpu.pipeline_mode<synchronous>, transform_indices = @transform_8, window_bounds = array<i64: 1, 32>}, {pipeline_mode = #tpu.pipeline_mode<synchronous>, transform_indices = @transform_9, window_bounds = array<i64: 32, 32>}, {pipeline_mode = #tpu.pipeline_mode<synchronous>, transform_indices = @transform_10, window_bounds = array<i64: 1, 32>}, {pipeline_mode = #tpu.pipeline_mode<synchronous>, transform_indices = @transform_11, window_bounds = array<i64: 32, 8>}, {pipeline_mode = #tpu.pipeline_mode<synchronous>, transform_indices = @transform_12, window_bounds = array<i64: 1, 8>}, {pipeline_mode = #tpu.pipeline_mode<synchronous>, transform_indices = @transform_13, window_bounds = array<i64: 1, 8>}, {transform_indices = @transform_14, window_bounds = array<i64: 256, 8>}, {transform_indices = @transform_15, window_bounds = array<i64: 256, 24>}, {transform_indices = @transform_16, window_bounds = array<i64: 256, 4>}]} {
    %c0 = arith.constant 0 : index
    %c0_0 = arith.constant 0 : index
    %0 = vector.load %arg1[%c0, %c0_0] : memref<256x3xf32, #tpu.memory_space<vmem>>, vector<256x3xf32>
    %c0_1 = arith.constant 0 : index
    %c0_2 = arith.constant 0 : index
    %1 = vector.load %arg5[%c0_1, %c0_2] : memref<3x32xf32, #tpu.memory_space<vmem>>, vector<3x32xf32>
    %cst = arith.constant dense<0.000000e+00> : vector<256x32xf32>
    %2 = tpu.matmul %0, %1, %cst {dimension_numbers = #tpu.dot_dimension_numbers<[1], [0], [0], [1], [0, 0, 1, 1], [], []>} : vector<256x3xf32>, vector<3x32xf32>, vector<256x32xf32> -> vector<256x32xf32>
    %c0_3 = arith.constant 0 : index
    %c0_4 = arith.constant 0 : index
    %3 = vector.load %arg2[%c0_3, %c0_4] : memref<256x3xf32, #tpu.memory_space<vmem>>, vector<256x3xf32>
    %c0_5 = arith.constant 0 : index
    %c0_6 = arith.constant 0 : index
    %4 = vector.load %arg6[%c0_5, %c0_6] : memref<3x32xf32, #tpu.memory_space<vmem>>, vector<3x32xf32>
    %cst_7 = arith.constant dense<0.000000e+00> : vector<256x32xf32>
    %5 = tpu.matmul %3, %4, %cst_7 {dimension_numbers = #tpu.dot_dimension_numbers<[1], [0], [0], [1], [0, 0, 1, 1], [], []>} : vector<256x3xf32>, vector<3x32xf32>, vector<256x32xf32> -> vector<256x32xf32>
    %6 = arith.addf %2, %5 : vector<256x32xf32>
    %c0_8 = arith.constant 0 : index
    %c0_9 = arith.constant 0 : index
    %7 = vector.load %arg3[%c0_8, %c0_9] : memref<256x3xf32, #tpu.memory_space<vmem>>, vector<256x3xf32>
    %c0_10 = arith.constant 0 : index
    %c0_11 = arith.constant 0 : index
    %8 = vector.load %arg7[%c0_10, %c0_11] : memref<3x32xf32, #tpu.memory_space<vmem>>, vector<3x32xf32>
    %cst_12 = arith.constant dense<0.000000e+00> : vector<256x32xf32>
    %9 = tpu.matmul %7, %8, %cst_12 {dimension_numbers = #tpu.dot_dimension_numbers<[1], [0], [0], [1], [0, 0, 1, 1], [], []>} : vector<256x3xf32>, vector<3x32xf32>, vector<256x32xf32> -> vector<256x32xf32>
    %10 = arith.addf %6, %9 : vector<256x32xf32>
    %c0_13 = arith.constant 0 : index
    %c0_14 = arith.constant 0 : index
    %11 = vector.load %arg4[%c0_13, %c0_14] : memref<256x32xf32, #tpu.memory_space<vmem>>, vector<256x32xf32>
    %c0_15 = arith.constant 0 : index
    %c0_16 = arith.constant 0 : index
    %12 = vector.load %arg8[%c0_15, %c0_16] : memref<32x32xf32, #tpu.memory_space<vmem>>, vector<32x32xf32>
    %cst_17 = arith.constant dense<0.000000e+00> : vector<256x32xf32>
    %13 = tpu.matmul %11, %12, %cst_17 {dimension_numbers = #tpu.dot_dimension_numbers<[1], [0], [0], [1], [0, 0, 1, 1], [], []>} : vector<256x32xf32>, vector<32x32xf32>, vector<256x32xf32> -> vector<256x32xf32>
    %14 = arith.addf %10, %13 : vector<256x32xf32>
    %c0_18 = arith.constant 0 : index
    %c0_19 = arith.constant 0 : index
    %15 = vector.load %arg9[%c0_18, %c0_19] : memref<1x32xf32, #tpu.memory_space<vmem>>, vector<1x32xf32>
    %16 = vector.broadcast %15 : vector<1x32xf32> to vector<256x32xf32>
    %17 = arith.addf %14, %16 : vector<256x32xf32>
    %cst_20 = arith.constant 0.000000e+00 : f32
    %18 = vector.broadcast %cst_20 : f32 to vector<256x32xf32>
    %19 = arith.maximumf %17, %18 : vector<256x32xf32>
    %c0_21 = arith.constant 0 : index
    %c0_22 = arith.constant 0 : index
    %20 = vector.load %arg10[%c0_21, %c0_22] : memref<32x32xf32, #tpu.memory_space<vmem>>, vector<32x32xf32>
    %c0_23 = arith.constant 0 : index
    %c0_24 = arith.constant 0 : index
    %21 = vector.load %arg11[%c0_23, %c0_24] : memref<1x32xf32, #tpu.memory_space<vmem>>, vector<1x32xf32>
    %cst_25 = arith.constant dense<0.000000e+00> : vector<256x32xf32>
    %22 = tpu.matmul %19, %20, %cst_25 {dimension_numbers = #tpu.dot_dimension_numbers<[1], [0], [0], [1], [0, 0, 1, 1], [], []>} : vector<256x32xf32>, vector<32x32xf32>, vector<256x32xf32> -> vector<256x32xf32>
    %23 = vector.broadcast %21 : vector<1x32xf32> to vector<256x32xf32>
    %24 = arith.addf %22, %23 : vector<256x32xf32>
    %cst_26 = arith.constant 0.000000e+00 : f32
    %25 = vector.broadcast %cst_26 : f32 to vector<256x32xf32>
    %26 = arith.maximumf %24, %25 : vector<256x32xf32>
    %c0_27 = arith.constant 0 : index
    %c0_28 = arith.constant 0 : index
    %27 = vector.load %arg12[%c0_27, %c0_28] : memref<32x8xf32, #tpu.memory_space<vmem>>, vector<32x8xf32>
    %c0_29 = arith.constant 0 : index
    %c0_30 = arith.constant 0 : index
    %28 = vector.load %arg13[%c0_29, %c0_30] : memref<1x8xf32, #tpu.memory_space<vmem>>, vector<1x8xf32>
    %cst_31 = arith.constant dense<0.000000e+00> : vector<256x8xf32>
    %29 = tpu.matmul %26, %27, %cst_31 {dimension_numbers = #tpu.dot_dimension_numbers<[1], [0], [0], [1], [0, 0, 1, 1], [], []>} : vector<256x32xf32>, vector<32x8xf32>, vector<256x8xf32> -> vector<256x8xf32>
    %30 = vector.broadcast %28 : vector<1x8xf32> to vector<256x8xf32>
    %31 = arith.addf %29, %30 : vector<256x8xf32>
    %c0_32 = arith.constant 0 : index
    %c0_33 = arith.constant 0 : index
    %32 = vector.load %arg14[%c0_32, %c0_33] : memref<1x8xf32, #tpu.memory_space<vmem>>, vector<1x8xf32>
    %33 = vector.broadcast %32 : vector<1x8xf32> to vector<256x8xf32>
    %34 = arith.addf %31, %33 : vector<256x8xf32>
    %cst_34 = arith.constant dense<0xFF800000> : vector<256xf32>
    %35 = vector.multi_reduction <maximumf>, %34, %cst_34 [1] : vector<256x8xf32> to vector<256xf32>
    %36 = vector.shape_cast %35 : vector<256xf32> to vector<256x1xf32>
    %37 = vector.broadcast %36 : vector<256x1xf32> to vector<256x8xf32>
    %38 = arith.subf %34, %37 : vector<256x8xf32>
    %39 = math.exp %38 : vector<256x8xf32>
    %c0_35 = arith.constant 0 : index
    %c0_36 = arith.constant 0 : index
    %40 = vector.load %arg15[%c0_35, %c0_36] : memref<256x8xf32, #tpu.memory_space<vmem>>, vector<256x8xf32>
    %41 = arith.mulf %39, %40 : vector<256x8xf32>
    %cst_37 = arith.constant dense<0.000000e+00> : vector<256xf32>
    %42 = vector.multi_reduction <add>, %41, %cst_37 [1] : vector<256x8xf32> to vector<256xf32>
    %43 = vector.shape_cast %42 : vector<256xf32> to vector<256x1xf32>
    %cst_38 = arith.constant dense<0.000000e+00> : vector<256xf32>
    %44 = vector.multi_reduction <add>, %39, %cst_38 [1] : vector<256x8xf32> to vector<256xf32>
    %45 = vector.shape_cast %44 : vector<256xf32> to vector<256x1xf32>
    %cst_39 = arith.constant 9.99999993E-9 : f32
    %46 = vector.broadcast %cst_39 : f32 to vector<256x1xf32>
    %47 = arith.mulf %46, %45 : vector<256x1xf32>
    %48 = arith.addf %43, %47 : vector<256x1xf32>
    %49 = tpu.reciprocal %48 : vector<256x1xf32> -> vector<256x1xf32>
    %50 = vector.broadcast %49 : vector<256x1xf32> to vector<256x8xf32>
    %51 = arith.mulf %41, %50 : vector<256x8xf32>
    %c0_40 = arith.constant 0 : index
    %c0_41 = arith.constant 0 : index
    %52 = vector.load %arg16[%c0_40, %c0_41] : memref<256x24xf32, #tpu.memory_space<vmem>>, vector<256x24xf32>
    %53 = vector.extract_strided_slice %51 {offsets = [0, 0], sizes = [256, 1], strides = [1, 1]} : vector<256x8xf32> to vector<256x1xf32>
    %54 = vector.extract_strided_slice %52 {offsets = [0, 0], sizes = [256, 3], strides = [1, 1]} : vector<256x24xf32> to vector<256x3xf32>
    %55 = vector.broadcast %53 : vector<256x1xf32> to vector<256x3xf32>
    %56 = arith.mulf %55, %54 : vector<256x3xf32>
    %57 = vector.extract_strided_slice %51 {offsets = [0, 1], sizes = [256, 1], strides = [1, 1]} : vector<256x8xf32> to vector<256x1xf32>
    %58 = vector.extract_strided_slice %52 {offsets = [0, 3], sizes = [256, 3], strides = [1, 1]} : vector<256x24xf32> to vector<256x3xf32>
    %59 = vector.broadcast %57 : vector<256x1xf32> to vector<256x3xf32>
    %60 = arith.mulf %59, %58 : vector<256x3xf32>
    %61 = arith.addf %56, %60 : vector<256x3xf32>
    %62 = vector.extract_strided_slice %51 {offsets = [0, 2], sizes = [256, 1], strides = [1, 1]} : vector<256x8xf32> to vector<256x1xf32>
    %63 = vector.extract_strided_slice %52 {offsets = [0, 6], sizes = [256, 3], strides = [1, 1]} : vector<256x24xf32> to vector<256x3xf32>
    %64 = vector.broadcast %62 : vector<256x1xf32> to vector<256x3xf32>
    %65 = arith.mulf %64, %63 : vector<256x3xf32>
    %66 = arith.addf %61, %65 : vector<256x3xf32>
    %67 = vector.extract_strided_slice %51 {offsets = [0, 3], sizes = [256, 1], strides = [1, 1]} : vector<256x8xf32> to vector<256x1xf32>
    %68 = vector.extract_strided_slice %52 {offsets = [0, 9], sizes = [256, 3], strides = [1, 1]} : vector<256x24xf32> to vector<256x3xf32>
    %69 = vector.broadcast %67 : vector<256x1xf32> to vector<256x3xf32>
    %70 = arith.mulf %69, %68 : vector<256x3xf32>
    %71 = arith.addf %66, %70 : vector<256x3xf32>
    %72 = vector.extract_strided_slice %51 {offsets = [0, 4], sizes = [256, 1], strides = [1, 1]} : vector<256x8xf32> to vector<256x1xf32>
    %73 = vector.extract_strided_slice %52 {offsets = [0, 12], sizes = [256, 3], strides = [1, 1]} : vector<256x24xf32> to vector<256x3xf32>
    %74 = vector.broadcast %72 : vector<256x1xf32> to vector<256x3xf32>
    %75 = arith.mulf %74, %73 : vector<256x3xf32>
    %76 = arith.addf %71, %75 : vector<256x3xf32>
    %77 = vector.extract_strided_slice %51 {offsets = [0, 5], sizes = [256, 1], strides = [1, 1]} : vector<256x8xf32> to vector<256x1xf32>
    %78 = vector.extract_strided_slice %52 {offsets = [0, 15], sizes = [256, 3], strides = [1, 1]} : vector<256x24xf32> to vector<256x3xf32>
    %79 = vector.broadcast %77 : vector<256x1xf32> to vector<256x3xf32>
    %80 = arith.mulf %79, %78 : vector<256x3xf32>
    %81 = arith.addf %76, %80 : vector<256x3xf32>
    %82 = vector.extract_strided_slice %51 {offsets = [0, 6], sizes = [256, 1], strides = [1, 1]} : vector<256x8xf32> to vector<256x1xf32>
    %83 = vector.extract_strided_slice %52 {offsets = [0, 18], sizes = [256, 3], strides = [1, 1]} : vector<256x24xf32> to vector<256x3xf32>
    %84 = vector.broadcast %82 : vector<256x1xf32> to vector<256x3xf32>
    %85 = arith.mulf %84, %83 : vector<256x3xf32>
    %86 = arith.addf %81, %85 : vector<256x3xf32>
    %87 = vector.extract_strided_slice %51 {offsets = [0, 7], sizes = [256, 1], strides = [1, 1]} : vector<256x8xf32> to vector<256x1xf32>
    %88 = vector.extract_strided_slice %52 {offsets = [0, 21], sizes = [256, 3], strides = [1, 1]} : vector<256x24xf32> to vector<256x3xf32>
    %89 = vector.broadcast %87 : vector<256x1xf32> to vector<256x3xf32>
    %90 = arith.mulf %89, %88 : vector<256x3xf32>
    %91 = arith.addf %86, %90 : vector<256x3xf32>
    %cst_42 = arith.constant dense<0.000000e+00> : vector<256xf32>
    %92 = vector.multi_reduction <add>, %40, %cst_42 [1] : vector<256x8xf32> to vector<256xf32>
    %93 = vector.shape_cast %92 : vector<256xf32> to vector<256x1xf32>
    %94 = tpu.concatenate %91, %93 in 1 : vector<256x3xf32>, vector<256x1xf32> -> vector<256x4xf32>
    %c0_43 = arith.constant 0 : index
    %c0_44 = arith.constant 0 : index
    %95 = vector.load %arg17[%c0_43, %c0_44] : memref<256x4xf32, #tpu.memory_space<vmem>>, vector<256x4xf32>
    tpu.vector_store %arg17[%c0_43, %c0_44], %94 {strides = array<i32>} : memref<256x4xf32, #tpu.memory_space<vmem>>, vector<256x4xf32>,
    return
  }
  func.func @transform_0(%arg0: i32) -> (i32, i32) {
    %c0_i32 = arith.constant 0 : i32
    %c0_i32_0 = arith.constant 0 : i32
    return %arg0, %c0_i32 : i32, i32
  }
  func.func @transform_1(%arg0: i32) -> (i32, i32) {
    %c0_i32 = arith.constant 0 : i32
    %c0_i32_0 = arith.constant 0 : i32
    return %arg0, %c0_i32 : i32, i32
  }
  func.func @transform_2(%arg0: i32) -> (i32, i32) {
    %c0_i32 = arith.constant 0 : i32
    %c0_i32_0 = arith.constant 0 : i32
    return %arg0, %c0_i32 : i32, i32
  }
  func.func @transform_3(%arg0: i32) -> (i32, i32) {
    %c0_i32 = arith.constant 0 : i32
    %c0_i32_0 = arith.constant 0 : i32
    return %arg0, %c0_i32 : i32, i32
  }
  func.func @transform_4(%arg0: i32) -> (i32, i32) {
    %c0_i32 = arith.constant 0 : i32
    %c0_i32_0 = arith.constant 0 : i32
    %c0_i32_1 = arith.constant 0 : i32
    return %c0_i32, %c0_i32_0 : i32, i32
  }
  func.func @transform_5(%arg0: i32) -> (i32, i32) {
    %c0_i32 = arith.constant 0 : i32
    %c0_i32_0 = arith.constant 0 : i32
    %c0_i32_1 = arith.constant 0 : i32
    return %c0_i32, %c0_i32_0 : i32, i32
  }
  func.func @transform_6(%arg0: i32) -> (i32, i32) {
    %c0_i32 = arith.constant 0 : i32
    %c0_i32_0 = arith.constant 0 : i32
    %c0_i32_1 = arith.constant 0 : i32
    return %c0_i32, %c0_i32_0 : i32, i32
  }
  func.func @transform_7(%arg0: i32) -> (i32, i32) {
    %c0_i32 = arith.constant 0 : i32
    %c0_i32_0 = arith.constant 0 : i32
    %c0_i32_1 = arith.constant 0 : i32
    return %c0_i32, %c0_i32_0 : i32, i32
  }
  func.func @transform_8(%arg0: i32) -> (i32, i32) {
    %c0_i32 = arith.constant 0 : i32
    %c0_i32_0 = arith.constant 0 : i32
    %c0_i32_1 = arith.constant 0 : i32
    return %c0_i32, %c0_i32_0 : i32, i32
  }
  func.func @transform_9(%arg0: i32) -> (i32, i32) {
    %c0_i32 = arith.constant 0 : i32
    %c0_i32_0 = arith.constant 0 : i32
    %c0_i32_1 = arith.constant 0 : i32
    return %c0_i32, %c0_i32_0 : i32, i32
  }
  func.func @transform_10(%arg0: i32) -> (i32, i32) {
    %c0_i32 = arith.constant 0 : i32
    %c0_i32_0 = arith.constant 0 : i32
    %c0_i32_1 = arith.constant 0 : i32
    return %c0_i32, %c0_i32_0 : i32, i32
  }
  func.func @transform_11(%arg0: i32) -> (i32, i32) {
    %c0_i32 = arith.constant 0 : i32
    %c0_i32_0 = arith.constant 0 : i32
    %c0_i32_1 = arith.constant 0 : i32
    return %c0_i32, %c0_i32_0 : i32, i32
  }
  func.func @transform_12(%arg0: i32) -> (i32, i32) {
    %c0_i32 = arith.constant 0 : i32
    %c0_i32_0 = arith.constant 0 : i32
    %c0_i32_1 = arith.constant 0 : i32
    return %c0_i32, %c0_i32_0 : i32, i32
  }
  func.func @transform_13(%arg0: i32) -> (i32, i32) {
    %c0_i32 = arith.constant 0 : i32
    %c0_i32_0 = arith.constant 0 : i32
    %c0_i32_1 = arith.constant 0 : i32
    return %c0_i32, %c0_i32_0 : i32, i32
  }
  func.func @transform_14(%arg0: i32) -> (i32, i32) {
    %c0_i32 = arith.constant 0 : i32
    %c0_i32_0 = arith.constant 0 : i32
    return %arg0, %c0_i32 : i32, i32
  }
  func.func @transform_15(%arg0: i32) -> (i32, i32) {
    %c0_i32 = arith.constant 0 : i32
    %c0_i32_0 = arith.constant 0 : i32
    return %arg0, %c0_i32 : i32, i32
  }
  func.func @transform_16(%arg0: i32) -> (i32, i32) {
    %c0_i32 = arith.constant 0 : i32
    %c0_i32_0 = arith.constant 0 : i32
    return %arg0, %c0_i32 : i32, i32
  }
}

</mosaic_0001>

<llo_original>
// kernel: tpu_custom_call.1
$region0: #{tpu_custom_call.1}
  #allocation0 [shape = 'u32[]', space=smem, size = 0x4, offset = 0x4, fixed_abs, tag = 'smem constant byte address 0x4 - core index']
  #allocation1 [shape = 'u32[144,128]{1,0:T(1,128)}', space=vmem, size = 0x12000, scoped, tag = 'internal scratch']
  %s0 = inlined_call_operand.vmem [shape: f32[500,3], index: 0, kind: input, shape index: {}]
  %s1 = inlined_call_operand.vmem [shape: f32[500,3], index: 1, kind: input, shape index: {}]
  %s2 = inlined_call_operand.vmem [shape: f32[500,3], index: 2, kind: input, shape index: {}]
  %s3 = inlined_call_operand.vmem [shape: f32[500,32], index: 3, kind: input, shape index: {}]
  %s4 = inlined_call_operand.vmem [shape: f32[3,32], index: 4, kind: input, shape index: {}]
  %s5 = inlined_call_operand.vmem [shape: f32[3,32], index: 5, kind: input, shape index: {}]
  %s6 = inlined_call_operand.vmem [shape: f32[3,32], index: 6, kind: input, shape index: {}]
  %s7 = inlined_call_operand.vmem [shape: f32[32,32], index: 7, kind: input, shape index: {}]
  %s8 = inlined_call_operand.vmem [shape: f32[1,32], index: 8, kind: input, shape index: {}]
  %s9 = inlined_call_operand.vmem [shape: f32[32,32], index: 9, kind: input, shape index: {}]
  %s10 = inlined_call_operand.vmem [shape: f32[1,32], index: 10, kind: input, shape index: {}]
  %s11 = inlined_call_operand.vmem [shape: f32[32,8], index: 11, kind: input, shape index: {}]
  %s12 = inlined_call_operand.vmem [shape: f32[1,8], index: 12, kind: input, shape index: {}]
  %s13 = inlined_call_operand.vmem [shape: f32[1,8], index: 13, kind: input, shape index: {}]
  %s14 = inlined_call_operand.vmem [shape: f32[500,8], index: 14, kind: input, shape index: {}]
  %s15 = inlined_call_operand.vmem [shape: f32[500,24], index: 15, kind: input, shape index: {}]
  %s16 = inlined_call_operand.vmem [shape: f32[500,4], index: 16, kind: output, shape index: {}]
  %s17 = sld [smem:[#allocation0]]
  $region145: #{tpu_custom_call.1} parent=0
    _
  %s19 = ssub.s32 1, %s17
  %s20 = scalar_select 0, %s19, %s17
  $region1: #{tpu_custom_call.1} parent=0
    #allocation2 [shape = 'u8[262144]{0}', space=vmem, size = 0x40000, scoped, tag = 'output window, operand 0']
    loop: start=0, step=1, limit=4
    $region2: #{tpu_custom_call.1} parent=1 // loop_pre_header
      _
    $region3: #{tpu_custom_call.1} parent=1 // loop_header
      %s22 = sphi 0, %s26
      %p23 = scmp.ge.s32.totalorder %s22, 4
      %s32 = sphi 0, %s34
      %s35 = sphi 0, %s32
      %s36 = sphi 0, %s35
      %s52 = sphi 0, %s36
      %s58 = sphi 0, %s60
      %s61 = sphi 0, %s58
      %s62 = sphi 0, %s61
      %s78 = sphi 0, %s62
      %s84 = sphi 0, %s86
      %s87 = sphi 0, %s84
      %s88 = sphi 0, %s87
      %s104 = sphi 0, %s88
      %s110 = sphi 0, %s112
      %s113 = sphi 0, %s110
      %s114 = sphi 0, %s113
      %s130 = sphi 0, %s114
      %s134 = sphi 0, %s134
      %s136 = sphi 0, %s134
      %s137 = sphi 0, %s136
      %s151 = sphi 0, %s137
      %s155 = sphi 0, %s155
      %s157 = sphi 0, %s155
      %s158 = sphi 0, %s157
      %s172 = sphi 0, %s158
      %s176 = sphi 0, %s176
      %s178 = sphi 0, %s176
      %s179 = sphi 0, %s178
      %s193 = sphi 0, %s179
      %s197 = sphi 0, %s197
      %s199 = sphi 0, %s197
      %s200 = sphi 0, %s199
      %s214 = sphi 0, %s200
      %s218 = sphi 0, %s218
      %s220 = sphi 0, %s218
      %s221 = sphi 0, %s220
      %s235 = sphi 0, %s221
      %s239 = sphi 0, %s239
      %s241 = sphi 0, %s239
      %s242 = sphi 0, %s241
      %s256 = sphi 0, %s242
      %s260 = sphi 0, %s260
      %s262 = sphi 0, %s260
      %s263 = sphi 0, %s262
      %s277 = sphi 0, %s263
      %s281 = sphi 0, %s281
      %s283 = sphi 0, %s281
      %s284 = sphi 0, %s283
      %s298 = sphi 0, %s284
      %s302 = sphi 0, %s302
      %s304 = sphi 0, %s302
      %s305 = sphi 0, %s304
      %s319 = sphi 0, %s305
      %s323 = sphi 0, %s323
      %s325 = sphi 0, %s323
      %s326 = sphi 0, %s325
      %s340 = sphi 0, %s326
      %s346 = sphi 0, %s348
      %s349 = sphi 0, %s346
      %s350 = sphi 0, %s349
      %s366 = sphi 0, %s350
      %s372 = sphi 0, %s374
      %s375 = sphi 0, %s372
      %s376 = sphi 0, %s375
      %s392 = sphi 0, %s376
      %s398 = sphi 0, %s400
      %s401 = sphi 0, %s398
      %s402 = sphi 0, %s401
      %s418 = sphi 0, %s402
    $region4: #{tpu_custom_call.1} parent=1 // loop_header_branch
      %25 = sbr.rel (%p23) target = $region8
    $region5: #{tpu_custom_call.1} parent=1 // loop_body
      %s27 = ssub.s32 %s22, 1
      %s28 = ssub.s32 %s22, 2
      %s29 = sadd.s32 %s22, 1
      %s30 = ssub.s32 %s22, %s29
      %p31 = scmp.eq.s32.totalorder %s30, 0
      %s33 = sadd.s32 %s32, 1
      %s34 = scalar_select %p31, %s32, %s33
      %p37 = pneg %p31
      %p38 = scmp.eq.s32.totalorder %s22, 1
      %p39 = por %p37, %p38
      %p40 = scmp.ne.s32.totalorder %s32, %s35
      %p41 = scmp.eq.s32.totalorder %s22, 0
      %p42 = por %p40, %p41
      %p43 = scmp.ne.s32.totalorder %s32, %s35
      %p44 = scmp.eq.s32.totalorder %s27, 1
      %p45 = por %p43, %p44
      %p46 = scmp.ne.s32.totalorder %s35, %s36
      %p47 = scmp.eq.s32.totalorder %s27, 0
      %p48 = por %p46, %p47
      %p49 = scmp.ne.s32.totalorder %s35, %s36
      %p50 = scmp.eq.s32.totalorder %s28, 1
      %p51 = por %p49, %p50
      %p53 = scmp.ne.s32.totalorder %s36, %s52
      %p54 = scmp.eq.s32.totalorder %s28, 0
      %p55 = por %p53, %p54
      %s56 = ssub.s32 %s22, %s29
      %p57 = scmp.eq.s32.totalorder %s56, 0
      %s59 = sadd.s32 %s58, 1
      %s60 = scalar_select %p57, %s58, %s59
      %p63 = pneg %p57
      %p64 = scmp.eq.s32.totalorder %s22, 1
      %p65 = por %p63, %p64
      %p66 = scmp.ne.s32.totalorder %s58, %s61
      %p67 = scmp.eq.s32.totalorder %s22, 0
      %p68 = por %p66, %p67
      %p69 = scmp.ne.s32.totalorder %s58, %s61
      %p70 = scmp.eq.s32.totalorder %s27, 1
      %p71 = por %p69, %p70
      %p72 = scmp.ne.s32.totalorder %s61, %s62
      %p73 = scmp.eq.s32.totalorder %s27, 0
      %p74 = por %p72, %p73
      %p75 = scmp.ne.s32.totalorder %s61, %s62
      %p76 = scmp.eq.s32.totalorder %s28, 1
      %p77 = por %p75, %p76
      %p79 = scmp.ne.s32.totalorder %s62, %s78
      %p80 = scmp.eq.s32.totalorder %s28, 0
      %p81 = por %p79, %p80
      %s82 = ssub.s32 %s22, %s29
      %p83 = scmp.eq.s32.totalorder %s82, 0
      %s85 = sadd.s32 %s84, 1
      %s86 = scalar_select %p83, %s84, %s85
      %p89 = pneg %p83
      %p90 = scmp.eq.s32.totalorder %s22, 1
      %p91 = por %p89, %p90
      %p92 = scmp.ne.s32.totalorder %s84, %s87
      %p93 = scmp.eq.s32.totalorder %s22, 0
      %p94 = por %p92, %p93
      %p95 = scmp.ne.s32.totalorder %s84, %s87
      %p96 = scmp.eq.s32.totalorder %s27, 1
      %p97 = por %p95, %p96
      %p98 = scmp.ne.s32.totalorder %s87, %s88
      %p99 = scmp.eq.s32.totalorder %s27, 0
      %p100 = por %p98, %p99
      %p101 = scmp.ne.s32.totalorder %s87, %s88
      %p102 = scmp.eq.s32.totalorder %s28, 1
      %p103 = por %p101, %p102
      %p105 = scmp.ne.s32.totalorder %s88, %s104
      %p106 = scmp.eq.s32.totalorder %s28, 0
      %p107 = por %p105, %p106
      %s108 = ssub.s32 %s22, %s29
      %p109 = scmp.eq.s32.totalorder %s108, 0
      %s111 = sadd.s32 %s110, 1
      %s112 = scalar_select %p109, %s110, %s111
      %p115 = pneg %p109
      %p116 = scmp.eq.s32.totalorder %s22, 1
      %p117 = por %p115, %p116
      %p118 = scmp.ne.s32.totalorder %s110, %s113
      %p119 = scmp.eq.s32.totalorder %s22, 0
      %p120 = por %p118, %p119
      %p121 = scmp.ne.s32.totalorder %s110, %s113
      %p122 = scmp.eq.s32.totalorder %s27, 1
      %p123 = por %p121, %p122
      %p124 = scmp.ne.s32.totalorder %s113, %s114
      %p125 = scmp.eq.s32.totalorder %s27, 0
      %p126 = por %p124, %p125
      %p127 = scmp.ne.s32.totalorder %s113, %s114
      %p128 = scmp.eq.s32.totalorder %s28, 1
      %p129 = por %p127, %p128
      %p131 = scmp.ne.s32.totalorder %s114, %s130
      %p132 = scmp.eq.s32.totalorder %s28, 0
      %p133 = por %p131, %p132
      %s135 = sadd.s32 %s134, 1
      %p138 = scmp.eq.s32.totalorder %s22, 1
      %p139 = scmp.ne.s32.totalorder %s134, %s136
      %p140 = scmp.eq.s32.totalorder %s22, 0
      %p141 = por %p139, %p140
      %p142 = scmp.ne.s32.totalorder %s134, %s136
      %p143 = scmp.eq.s32.totalorder %s27, 1
      %p144 = por %p142, %p143
      %p145 = scmp.ne.s32.totalorder %s136, %s137
      %p146 = scmp.eq.s32.totalorder %s27, 0
      %p147 = por %p145, %p146
      %p148 = scmp.ne.s32.totalorder %s136, %s137
      %p149 = scmp.eq.s32.totalorder %s28, 1
      %p150 = por %p148, %p149
      %p152 = scmp.ne.s32.totalorder %s137, %s151
      %p153 = scmp.eq.s32.totalorder %s28, 0
      %p154 = por %p152, %p153
      %s156 = sadd.s32 %s155, 1
      %p159 = scmp.eq.s32.totalorder %s22, 1
      %p160 = scmp.ne.s32.totalorder %s155, %s157
      %p161 = scmp.eq.s32.totalorder %s22, 0
      %p162 = por %p160, %p161
      %p163 = scmp.ne.s32.totalorder %s155, %s157
      %p164 = scmp.eq.s32.totalorder %s27, 1
      %p165 = por %p163, %p164
      %p166 = scmp.ne.s32.totalorder %s157, %s158
      %p167 = scmp.eq.s32.totalorder %s27, 0
      %p168 = por %p166, %p167
      %p169 = scmp.ne.s32.totalorder %s157, %s158
      %p170 = scmp.eq.s32.totalorder %s28, 1
      %p171 = por %p169, %p170
      %p173 = scmp.ne.s32.totalorder %s158, %s172
      %p174 = scmp.eq.s32.totalorder %s28, 0
      %p175 = por %p173, %p174
      %s177 = sadd.s32 %s176, 1
      %p180 = scmp.eq.s32.totalorder %s22, 1
      %p181 = scmp.ne.s32.totalorder %s176, %s178
      %p182 = scmp.eq.s32.totalorder %s22, 0
      %p183 = por %p181, %p182
      %p184 = scmp.ne.s32.totalorder %s176, %s178
      %p185 = scmp.eq.s32.totalorder %s27, 1
      %p186 = por %p184, %p185
      %p187 = scmp.ne.s32.totalorder %s178, %s179
      %p188 = scmp.eq.s32.totalorder %s27, 0
      %p189 = por %p187, %p188
      %p190 = scmp.ne.s32.totalorder %s178, %s179
      %p191 = scmp.eq.s32.totalorder %s28, 1
      %p192 = por %p190, %p191
      %p194 = scmp.ne.s32.totalorder %s179, %s193
      %p195 = scmp.eq.s32.totalorder %s28, 0
      %p196 = por %p194, %p195
      %s198 = sadd.s32 %s197, 1
      %p201 = scmp.eq.s32.totalorder %s22, 1
      %p202 = scmp.ne.s32.totalorder %s197, %s199
      %p203 = scmp.eq.s32.totalorder %s22, 0
      %p204 = por %p202, %p203
      %p205 = scmp.ne.s32.totalorder %s197, %s199
      %p206 = scmp.eq.s32.totalorder %s27, 1
      %p207 = por %p205, %p206
      %p208 = scmp.ne.s32.totalorder %s199, %s200
      %p209 = scmp.eq.s32.totalorder %s27, 0
      %p210 = por %p208, %p209
      %p211 = scmp.ne.s32.totalorder %s199, %s200
      %p212 = scmp.eq.s32.totalorder %s28, 1
      %p213 = por %p211, %p212
      %p215 = scmp.ne.s32.totalorder %s200, %s214
      %p216 = scmp.eq.s32.totalorder %s28, 0
      %p217 = por %p215, %p216
      %s219 = sadd.s32 %s218, 1
      %p222 = scmp.eq.s32.totalorder %s22, 1
      %p223 = scmp.ne.s32.totalorder %s218, %s220
      %p224 = scmp.eq.s32.totalorder %s22, 0
      %p225 = por %p223, %p224
      %p226 = scmp.ne.s32.totalorder %s218, %s220
      %p227 = scmp.eq.s32.totalorder %s27, 1
      %p228 = por %p226, %p227
      %p229 = scmp.ne.s32.totalorder %s220, %s221
      %p230 = scmp.eq.s32.totalorder %s27, 0
      %p231 = por %p229, %p230
      %p232 = scmp.ne.s32.totalorder %s220, %s221
      %p233 = scmp.eq.s32.totalorder %s28, 1
      %p234 = por %p232, %p233
      %p236 = scmp.ne.s32.totalorder %s221, %s235
      %p237 = scmp.eq.s32.totalorder %s28, 0
      %p238 = por %p236, %p237
      %s240 = sadd.s32 %s239, 1
      %p243 = scmp.eq.s32.totalorder %s22, 1
      %p244 = scmp.ne.s32.totalorder %s239, %s241
      %p245 = scmp.eq.s32.totalorder %s22, 0
      %p246 = por %p244, %p245
      %p247 = scmp.ne.s32.totalorder %s239, %s241
      %p248 = scmp.eq.s32.totalorder %s27, 1
      %p249 = por %p247, %p248
      %p250 = scmp.ne.s32.totalorder %s241, %s242
      %p251 = scmp.eq.s32.totalorder %s27, 0
      %p252 = por %p250, %p251
      %p253 = scmp.ne.s32.totalorder %s241, %s242
      %p254 = scmp.eq.s32.totalorder %s28, 1
      %p255 = por %p253, %p254
      %p257 = scmp.ne.s32.totalorder %s242, %s256
      %p258 = scmp.eq.s32.totalorder %s28, 0
      %p259 = por %p257, %p258
      %s261 = sadd.s32 %s260, 1
      %p264 = scmp.eq.s32.totalorder %s22, 1
      %p265 = scmp.ne.s32.totalorder %s260, %s262
      %p266 = scmp.eq.s32.totalorder %s22, 0
      %p267 = por %p265, %p266
      %p268 = scmp.ne.s32.totalorder %s260, %s262
      %p269 = scmp.eq.s32.totalorder %s27, 1
      %p270 = por %p268, %p269
      %p271 = scmp.ne.s32.totalorder %s262, %s263
      %p272 = scmp.eq.s32.totalorder %s27, 0
      %p273 = por %p271, %p272
      %p274 = scmp.ne.s32.totalorder %s262, %s263
      %p275 = scmp.eq.s32.totalorder %s28, 1
      %p276 = por %p274, %p275
      %p278 = scmp.ne.s32.totalorder %s263, %s277
      %p279 = scmp.eq.s32.totalorder %s28, 0
      %p280 = por %p278, %p279
      %s282 = sadd.s32 %s281, 1
      %p285 = scmp.eq.s32.totalorder %s22, 1
      %p286 = scmp.ne.s32.totalorder %s281, %s283
      %p287 = scmp.eq.s32.totalorder %s22, 0
      %p288 = por %p286, %p287
      %p289 = scmp.ne.s32.totalorder %s281, %s283
      %p290 = scmp.eq.s32.totalorder %s27, 1
      %p291 = por %p289, %p290
      %p292 = scmp.ne.s32.totalorder %s283, %s284
      %p293 = scmp.eq.s32.totalorder %s27, 0
      %p294 = por %p292, %p293
      %p295 = scmp.ne.s32.totalorder %s283, %s284
      %p296 = scmp.eq.s32.totalorder %s28, 1
      %p297 = por %p295, %p296
      %p299 = scmp.ne.s32.totalorder %s284, %s298
      %p300 = scmp.eq.s32.totalorder %s28, 0
      %p301 = por %p299, %p300
      %s303 = sadd.s32 %s302, 1
      %p306 = scmp.eq.s32.totalorder %s22, 1
      %p307 = scmp.ne.s32.totalorder %s302, %s304
      %p308 = scmp.eq.s32.totalorder %s22, 0
      %p309 = por %p307, %p308
      %p310 = scmp.ne.s32.totalorder %s302, %s304
      %p311 = scmp.eq.s32.totalorder %s27, 1
      %p312 = por %p310, %p311
      %p313 = scmp.ne.s32.totalorder %s304, %s305
      %p314 = scmp.eq.s32.totalorder %s27, 0
      %p315 = por %p313, %p314
      %p316 = scmp.ne.s32.totalorder %s304, %s305
      %p317 = scmp.eq.s32.totalorder %s28, 1
      %p318 = por %p316, %p317
      %p320 = scmp.ne.s32.totalorder %s305, %s319
      %p321 = scmp.eq.s32.totalorder %s28, 0
      %p322 = por %p320, %p321
      %s324 = sadd.s32 %s323, 1
      %p327 = scmp.eq.s32.totalorder %s22, 1
      %p328 = scmp.ne.s32.totalorder %s323, %s325
      %p329 = scmp.eq.s32.totalorder %s22, 0
      %p330 = por %p328, %p329
      %p331 = scmp.ne.s32.totalorder %s323, %s325
      %p332 = scmp.eq.s32.totalorder %s27, 1
      %p333 = por %p331, %p332
      %p334 = scmp.ne.s32.totalorder %s325, %s326
      %p335 = scmp.eq.s32.totalorder %s27, 0
      %p336 = por %p334, %p335
      %p337 = scmp.ne.s32.totalorder %s325, %s326
      %p338 = scmp.eq.s32.totalorder %s28, 1
      %p339 = por %p337, %p338
      %p341 = scmp.ne.s32.totalorder %s326, %s340
      %p342 = scmp.eq.s32.totalorder %s28, 0
      %p343 = por %p341, %p342
      %s344 = ssub.s32 %s22, %s29
      %p345 = scmp.eq.s32.totalorder %s344, 0
      %s347 = sadd.s32 %s346, 1
      %s348 = scalar_select %p345, %s346, %s347
      %p351 = pneg %p345
      %p352 = scmp.eq.s32.totalorder %s22, 1
      %p353 = por %p351, %p352
      %p354 = scmp.ne.s32.totalorder %s346, %s349
      %p355 = scmp.eq.s32.totalorder %s22, 0
      %p356 = por %p354, %p355
      %p357 = scmp.ne.s32.totalorder %s346, %s349
      %p358 = scmp.eq.s32.totalorder %s27, 1
      %p359 = por %p357, %p358
      %p360 = scmp.ne.s32.totalorder %s349, %s350
      %p361 = scmp.eq.s32.totalorder %s27, 0
      %p362 = por %p360, %p361
      %p363 = scmp.ne.s32.totalorder %s349, %s350
      %p364 = scmp.eq.s32.totalorder %s28, 1
      %p365 = por %p363, %p364
      %p367 = scmp.ne.s32.totalorder %s350, %s366
      %p368 = scmp.eq.s32.totalorder %s28, 0
      %p369 = por %p367, %p368
      %s370 = ssub.s32 %s22, %s29
      %p371 = scmp.eq.s32.totalorder %s370, 0
      %s373 = sadd.s32 %s372, 1
      %s374 = scalar_select %p371, %s372, %s373
      %p377 = pneg %p371
      %p378 = scmp.eq.s32.totalorder %s22, 1
      %p379 = por %p377, %p378
      %p380 = scmp.ne.s32.totalorder %s372, %s375
      %p381 = scmp.eq.s32.totalorder %s22, 0
      %p382 = por %p380, %p381
      %p383 = scmp.ne.s32.totalorder %s372, %s375
      %p384 = scmp.eq.s32.totalorder %s27, 1
      %p385 = por %p383, %p384
      %p386 = scmp.ne.s32.totalorder %s375, %s376
      %p387 = scmp.eq.s32.totalorder %s27, 0
      %p388 = por %p386, %p387
      %p389 = scmp.ne.s32.totalorder %s375, %s376
      %p390 = scmp.eq.s32.totalorder %s28, 1
      %p391 = por %p389, %p390
      %p393 = scmp.ne.s32.totalorder %s376, %s392
      %p394 = scmp.eq.s32.totalorder %s28, 0
      %p395 = por %p393, %p394
      %s396 = ssub.s32 %s22, %s29
      %p397 = scmp.eq.s32.totalorder %s396, 0
      %s399 = sadd.s32 %s398, 1
      %s400 = scalar_select %p397, %s398, %s399
      %p403 = pneg %p397
      %p404 = scmp.eq.s32.totalorder %s22, 1
      %p405 = por %p403, %p404
      %p406 = scmp.ne.s32.totalorder %s398, %s401
      %p407 = scmp.eq.s32.totalorder %s22, 0
      %p408 = por %p406, %p407
      %p409 = scmp.ne.s32.totalorder %s398, %s401
      %p410 = scmp.eq.s32.totalorder %s27, 1
      %p411 = por %p409, %p410
      %p412 = scmp.ne.s32.totalorder %s401, %s402
      %p413 = scmp.eq.s32.totalorder %s27, 0
      %p414 = por %p412, %p413
      %p415 = scmp.ne.s32.totalorder %s401, %s402
      %p416 = scmp.eq.s32.totalorder %s28, 1
      %p417 = por %p415, %p416
      %p419 = scmp.ne.s32.totalorder %s402, %s418
      %p420 = scmp.eq.s32.totalorder %s28, 0
      %p421 = por %p419, %p420
      %p422 = scmp.le.s32.totalorder 1, %s22
      %p423 = scmp.lt.s32.totalorder %s22, 3
      %p424 = pnand %p422, %p423
      %p425 = pneg %p424
      // Predicated region
      $region9: #{tpu_custom_call.1} parent=5 // pred_check
        _
      $region10: #{tpu_custom_call.1} parent=5 // pred_check_branch
        %427 = sbr.rel (%p424) target = $region12
      $region11: #{tpu_custom_call.1} parent=5 // pred_region
        %s428 = ssub.s32 %s22, 1
        // Predicated region
        $region13: #{tpu_custom_call.1} parent=11 // pred_check
          %p429 = pneg %p147
        $region14: #{tpu_custom_call.1} parent=11 // pred_check_branch
          %431 = sbr.rel (%p429) target = $region16
        $region15: #{tpu_custom_call.1} parent=11 // pred_region
          _
        $region16: #{tpu_custom_call.1} parent=11 // pred_fallthru
          _
        // Predicated region
        $region17: #{tpu_custom_call.1} parent=11 // pred_check
          %p432 = pneg %p168
        $region18: #{tpu_custom_call.1} parent=11 // pred_check_branch
          %434 = sbr.rel (%p432) target = $region20
        $region19: #{tpu_custom_call.1} parent=11 // pred_region
          _
        $region20: #{tpu_custom_call.1} parent=11 // pred_fallthru
          _
        // Predicated region
        $region21: #{tpu_custom_call.1} parent=11 // pred_check
          %p435 = pneg %p189
        $region22: #{tpu_custom_call.1} parent=11 // pred_check_branch
          %437 = sbr.rel (%p435) target = $region24
        $region23: #{tpu_custom_call.1} parent=11 // pred_region
          _
        $region24: #{tpu_custom_call.1} parent=11 // pred_fallthru
          _
        // Predicated region
        $region25: #{tpu_custom_call.1} parent=11 // pred_check
          %p438 = pneg %p210
        $region26: #{tpu_custom_call.1} parent=11 // pred_check_branch
          %440 = sbr.rel (%p438) target = $region28
        $region27: #{tpu_custom_call.1} parent=11 // pred_region
          _
        $region28: #{tpu_custom_call.1} parent=11 // pred_fallthru
          _
        // Predicated region
        $region29: #{tpu_custom_call.1} parent=11 // pred_check
          %p441 = pneg %p231
        $region30: #{tpu_custom_call.1} parent=11 // pred_check_branch
          %443 = sbr.rel (%p441) target = $region32
        $region31: #{tpu_custom_call.1} parent=11 // pred_region
          _
        $region32: #{tpu_custom_call.1} parent=11 // pred_fallthru
          _
        // Predicated region
        $region33: #{tpu_custom_call.1} parent=11 // pred_check
          %p444 = pneg %p252
        $region34: #{tpu_custom_call.1} parent=11 // pred_check_branch
          %446 = sbr.rel (%p444) target = $region36
        $region35: #{tpu_custom_call.1} parent=11 // pred_region
          _
        $region36: #{tpu_custom_call.1} parent=11 // pred_fallthru
          _
        // Predicated region
        $region37: #{tpu_custom_call.1} parent=11 // pred_check
          %p447 = pneg %p273
        $region38: #{tpu_custom_call.1} parent=11 // pred_check_branch
          %449 = sbr.rel (%p447) target = $region40
        $region39: #{tpu_custom_call.1} parent=11 // pred_region
          _
        $region40: #{tpu_custom_call.1} parent=11 // pred_fallthru
          _
        // Predicated region
        $region41: #{tpu_custom_call.1} parent=11 // pred_check
          %p450 = pneg %p294
        $region42: #{tpu_custom_call.1} parent=11 // pred_check_branch
          %452 = sbr.rel (%p450) target = $region44
        $region43: #{tpu_custom_call.1} parent=11 // pred_region
          _
        $region44: #{tpu_custom_call.1} parent=11 // pred_fallthru
          _
        // Predicated region
        $region45: #{tpu_custom_call.1} parent=11 // pred_check
          %p453 = pneg %p315
        $region46: #{tpu_custom_call.1} parent=11 // pred_check_branch
          %455 = sbr.rel (%p453) target = $region48
        $region47: #{tpu_custom_call.1} parent=11 // pred_region
          _
        $region48: #{tpu_custom_call.1} parent=11 // pred_fallthru
          _
        // Predicated region
        $region49: #{tpu_custom_call.1} parent=11 // pred_check
          %p456 = pneg %p336
        $region50: #{tpu_custom_call.1} parent=11 // pred_check_branch
          %458 = sbr.rel (%p456) target = $region52
        $region51: #{tpu_custom_call.1} parent=11 // pred_region
          _
        $region52: #{tpu_custom_call.1} parent=11 // pred_fallthru
          _
      $region12: #{tpu_custom_call.1} parent=5 // pred_fallthru
        _
      %p459 = scmp.lt.s32.totalorder %s22, 2
      // Predicated region
      $region53: #{tpu_custom_call.1} parent=5 // pred_check
        %p460 = pneg %p459
      $region54: #{tpu_custom_call.1} parent=5 // pred_check_branch
        %462 = sbr.rel (%p460) target = $region56
      $region55: #{tpu_custom_call.1} parent=5 // pred_region
        // Predicated region
        $region57: #{tpu_custom_call.1} parent=55 // pred_check
          %p463 = pneg %p42
        $region58: #{tpu_custom_call.1} parent=55 // pred_check_branch
          %465 = sbr.rel (%p463) target = $region60
        $region59: #{tpu_custom_call.1} parent=55 // pred_region
          %s466 = smul.u32 32, %s22
          %s467 = ssub.s32 63, %s466
          %p468 = scmp.lt.s32.totalorder %s467, 32
          %s469 = scalar_select %p468, %s467, 32
          %s470 = smul.u32 128, %s469
          %p471 = scmp.lt.s32.totalorder %s466, 62
          %s472 = scalar_select %p471, %s466, 62
          %s473 = smul.addr %s472, 8
          %s474 = scalar_lea.vmem %s0, %s473
          %s475 = smul.u32 32, %s22
          %s476 = ssub.s32 63, %s475
          %p477 = scmp.lt.s32.totalorder %s476, 32
          %s478 = scalar_select %p477, %s476, 32
          %s479 = smul.u32 128, %s478
        $region60: #{tpu_custom_call.1} parent=55 // pred_fallthru
          _
        // Predicated region
        $region61: #{tpu_custom_call.1} parent=55 // pred_check
          %p480 = pneg %p68
        $region62: #{tpu_custom_call.1} parent=55 // pred_check_branch
          %482 = sbr.rel (%p480) target = $region64
        $region63: #{tpu_custom_call.1} parent=55 // pred_region
          %s483 = smul.u32 32, %s22
          %s484 = ssub.s32 63, %s483
          %p485 = scmp.lt.s32.totalorder %s484, 32
          %s486 = scalar_select %p485, %s484, 32
          %s487 = smul.u32 128, %s486
          %p488 = scmp.lt.s32.totalorder %s483, 62
          %s489 = scalar_select %p488, %s483, 62
          %s490 = smul.addr %s489, 8
          %s491 = scalar_lea.vmem %s1, %s490
          %s492 = smul.u32 32, %s22
          %s493 = ssub.s32 63, %s492
          %p494 = scmp.lt.s32.totalorder %s493, 32
          %s495 = scalar_select %p494, %s493, 32
          %s496 = smul.u32 128, %s495
        $region64: #{tpu_custom_call.1} parent=55 // pred_fallthru
          _
        // Predicated region
        $region65: #{tpu_custom_call.1} parent=55 // pred_check
          %p497 = pneg %p94
        $region66: #{tpu_custom_call.1} parent=55 // pred_check_branch
          %499 = sbr.rel (%p497) target = $region68
        $region67: #{tpu_custom_call.1} parent=55 // pred_region
          %s500 = smul.u32 32, %s22
          %s501 = ssub.s32 63, %s500
          %p502 = scmp.lt.s32.totalorder %s501, 32
          %s503 = scalar_select %p502, %s501, 32
          %s504 = smul.u32 128, %s503
          %p505 = scmp.lt.s32.totalorder %s500, 62
          %s506 = scalar_select %p505, %s500, 62
          %s507 = smul.addr %s506, 8
          %s508 = scalar_lea.vmem %s2, %s507
          %s509 = smul.u32 32, %s22
          %s510 = ssub.s32 63, %s509
          %p511 = scmp.lt.s32.totalorder %s510, 32
          %s512 = scalar_select %p511, %s510, 32
          %s513 = smul.u32 128, %s512
        $region68: #{tpu_custom_call.1} parent=55 // pred_fallthru
          _
        // Predicated region
        $region69: #{tpu_custom_call.1} parent=55 // pred_check
          %p514 = pneg %p120
        $region70: #{tpu_custom_call.1} parent=55 // pred_check_branch
          %516 = sbr.rel (%p514) target = $region72
        $region71: #{tpu_custom_call.1} parent=55 // pred_region
          %s517 = smul.u32 32, %s22
          %s518 = ssub.s32 63, %s517
          %p519 = scmp.lt.s32.totalorder %s518, 32
          %s520 = scalar_select %p519, %s518, 32
          %s521 = smul.u32 128, %s520
          %p522 = scmp.lt.s32.totalorder %s517, 62
          %s523 = scalar_select %p522, %s517, 62
          %s524 = smul.addr %s523, 8
          %s525 = scalar_lea.vmem %s3, %s524
          %s526 = smul.u32 32, %s22
          %s527 = ssub.s32 63, %s526
          %p528 = scmp.lt.s32.totalorder %s527, 32
          %s529 = scalar_select %p528, %s527, 32
          %s530 = smul.u32 128, %s529
        $region72: #{tpu_custom_call.1} parent=55 // pred_fallthru
          _
        // Predicated region
        $region73: #{tpu_custom_call.1} parent=55 // pred_check
          %p531 = pneg %p356
        $region74: #{tpu_custom_call.1} parent=55 // pred_check_branch
          %533 = sbr.rel (%p531) target = $region76
        $region75: #{tpu_custom_call.1} parent=55 // pred_region
          %s534 = smul.u32 32, %s22
          %s535 = ssub.s32 63, %s534
          %p536 = scmp.lt.s32.totalorder %s535, 32
          %s537 = scalar_select %p536, %s535, 32
          %s538 = smul.u32 128, %s537
          %p539 = scmp.lt.s32.totalorder %s534, 62
          %s540 = scalar_select %p539, %s534, 62
          %s541 = smul.addr %s540, 8
          %s542 = scalar_lea.vmem %s14, %s541
          %s543 = smul.u32 32, %s22
          %s544 = ssub.s32 63, %s543
          %p545 = scmp.lt.s32.totalorder %s544, 32
          %s546 = scalar_select %p545, %s544, 32
          %s547 = smul.u32 128, %s546
        $region76: #{tpu_custom_call.1} parent=55 // pred_fallthru
          _
        // Predicated region
        $region77: #{tpu_custom_call.1} parent=55 // pred_check
          %p548 = pneg %p382
        $region78: #{tpu_custom_call.1} parent=55 // pred_check_branch
          %550 = sbr.rel (%p548) target = $region80
        $region79: #{tpu_custom_call.1} parent=55 // pred_region
          %s551 = smul.u32 32, %s22
          %s552 = ssub.s32 63, %s551
          %p553 = scmp.lt.s32.totalorder %s552, 32
          %s554 = scalar_select %p553, %s552, 32
          %s555 = smul.u32 128, %s554
          %p556 = scmp.lt.s32.totalorder %s551, 62
          %s557 = scalar_select %p556, %s551, 62
          %s558 = smul.addr %s557, 8
          %s559 = scalar_lea.vmem %s15, %s558
          %s560 = smul.u32 32, %s22
          %s561 = ssub.s32 63, %s560
          %p562 = scmp.lt.s32.totalorder %s561, 32
          %s563 = scalar_select %p562, %s561, 32
          %s564 = smul.u32 128, %s563
        $region80: #{tpu_custom_call.1} parent=55 // pred_fallthru
          _
      $region56: #{tpu_custom_call.1} parent=5 // pred_fallthru
        _
      %p565 = scmp.le.s32.totalorder 1, %s22
      %p566 = scmp.lt.s32.totalorder %s22, 3
      %p567 = pnand %p565, %p566
      %p568 = pneg %p567
      // Predicated region
      $region81: #{tpu_custom_call.1} parent=5 // pred_check
        _
      $region82: #{tpu_custom_call.1} parent=5 // pred_check_branch
        %570 = sbr.rel (%p567) target = $region84
      $region83: #{tpu_custom_call.1} parent=5 // pred_region
        %s571 = ssub.s32 %s22, 1
        %s572 = smul.u32 32, %s27
        %s573 = ssub.s32 63, %s572
        %p574 = scmp.lt.s32.totalorder %s573, 32
        %s575 = scalar_select %p574, %s573, 32
        %s576 = smul.u32 128, %s575
        %p577 = scmp.lt.s32.totalorder %s572, 62
        %s578 = scalar_select %p577, %s572, 62
        %s579 = smul.addr %s578, 8
        %s580 = scalar_lea.vmem %s0, %s579
        %p581 = pneg %p48
        %p582 = pneg %p45
        %s583 = smul.u32 32, %s27
        %s584 = ssub.s32 63, %s583
        %p585 = scmp.lt.s32.totalorder %s584, 32
        %s586 = scalar_select %p585, %s584, 32
        %s587 = smul.u32 128, %s586
        %p588 = scmp.lt.s32.totalorder %s583, 62
        %s589 = scalar_select %p588, %s583, 62
        %s590 = smul.addr %s589, 8
        %s591 = scalar_lea.vmem %s1, %s590
        %p592 = pneg %p74
        %p593 = pneg %p71
        %s594 = smul.u32 32, %s27
        %s595 = ssub.s32 63, %s594
        %p596 = scmp.lt.s32.totalorder %s595, 32
        %s597 = scalar_select %p596, %s595, 32
        %s598 = smul.u32 128, %s597
        %p599 = scmp.lt.s32.totalorder %s594, 62
        %s600 = scalar_select %p599, %s594, 62
        %s601 = smul.addr %s600, 8
        %s602 = scalar_lea.vmem %s2, %s601
        %p603 = pneg %p100
        %p604 = pneg %p97
        %s605 = smul.u32 32, %s27
        %s606 = ssub.s32 63, %s605
        %p607 = scmp.lt.s32.totalorder %s606, 32
        %s608 = scalar_select %p607, %s606, 32
        %s609 = smul.u32 128, %s608
        %p610 = scmp.lt.s32.totalorder %s605, 62
        %s611 = scalar_select %p610, %s605, 62
        %s612 = smul.addr %s611, 8
        %s613 = scalar_lea.vmem %s3, %s612
        %p614 = pneg %p126
        %p615 = pneg %p123
        %p616 = pneg %p147
        %p617 = pneg %p144
        %p618 = pneg %p168
        %p619 = pneg %p165
        %p620 = pneg %p189
        %p621 = pneg %p186
        %p622 = pneg %p210
        %p623 = pneg %p207
        %p624 = pneg %p231
        %p625 = pneg %p228
        %p626 = pneg %p252
        %p627 = pneg %p249
        %p628 = pneg %p273
        %p629 = pneg %p270
        %p630 = pneg %p294
        %p631 = pneg %p291
        %p632 = pneg %p315
        %p633 = pneg %p312
        %p634 = pneg %p336
        %p635 = pneg %p333
        %s636 = smul.u32 32, %s27
        %s637 = ssub.s32 63, %s636
        %p638 = scmp.lt.s32.totalorder %s637, 32
        %s639 = scalar_select %p638, %s637, 32
        %s640 = smul.u32 128, %s639
        %p641 = scmp.lt.s32.totalorder %s636, 62
        %s642 = scalar_select %p641, %s636, 62
        %s643 = smul.addr %s642, 8
        %s644 = scalar_lea.vmem %s14, %s643
        %p645 = pneg %p362
        %p646 = pneg %p359
        %s647 = smul.u32 32, %s27
        %s648 = ssub.s32 63, %s647
        %p649 = scmp.lt.s32.totalorder %s648, 32
        %s650 = scalar_select %p649, %s648, 32
        %s651 = smul.u32 128, %s650
        %p652 = scmp.lt.s32.totalorder %s647, 62
        %s653 = scalar_select %p652, %s647, 62
        %s654 = smul.addr %s653, 8
        %s655 = scalar_lea.vmem %s15, %s654
        %p656 = pneg %p388
        %p657 = pneg %p385
        %p658 = pneg %p414
        %p659 = pneg %p411
        %s660 = sand.u32 %s401, 1
        %s661 = sand.u32 %s401, 1
        %s662 = smul.addr %s661, 256
        %s663 = scalar_lea.vmem [#allocation2], %s662
        %s664 = smul.u32 32, %s27
        %s665 = ssub.s32 63, %s664
        %p666 = scmp.lt.s32.totalorder %s665, 32
        %s667 = scalar_select %p666, %s665, 32
        %s668 = smul.u32 128, %s667
        %p669 = scmp.lt.s32.totalorder %s664, 62
        %s670 = scalar_select %p669, %s664, 62
        %s671 = smul.addr %s670, 8
        %s672 = scalar_lea.vmem %s0, %s671
        %s673 = smul.u32 32, %s27
        %s674 = ssub.s32 63, %s673
        %p675 = scmp.lt.s32.totalorder %s674, 32
        %s676 = scalar_select %p675, %s674, 32
        %s677 = smul.u32 128, %s676
        %s678 = smul.u32 32, %s27
        %s679 = ssub.s32 63, %s678
        %p680 = scmp.lt.s32.totalorder %s679, 32
        %s681 = scalar_select %p680, %s679, 32
        %s682 = smul.u32 128, %s681
        %p683 = scmp.lt.s32.totalorder %s678, 62
        %s684 = scalar_select %p683, %s678, 62
        %s685 = smul.addr %s684, 8
        %s686 = scalar_lea.vmem %s1, %s685
        %s687 = smul.u32 32, %s27
        %s688 = ssub.s32 63, %s687
        %p689 = scmp.lt.s32.totalorder %s688, 32
        %s690 = scalar_select %p689, %s688, 32
        %s691 = smul.u32 128, %s690
        %s692 = smul.u32 32, %s27
        %s693 = ssub.s32 63, %s692
        %p694 = scmp.lt.s32.totalorder %s693, 32
        %s695 = scalar_select %p694, %s693, 32
        %s696 = smul.u32 128, %s695
        %p697 = scmp.lt.s32.totalorder %s692, 62
        %s698 = scalar_select %p697, %s692, 62
        %s699 = smul.addr %s698, 8
        %s700 = scalar_lea.vmem %s2, %s699
        %s701 = smul.u32 32, %s27
        %s702 = ssub.s32 63, %s701
        %p703 = scmp.lt.s32.totalorder %s702, 32
        %s704 = scalar_select %p703, %s702, 32
        %s705 = smul.u32 128, %s704
        %s706 = smul.u32 32, %s27
        %s707 = ssub.s32 63, %s706
        %p708 = scmp.lt.s32.totalorder %s707, 32
        %s709 = scalar_select %p708, %s707, 32
        %s710 = smul.u32 128, %s709
        %p711 = scmp.lt.s32.totalorder %s706, 62
        %s712 = scalar_select %p711, %s706, 62
        %s713 = smul.addr %s712, 8
        %s714 = scalar_lea.vmem %s3, %s713
        %s715 = smul.u32 32, %s27
        %s716 = ssub.s32 63, %s715
        %p717 = scmp.lt.s32.totalorder %s716, 32
        %s718 = scalar_select %p717, %s716, 32
        %s719 = smul.u32 128, %s718
        %s720 = smul.u32 32, %s27
        %s721 = ssub.s32 63, %s720
        %p722 = scmp.lt.s32.totalorder %s721, 32
        %s723 = scalar_select %p722, %s721, 32
        %s724 = smul.u32 128, %s723
        %p725 = scmp.lt.s32.totalorder %s720, 62
        %s726 = scalar_select %p725, %s720, 62
        %s727 = smul.addr %s726, 8
        %s728 = scalar_lea.vmem %s14, %s727
        %s729 = smul.u32 32, %s27
        %s730 = ssub.s32 63, %s729
        %p731 = scmp.lt.s32.totalorder %s730, 32
        %s732 = scalar_select %p731, %s730, 32
        %s733 = smul.u32 128, %s732
        %s734 = smul.u32 32, %s27
        %s735 = ssub.s32 63, %s734
        %p736 = scmp.lt.s32.totalorder %s735, 32
        %s737 = scalar_select %p736, %s735, 32
        %s738 = smul.u32 128, %s737
        %p739 = scmp.lt.s32.totalorder %s734, 62
        %s740 = scalar_select %p739, %s734, 62
        %s741 = smul.addr %s740, 8
        %s742 = scalar_lea.vmem %s15, %s741
        %s743 = smul.u32 32, %s27
        %s744 = ssub.s32 63, %s743
        %p745 = scmp.lt.s32.totalorder %s744, 32
        %s746 = scalar_select %p745, %s744, 32
        %s747 = smul.u32 128, %s746
        %s748 = smul.u32 32, %s27
        %s749 = ssub.s32 63, %s748
        %p750 = scmp.lt.s32.totalorder %s749, 32
        %s751 = scalar_select %p750, %s749, 32
        %s752 = smul.u32 128, %s751
        %v753 = vld [vmem:[%s672] sm:$0xff]
        %v754 = vld [vmem:[%s672 + $0x8] sm:$0xff]
        %v755 = vld [vmem:[%s672 + $0x10] sm:$0xff]
        %v756 = vld [vmem:[%s672 + $0x18] sm:$0xff]
        %v757 = vld [vmem:[%s672 + $0x20] sm:$0xff]
        %v758 = vld [vmem:[%s672 + $0x28] sm:$0xff]
        %v759 = vld [vmem:[%s672 + $0x30] sm:$0xff]
        %v760 = vld [vmem:[%s672 + $0x38] sm:$0xff]
        %v761 = vld [vmem:[%s672 + $0x40] sm:$0xff]
        %v762 = vld [vmem:[%s672 + $0x48] sm:$0xff]
        %v763 = vld [vmem:[%s672 + $0x50] sm:$0xff]
        %v764 = vld [vmem:[%s672 + $0x58] sm:$0xff]
        %v765 = vld [vmem:[%s672 + $0x60] sm:$0xff]
        %v766 = vld [vmem:[%s672 + $0x68] sm:$0xff]
        %v767 = vld [vmem:[%s672 + $0x70] sm:$0xff]
        %v768 = vld [vmem:[%s672 + $0x78] sm:$0xff]
        %v769 = vld [vmem:[%s672 + $0x80] sm:$0xff]
        %v770 = vld [vmem:[%s672 + $0x88] sm:$0xff]
        %v771 = vld [vmem:[%s672 + $0x90] sm:$0xff]
        %v772 = vld [vmem:[%s672 + $0x98] sm:$0xff]
        %v773 = vld [vmem:[%s672 + $0xa0] sm:$0xff]
        %v774 = vld [vmem:[%s672 + $0xa8] sm:$0xff]
        %v775 = vld [vmem:[%s672 + $0xb0] sm:$0xff]
        %v776 = vld [vmem:[%s672 + $0xb8] sm:$0xff]
        %v777 = vld [vmem:[%s672 + $0xc0] sm:$0xff]
        %v778 = vld [vmem:[%s672 + $0xc8] sm:$0xff]
        %v779 = vld [vmem:[%s672 + $0xd0] sm:$0xff]
        %v780 = vld [vmem:[%s672 + $0xd8] sm:$0xff]
        %v781 = vld [vmem:[%s672 + $0xe0] sm:$0xff]
        %v782 = vld [vmem:[%s672 + $0xe8] sm:$0xff]
        %v783 = vld [vmem:[%s672 + $0xf0] sm:$0xff]
        %v784 = vld [vmem:[%s672 + $0xf8] sm:$0xff]
        %v785 = vld [vmem:[%s4] sm:$0x7]
        %v786 = vld [vmem:[%s686] sm:$0xff]
        %v787 = vld [vmem:[%s686 + $0x8] sm:$0xff]
        %v788 = vld [vmem:[%s686 + $0x10] sm:$0xff]
        %v789 = vld [vmem:[%s686 + $0x18] sm:$0xff]
        %v790 = vld [vmem:[%s686 + $0x20] sm:$0xff]
        %v791 = vld [vmem:[%s686 + $0x28] sm:$0xff]
        %v792 = vld [vmem:[%s686 + $0x30] sm:$0xff]
        %v793 = vld [vmem:[%s686 + $0x38] sm:$0xff]
        %v794 = vld [vmem:[%s686 + $0x40] sm:$0xff]
        %v795 = vld [vmem:[%s686 + $0x48] sm:$0xff]
        %v796 = vld [vmem:[%s686 + $0x50] sm:$0xff]
        %v797 = vld [vmem:[%s686 + $0x58] sm:$0xff]
        %v798 = vld [vmem:[%s686 + $0x60] sm:$0xff]
        %v799 = vld [vmem:[%s686 + $0x68] sm:$0xff]
        %v800 = vld [vmem:[%s686 + $0x70] sm:$0xff]
        %v801 = vld [vmem:[%s686 + $0x78] sm:$0xff]
        %v802 = vld [vmem:[%s686 + $0x80] sm:$0xff]
        %v803 = vld [vmem:[%s686 + $0x88] sm:$0xff]
        %v804 = vld [vmem:[%s686 + $0x90] sm:$0xff]
        %v805 = vld [vmem:[%s686 + $0x98] sm:$0xff]
        %v806 = vld [vmem:[%s686 + $0xa0] sm:$0xff]
        %v807 = vld [vmem:[%s686 + $0xa8] sm:$0xff]
        %v808 = vld [vmem:[%s686 + $0xb0] sm:$0xff]
        %v809 = vld [vmem:[%s686 + $0xb8] sm:$0xff]
        %v810 = vld [vmem:[%s686 + $0xc0] sm:$0xff]
        %v811 = vld [vmem:[%s686 + $0xc8] sm:$0xff]
        %v812 = vld [vmem:[%s686 + $0xd0] sm:$0xff]
        %v813 = vld [vmem:[%s686 + $0xd8] sm:$0xff]
        %v814 = vld [vmem:[%s686 + $0xe0] sm:$0xff]
        %v815 = vld [vmem:[%s686 + $0xe8] sm:$0xff]
        %v816 = vld [vmem:[%s686 + $0xf0] sm:$0xff]
        %v817 = vld [vmem:[%s686 + $0xf8] sm:$0xff]
        %v818 = vld [vmem:[%s5] sm:$0x7]
        %vm819 = vcmask 23552
        %v821 = vsel %vm819, %v786, 0
        %v824 = vsel %vm819, %v787, 0
        %v827 = vsel %vm819, %v788, 0
        %v830 = vsel %vm819, %v789, 0
        %v833 = vsel %vm819, %v790, 0
        %v836 = vsel %vm819, %v791, 0
        %v839 = vsel %vm819, %v792, 0
        %v842 = vsel %vm819, %v793, 0
        %v845 = vsel %vm819, %v794, 0
        %v848 = vsel %vm819, %v795, 0
        %v851 = vsel %vm819, %v796, 0
        %v854 = vsel %vm819, %v797, 0
        %v857 = vsel %vm819, %v798, 0
        %v860 = vsel %vm819, %v799, 0
        %v863 = vsel %vm819, %v800, 0
        %v866 = vsel %vm819, %v801, 0
        %v869 = vsel %vm819, %v802, 0
        %v872 = vsel %vm819, %v803, 0
        %v875 = vsel %vm819, %v804, 0
        %v878 = vsel %vm819, %v805, 0
        %v881 = vsel %vm819, %v806, 0
        %v884 = vsel %vm819, %v807, 0
        %v887 = vsel %vm819, %v808, 0
        %v890 = vsel %vm819, %v809, 0
        %v893 = vsel %vm819, %v810, 0
        %v896 = vsel %vm819, %v811, 0
        %v899 = vsel %vm819, %v812, 0
        %v902 = vsel %vm819, %v813, 0
        %v905 = vsel %vm819, %v814, 0
        %v908 = vsel %vm819, %v815, 0
        %v911 = vsel %vm819, %v816, 0
        %v914 = vsel %vm819, %v817, 0
        %vm916 = vcmask 1042432
        %v918 = vsel %vm916, %v818, 0
        %920 = vmatprep.subr.mxu0 0.0
        %921 = vmatpush1.msra.mxu0 %v918
        %922 = vmatprep.subr.mxu0 0.0
        %923 = vmatpush1.msra.mxu0 0.0
        %924 = vmatprep.subr.mxu0 0.0
        %925 = vmatpush1.msra.mxu0 0.0
        %926 = vmatprep.subr.mxu0 0.0
        %927 = vmatpush1.msra.mxu0 0.0
        %928 = vmatprep.subr.mxu0 0.0
        %929 = vmatpush1.msra.mxu0 0.0
        %930 = vmatprep.subr.mxu0 0.0
        %931 = vmatpush1.msra.mxu0 0.0
        %932 = vmatprep.subr.mxu0 0.0
        %933 = vmatpush1.msra.mxu0 0.0
        %934 = vmatprep.subr.mxu0 0.0
        %935 = vmatpush1.msra.mxu0 0.0
        %936 = vmatprep.subr.mxu0 0.0
        %937 = vmatpush1.msra.mxu0 0.0
        %938 = vmatprep.subr.mxu0 0.0
        %939 = vmatpush1.msra.mxu0 0.0
        %940 = vmatprep.subr.mxu0 0.0
        %941 = vmatpush1.msra.mxu0 0.0
        %942 = vmatprep.subr.mxu0 0.0
        %943 = vmatpush1.msra.mxu0 0.0
        %944 = vmatprep.subr.mxu0 0.0
        %945 = vmatpush1.msra.mxu0 0.0
        %946 = vmatprep.subr.mxu0 0.0
        %947 = vmatpush1.msra.mxu0 0.0
        %948 = vmatprep.subr.mxu0 0.0
        %949 = vmatpush1.msra.mxu0 0.0
        %950 = vmatprep.subr.mxu0 0.0
        %951 = vmatpush1.msra.mxu0 0.0
        %952 = vmatprep.subr.mxu0 0.0
        %953 = vmatpush1.msra.mxu0 0.0
        %954 = vmatprep.subr.mxu0 0.0
        %955 = vmatpush1.msra.mxu0 0.0
        %956 = vmatprep.subr.mxu0 0.0
        %957 = vmatpush1.msra.mxu0 0.0
        %958 = vmatprep.subr.mxu0 0.0
        %959 = vmatpush1.msra.mxu0 0.0
        %960 = vmatprep.subr.mxu0 0.0
        %961 = vmatpush1.msra.mxu0 0.0
        %962 = vmatprep.subr.mxu0 0.0
        %963 = vmatpush1.msra.mxu0 0.0
        %964 = vmatprep.subr.mxu0 0.0
        %965 = vmatpush1.msra.mxu0 0.0
        %966 = vmatprep.subr.mxu0 0.0
        %967 = vmatpush1.msra.mxu0 0.0
        %968 = vmatprep.subr.mxu0 0.0
        %969 = vmatpush1.msra.mxu0 0.0
        %970 = vmatprep.subr.mxu0 0.0
        %971 = vmatpush1.msra.mxu0 0.0
        %972 = vmatprep.subr.mxu0 0.0
        %973 = vmatpush1.msra.mxu0 0.0
        %974 = vmatprep.subr.mxu0 0.0
        %975 = vmatpush1.msra.mxu0 0.0
        %976 = vmatprep.subr.mxu0 0.0
        %977 = vmatpush1.msra.mxu0 0.0
        %978 = vmatprep.subr.mxu0 0.0
        %979 = vmatpush1.msra.mxu0 0.0
        %980 = vmatprep.subr.mxu0 0.0
        %981 = vmatpush1.msra.mxu0 0.0
        %982 = vmatprep.subr.mxu0 0.0
        %983 = vmatpush1.msra.mxu0 0.0
        %984 = vmatprep.mubr.f32.mxu0 0.0
        %985 = vmatmul.mubr.f32.gmra.mrb[0].mxu0 %v821
        %v986 = vpop.f32.mrb[0].mxu0
        %v987 = vadd.f32 0.0, %v986
        %v988 = vpop.f32.mrb[0].mxu0
        %989 = vmatprep.mubr.f32.mxu0 0.0
        %990 = vmatmul.mubr.f32.gmra.mrb[0].mxu0 %v824
        %v991 = vpop.f32.mrb[0].mxu0
        %v992 = vadd.f32 0.0, %v991
        %v993 = vpop.f32.mrb[0].mxu0
        %994 = vmatprep.mubr.f32.mxu0 0.0
        %995 = vmatmul.mubr.f32.gmra.mrb[0].mxu0 %v827
        %v996 = vpop.f32.mrb[0].mxu0
        %v997 = vadd.f32 0.0, %v996
        %v998 = vpop.f32.mrb[0].mxu0
        %999 = vmatprep.mubr.f32.mxu0 0.0
        %1000 = vmatmul.mubr.f32.gmra.mrb[0].mxu0 %v830
        %v1001 = vpop.f32.mrb[0].mxu0
        %v1002 = vadd.f32 0.0, %v1001
        %v1003 = vpop.f32.mrb[0].mxu0
        %1004 = vmatprep.mubr.f32.mxu0 0.0
        %1005 = vmatmul.mubr.f32.gmra.mrb[0].mxu0 %v833
        %v1006 = vpop.f32.mrb[0].mxu0
        %v1007 = vadd.f32 0.0, %v1006
        %v1008 = vpop.f32.mrb[0].mxu0
        %1009 = vmatprep.mubr.f32.mxu0 0.0
        %1010 = vmatmul.mubr.f32.gmra.mrb[0].mxu0 %v836
        %v1011 = vpop.f32.mrb[0].mxu0
        %v1012 = vadd.f32 0.0, %v1011
        %v1013 = vpop.f32.mrb[0].mxu0
        %1014 = vmatprep.mubr.f32.mxu0 0.0
        %1015 = vmatmul.mubr.f32.gmra.mrb[0].mxu0 %v839
        %v1016 = vpop.f32.mrb[0].mxu0
        %v1017 = vadd.f32 0.0, %v1016
        %v1018 = vpop.f32.mrb[0].mxu0
        %1019 = vmatprep.mubr.f32.mxu0 0.0
        %1020 = vmatmul.mubr.f32.gmra.mrb[0].mxu0 %v842
        %v1021 = vpop.f32.mrb[0].mxu0
        %v1022 = vadd.f32 0.0, %v1021
        %v1023 = vpop.f32.mrb[0].mxu0
        %1024 = vmatprep.mubr.f32.mxu0 0.0
        %1025 = vmatmul.mubr.f32.gmra.mrb[0].mxu0 %v845
        %v1026 = vpop.f32.mrb[0].mxu0
        %v1027 = vadd.f32 0.0, %v1026
        %v1028 = vpop.f32.mrb[0].mxu0
        %1029 = vmatprep.mubr.f32.mxu0 0.0
        %1030 = vmatmul.mubr.f32.gmra.mrb[0].mxu0 %v848
        %v1031 = vpop.f32.mrb[0].mxu0
        %v1032 = vadd.f32 0.0, %v1031
        %v1033 = vpop.f32.mrb[0].mxu0
        %1034 = vmatprep.mubr.f32.mxu0 0.0
        %1035 = vmatmul.mubr.f32.gmra.mrb[0].mxu0 %v851
        %v1036 = vpop.f32.mrb[0].mxu0
        %v1037 = vadd.f32 0.0, %v1036
        %v1038 = vpop.f32.mrb[0].mxu0
        %1039 = vmatprep.mubr.f32.mxu0 0.0
        %1040 = vmatmul.mubr.f32.gmra.mrb[0].mxu0 %v854
        %v1041 = vpop.f32.mrb[0].mxu0
        %v1042 = vadd.f32 0.0, %v1041
        %v1043 = vpop.f32.mrb[0].mxu0
        %1044 = vmatprep.mubr.f32.mxu0 0.0
        %1045 = vmatmul.mubr.f32.gmra.mrb[0].mxu0 %v857
        %v1046 = vpop.f32.mrb[0].mxu0
        %v1047 = vadd.f32 0.0, %v1046
        %v1048 = vpop.f32.mrb[0].mxu0
        %1049 = vmatprep.mubr.f32.mxu0 0.0
        %1050 = vmatmul.mubr.f32.gmra.mrb[0].mxu0 %v860
        %v1051 = vpop.f32.mrb[0].mxu0
        %v1052 = vadd.f32 0.0, %v1051
        %v1053 = vpop.f32.mrb[0].mxu0
        %1054 = vmatprep.mubr.f32.mxu0 0.0
        %1055 = vmatmul.mubr.f32.gmra.mrb[0].mxu0 %v863
        %v1056 = vpop.f32.mrb[0].mxu0
        %v1057 = vadd.f32 0.0, %v1056
        %v1058 = vpop.f32.mrb[0].mxu0
        %1059 = vmatprep.mubr.f32.mxu0 0.0
        %1060 = vmatmul.mubr.f32.gmra.mrb[0].mxu0 %v866
        %v1061 = vpop.f32.mrb[0].mxu0
        %v1062 = vadd.f32 0.0, %v1061
        %v1063 = vpop.f32.mrb[0].mxu0
        %1064 = vmatprep.mubr.f32.mxu0 0.0
        %1065 = vmatmul.mubr.f32.gmra.mrb[0].mxu0 %v869
        %v1066 = vpop.f32.mrb[0].mxu0
        %v1067 = vadd.f32 0.0, %v1066
        %v1068 = vpop.f32.mrb[0].mxu0
        %1069 = vmatprep.mubr.f32.mxu0 0.0
        %1070 = vmatmul.mubr.f32.gmra.mrb[0].mxu0 %v872
        %v1071 = vpop.f32.mrb[0].mxu0
        %v1072 = vadd.f32 0.0, %v1071
        %v1073 = vpop.f32.mrb[0].mxu0
        %1074 = vmatprep.mubr.f32.mxu0 0.0
        %1075 = vmatmul.mubr.f32.gmra.mrb[0].mxu0 %v875
        %v1076 = vpop.f32.mrb[0].mxu0
        %v1077 = vadd.f32 0.0, %v1076
        %v1078 = vpop.f32.mrb[0].mxu0
        %1079 = vmatprep.mubr.f32.mxu0 0.0
        %1080 = vmatmul.mubr.f32.gmra.mrb[0].mxu0 %v878
        %v1081 = vpop.f32.mrb[0].mxu0
        %v1082 = vadd.f32 0.0, %v1081
        %v1083 = vpop.f32.mrb[0].mxu0
        %1084 = vmatprep.mubr.f32.mxu0 0.0
        %1085 = vmatmul.mubr.f32.gmra.mrb[0].mxu0 %v881
        %v1086 = vpop.f32.mrb[0].mxu0
        %v1087 = vadd.f32 0.0, %v1086
        %v1088 = vpop.f32.mrb[0].mxu0
        %1089 = vmatprep.mubr.f32.mxu0 0.0
        %1090 = vmatmul.mubr.f32.gmra.mrb[0].mxu0 %v884
        %v1091 = vpop.f32.mrb[0].mxu0
        %v1092 = vadd.f32 0.0, %v1091
        %v1093 = vpop.f32.mrb[0].mxu0
        %1094 = vmatprep.mubr.f32.mxu0 0.0
        %1095 = vmatmul.mubr.f32.gmra.mrb[0].mxu0 %v887
        %v1096 = vpop.f32.mrb[0].mxu0
        %v1097 = vadd.f32 0.0, %v1096
        %v1098 = vpop.f32.mrb[0].mxu0
        %1099 = vmatprep.mubr.f32.mxu0 0.0
        %1100 = vmatmul.mubr.f32.gmra.mrb[0].mxu0 %v890
        %v1101 = vpop.f32.mrb[0].mxu0
        %v1102 = vadd.f32 0.0, %v1101
        %v1103 = vpop.f32.mrb[0].mxu0
        %1104 = vmatprep.mubr.f32.mxu0 0.0
        %1105 = vmatmul.mubr.f32.gmra.mrb[0].mxu0 %v893
        %v1106 = vpop.f32.mrb[0].mxu0
        %v1107 = vadd.f32 0.0, %v1106
        %v1108 = vpop.f32.mrb[0].mxu0
        %1109 = vmatprep.mubr.f32.mxu0 0.0
        %1110 = vmatmul.mubr.f32.gmra.mrb[0].mxu0 %v896
        %v1111 = vpop.f32.mrb[0].mxu0
        %v1112 = vadd.f32 0.0, %v1111
        %v1113 = vpop.f32.mrb[0].mxu0
        %1114 = vmatprep.mubr.f32.mxu0 0.0
        %1115 = vmatmul.mubr.f32.gmra.mrb[0].mxu0 %v899
        %v1116 = vpop.f32.mrb[0].mxu0
        %v1117 = vadd.f32 0.0, %v1116
        %v1118 = vpop.f32.mrb[0].mxu0
        %1119 = vmatprep.mubr.f32.mxu0 0.0
        %1120 = vmatmul.mubr.f32.gmra.mrb[0].mxu0 %v902
        %v1121 = vpop.f32.mrb[0].mxu0
        %v1122 = vadd.f32 0.0, %v1121
        %v1123 = vpop.f32.mrb[0].mxu0
        %1124 = vmatprep.mubr.f32.mxu0 0.0
        %1125 = vmatmul.mubr.f32.gmra.mrb[0].mxu0 %v905
        %v1126 = vpop.f32.mrb[0].mxu0
        %v1127 = vadd.f32 0.0, %v1126
        %v1128 = vpop.f32.mrb[0].mxu0
        %1129 = vmatprep.mubr.f32.mxu0 0.0
        %1130 = vmatmul.mubr.f32.gmra.mrb[0].mxu0 %v908
        %v1131 = vpop.f32.mrb[0].mxu0
        %v1132 = vadd.f32 0.0, %v1131
        %v1133 = vpop.f32.mrb[0].mxu0
        %1134 = vmatprep.mubr.f32.mxu0 0.0
        %1135 = vmatmul.mubr.f32.gmra.mrb[0].mxu0 %v911
        %v1136 = vpop.f32.mrb[0].mxu0
        %v1137 = vadd.f32 0.0, %v1136
        %v1138 = vpop.f32.mrb[0].mxu0
        %1139 = vmatprep.mubr.f32.mxu0 0.0
        %1140 = vmatmul.mubr.f32.gmra.mrb[0].mxu0 %v914
        %v1141 = vpop.f32.mrb[0].mxu0
        %v1142 = vadd.f32 0.0, %v1141
        %v1143 = vpop.f32.mrb[0].mxu0
        %1144 = vdwg.mxu0
        %v1146 = vsel %vm819, %v753, 0
        %v1149 = vsel %vm819, %v754, 0
        %v1152 = vsel %vm819, %v755, 0
        %v1155 = vsel %vm819, %v756, 0
        %v1158 = vsel %vm819, %v757, 0
        %v1161 = vsel %vm819, %v758, 0
        %v1164 = vsel %vm819, %v759, 0
        %v1167 = vsel %vm819, %v760, 0
        %v1170 = vsel %vm819, %v761, 0
        %v1173 = vsel %vm819, %v762, 0
        %v1176 = vsel %vm819, %v763, 0
        %v1179 = vsel %vm819, %v764, 0
        %v1182 = vsel %vm819, %v765, 0
        %v1185 = vsel %vm819, %v766, 0
        %v1188 = vsel %vm819, %v767, 0
        %v1191 = vsel %vm819, %v768, 0
        %v1194 = vsel %vm819, %v769, 0
        %v1197 = vsel %vm819, %v770, 0
        %v1200 = vsel %vm819, %v771, 0
        %v1203 = vsel %vm819, %v772, 0
        %v1206 = vsel %vm819, %v773, 0
        %v1209 = vsel %vm819, %v774, 0
        %v1212 = vsel %vm819, %v775, 0
        %v1215 = vsel %vm819, %v776, 0
        %v1218 = vsel %vm819, %v777, 0
        %v1221 = vsel %vm819, %v778, 0
        %v1224 = vsel %vm819, %v779, 0
        %v1227 = vsel %vm819, %v780, 0
        %v1230 = vsel %vm819, %v781, 0
        %v1233 = vsel %vm819, %v782, 0
        %v1236 = vsel %vm819, %v783, 0
        %v1239 = vsel %vm819, %v784, 0
        %v1242 = vsel %vm916, %v785, 0
        %1244 = vmatprep.subr.mxu0 0.0
        %1245 = vmatpush1.msra.mxu0 %v1242
        %1246 = vmatprep.subr.mxu0 0.0
        %1247 = vmatpush1.msra.mxu0 0.0
        %1248 = vmatprep.subr.mxu0 0.0
        %1249 = vmatpush1.msra.mxu0 0.0
        %1250 = vmatprep.subr.mxu0 0.0
        %1251 = vmatpush1.msra.mxu0 0.0
        %1252 = vmatprep.subr.mxu0 0.0
        %1253 = vmatpush1.msra.mxu0 0.0
        %1254 = vmatprep.subr.mxu0 0.0
        %1255 = vmatpush1.msra.mxu0 0.0
        %1256 = vmatprep.subr.mxu0 0.0
        %1257 = vmatpush1.msra.mxu0 0.0
        %1258 = vmatprep.subr.mxu0 0.0
        %1259 = vmatpush1.msra.mxu0 0.0
        %1260 = vmatprep.subr.mxu0 0.0
        %1261 = vmatpush1.msra.mxu0 0.0
        %1262 = vmatprep.subr.mxu0 0.0
        %1263 = vmatpush1.msra.mxu0 0.0
        %1264 = vmatprep.subr.mxu0 0.0
        %1265 = vmatpush1.msra.mxu0 0.0
        %1266 = vmatprep.subr.mxu0 0.0
        %1267 = vmatpush1.msra.mxu0 0.0
        %1268 = vmatprep.subr.mxu0 0.0
        %1269 = vmatpush1.msra.mxu0 0.0
        %1270 = vmatprep.subr.mxu0 0.0
        %1271 = vmatpush1.msra.mxu0 0.0
        %1272 = vmatprep.subr.mxu0 0.0
        %1273 = vmatpush1.msra.mxu0 0.0
        %1274 = vmatprep.subr.mxu0 0.0
        %1275 = vmatpush1.msra.mxu0 0.0
        %1276 = vmatprep.subr.mxu0 0.0
        %1277 = vmatpush1.msra.mxu0 0.0
        %1278 = vmatprep.subr.mxu0 0.0
        %1279 = vmatpush1.msra.mxu0 0.0
        %1280 = vmatprep.subr.mxu0 0.0
        %1281 = vmatpush1.msra.mxu0 0.0
        %1282 = vmatprep.subr.mxu0 0.0
        %1283 = vmatpush1.msra.mxu0 0.0
        %1284 = vmatprep.subr.mxu0 0.0
        %1285 = vmatpush1.msra.mxu0 0.0
        %1286 = vmatprep.subr.mxu0 0.0
        %1287 = vmatpush1.msra.mxu0 0.0
        %1288 = vmatprep.subr.mxu0 0.0
        %1289 = vmatpush1.msra.mxu0 0.0
        %1290 = vmatprep.subr.mxu0 0.0
        %1291 = vmatpush1.msra.mxu0 0.0
        %1292 = vmatprep.subr.mxu0 0.0
        %1293 = vmatpush1.msra.mxu0 0.0
        %1294 = vmatprep.subr.mxu0 0.0
        %1295 = vmatpush1.msra.mxu0 0.0
        %1296 = vmatprep.subr.mxu0 0.0
        %1297 = vmatpush1.msra.mxu0 0.0
        %1298 = vmatprep.subr.mxu0 0.0
        %1299 = vmatpush1.msra.mxu0 0.0
        %1300 = vmatprep.subr.mxu0 0.0
        %1301 = vmatpush1.msra.mxu0 0.0
        %1302 = vmatprep.subr.mxu0 0.0
        %1303 = vmatpush1.msra.mxu0 0.0
        %1304 = vmatprep.subr.mxu0 0.0
        %1305 = vmatpush1.msra.mxu0 0.0
        %1306 = vmatprep.subr.mxu0 0.0
        %1307 = vmatpush1.msra.mxu0 0.0
        %1308 = vmatprep.mubr.f32.mxu0 0.0
        %1309 = vmatmul.mubr.f32.gmra.mrb[0].mxu0 %v1146
        %v1310 = vpop.f32.mrb[0].mxu0
        %v1311 = vadd.f32 %v987, %v1310
        %v1312 = vpop.f32.mrb[0].mxu0
        %1313 = vmatprep.mubr.f32.mxu0 0.0
        %1314 = vmatmul.mubr.f32.gmra.mrb[0].mxu0 %v1149
        %v1315 = vpop.f32.mrb[0].mxu0
        %v1316 = vadd.f32 %v992, %v1315
        %v1317 = vpop.f32.mrb[0].mxu0
        %1318 = vmatprep.mubr.f32.mxu0 0.0
        %1319 = vmatmul.mubr.f32.gmra.mrb[0].mxu0 %v1152
        %v1320 = vpop.f32.mrb[0].mxu0
        %v1321 = vadd.f32 %v997, %v1320
        %v1322 = vpop.f32.mrb[0].mxu0
        %1323 = vmatprep.mubr.f32.mxu0 0.0
        %1324 = vmatmul.mubr.f32.gmra.mrb[0].mxu0 %v1155
        %v1325 = vpop.f32.mrb[0].mxu0
        %v1326 = vadd.f32 %v1002, %v1325
        %v1327 = vpop.f32.mrb[0].mxu0
        %1328 = vmatprep.mubr.f32.mxu0 0.0
        %1329 = vmatmul.mubr.f32.gmra.mrb[0].mxu0 %v1158
        %v1330 = vpop.f32.mrb[0].mxu0
        %v1331 = vadd.f32 %v1007, %v1330
        %v1332 = vpop.f32.mrb[0].mxu0
        %1333 = vmatprep.mubr.f32.mxu0 0.0
        %1334 = vmatmul.mubr.f32.gmra.mrb[0].mxu0 %v1161
        %v1335 = vpop.f32.mrb[0].mxu0
        %v1336 = vadd.f32 %v1012, %v1335
        %v1337 = vpop.f32.mrb[0].mxu0
        %1338 = vmatprep.mubr.f32.mxu0 0.0
        %1339 = vmatmul.mubr.f32.gmra.mrb[0].mxu0 %v1164
        %v1340 = vpop.f32.mrb[0].mxu0
        %v1341 = vadd.f32 %v1017, %v1340
        %v1342 = vpop.f32.mrb[0].mxu0
        %1343 = vmatprep.mubr.f32.mxu0 0.0
        %1344 = vmatmul.mubr.f32.gmra.mrb[0].mxu0 %v1167
        %v1345 = vpop.f32.mrb[0].mxu0
        %v1346 = vadd.f32 %v1022, %v1345
        %v1347 = vpop.f32.mrb[0].mxu0
        %1348 = vmatprep.mubr.f32.mxu0 0.0
        %1349 = vmatmul.mubr.f32.gmra.mrb[0].mxu0 %v1170
        %v1350 = vpop.f32.mrb[0].mxu0
        %v1351 = vadd.f32 %v1027, %v1350
        %v1352 = vpop.f32.mrb[0].mxu0
        %1353 = vmatprep.mubr.f32.mxu0 0.0
        %1354 = vmatmul.mubr.f32.gmra.mrb[0].mxu0 %v1173
        %v1355 = vpop.f32.mrb[0].mxu0
        %v1356 = vadd.f32 %v1032, %v1355
        %v1357 = vpop.f32.mrb[0].mxu0
        %1358 = vmatprep.mubr.f32.mxu0 0.0
        %1359 = vmatmul.mubr.f32.gmra.mrb[0].mxu0 %v1176
        %v1360 = vpop.f32.mrb[0].mxu0
        %v1361 = vadd.f32 %v1037, %v1360
        %v1362 = vpop.f32.mrb[0].mxu0
        %1363 = vmatprep.mubr.f32.mxu0 0.0
        %1364 = vmatmul.mubr.f32.gmra.mrb[0].mxu0 %v1179
        %v1365 = vpop.f32.mrb[0].mxu0
        %v1366 = vadd.f32 %v1042, %v1365
        %v1367 = vpop.f32.mrb[0].mxu0
        %1368 = vmatprep.mubr.f32.mxu0 0.0
        %1369 = vmatmul.mubr.f32.gmra.mrb[0].mxu0 %v1182
        %v1370 = vpop.f32.mrb[0].mxu0
        %v1371 = vadd.f32 %v1047, %v1370
        %v1372 = vpop.f32.mrb[0].mxu0
        %1373 = vmatprep.mubr.f32.mxu0 0.0
        %1374 = vmatmul.mubr.f32.gmra.mrb[0].mxu0 %v1185
        %v1375 = vpop.f32.mrb[0].mxu0
        %v1376 = vadd.f32 %v1052, %v1375
        %v1377 = vpop.f32.mrb[0].mxu0
        %1378 = vmatprep.mubr.f32.mxu0 0.0
        %1379 = vmatmul.mubr.f32.gmra.mrb[0].mxu0 %v1188
        %v1380 = vpop.f32.mrb[0].mxu0
        %v1381 = vadd.f32 %v1057, %v1380
        %v1382 = vpop.f32.mrb[0].mxu0
        %1383 = vmatprep.mubr.f32.mxu0 0.0
        %1384 = vmatmul.mubr.f32.gmra.mrb[0].mxu0 %v1191
        %v1385 = vpop.f32.mrb[0].mxu0
        %v1386 = vadd.f32 %v1062, %v1385
        %v1387 = vpop.f32.mrb[0].mxu0
        %1388 = vmatprep.mubr.f32.mxu0 0.0
        %1389 = vmatmul.mubr.f32.gmra.mrb[0].mxu0 %v1194
        %v1390 = vpop.f32.mrb[0].mxu0
        %v1391 = vadd.f32 %v1067, %v1390
        %v1392 = vpop.f32.mrb[0].mxu0
        %1393 = vmatprep.mubr.f32.mxu0 0.0
        %1394 = vmatmul.mubr.f32.gmra.mrb[0].mxu0 %v1197
        %v1395 = vpop.f32.mrb[0].mxu0
        %v1396 = vadd.f32 %v1072, %v1395
        %v1397 = vpop.f32.mrb[0].mxu0
        %1398 = vmatprep.mubr.f32.mxu0 0.0
        %1399 = vmatmul.mubr.f32.gmra.mrb[0].mxu0 %v1200
        %v1400 = vpop.f32.mrb[0].mxu0
        %v1401 = vadd.f32 %v1077, %v1400
        %v1402 = vpop.f32.mrb[0].mxu0
        %1403 = vmatprep.mubr.f32.mxu0 0.0
        %1404 = vmatmul.mubr.f32.gmra.mrb[0].mxu0 %v1203
        %v1405 = vpop.f32.mrb[0].mxu0
        %v1406 = vadd.f32 %v1082, %v1405
        %v1407 = vpop.f32.mrb[0].mxu0
        %1408 = vmatprep.mubr.f32.mxu0 0.0
        %1409 = vmatmul.mubr.f32.gmra.mrb[0].mxu0 %v1206
        %v1410 = vpop.f32.mrb[0].mxu0
        %v1411 = vadd.f32 %v1087, %v1410
        %v1412 = vpop.f32.mrb[0].mxu0
        %1413 = vmatprep.mubr.f32.mxu0 0.0
        %1414 = vmatmul.mubr.f32.gmra.mrb[0].mxu0 %v1209
        %v1415 = vpop.f32.mrb[0].mxu0
        %v1416 = vadd.f32 %v1092, %v1415
        %v1417 = vpop.f32.mrb[0].mxu0
        %1418 = vmatprep.mubr.f32.mxu0 0.0
        %1419 = vmatmul.mubr.f32.gmra.mrb[0].mxu0 %v1212
        %v1420 = vpop.f32.mrb[0].mxu0
        %v1421 = vadd.f32 %v1097, %v1420
        %v1422 = vpop.f32.mrb[0].mxu0
        %1423 = vmatprep.mubr.f32.mxu0 0.0
        %1424 = vmatmul.mubr.f32.gmra.mrb[0].mxu0 %v1215
        %v1425 = vpop.f32.mrb[0].mxu0
        %v1426 = vadd.f32 %v1102, %v1425
        %v1427 = vpop.f32.mrb[0].mxu0
        %1428 = vmatprep.mubr.f32.mxu0 0.0
        %1429 = vmatmul.mubr.f32.gmra.mrb[0].mxu0 %v1218
        %v1430 = vpop.f32.mrb[0].mxu0
        %v1431 = vadd.f32 %v1107, %v1430
        %v1432 = vpop.f32.mrb[0].mxu0
        %1433 = vmatprep.mubr.f32.mxu0 0.0
        %1434 = vmatmul.mubr.f32.gmra.mrb[0].mxu0 %v1221
        %v1435 = vpop.f32.mrb[0].mxu0
        %v1436 = vadd.f32 %v1112, %v1435
        %v1437 = vpop.f32.mrb[0].mxu0
        %1438 = vmatprep.mubr.f32.mxu0 0.0
        %1439 = vmatmul.mubr.f32.gmra.mrb[0].mxu0 %v1224
        %v1440 = vpop.f32.mrb[0].mxu0
        %v1441 = vadd.f32 %v1117, %v1440
        %v1442 = vpop.f32.mrb[0].mxu0
        %1443 = vmatprep.mubr.f32.mxu0 0.0
        %1444 = vmatmul.mubr.f32.gmra.mrb[0].mxu0 %v1227
        %v1445 = vpop.f32.mrb[0].mxu0
        %v1446 = vadd.f32 %v1122, %v1445
        %v1447 = vpop.f32.mrb[0].mxu0
        %1448 = vmatprep.mubr.f32.mxu0 0.0
        %1449 = vmatmul.mubr.f32.gmra.mrb[0].mxu0 %v1230
        %v1450 = vpop.f32.mrb[0].mxu0
        %v1451 = vadd.f32 %v1127, %v1450
        %v1452 = vpop.f32.mrb[0].mxu0
        %1453 = vmatprep.mubr.f32.mxu0 0.0
        %1454 = vmatmul.mubr.f32.gmra.mrb[0].mxu0 %v1233
        %v1455 = vpop.f32.mrb[0].mxu0
        %v1456 = vadd.f32 %v1132, %v1455
        %v1457 = vpop.f32.mrb[0].mxu0
        %1458 = vmatprep.mubr.f32.mxu0 0.0
        %1459 = vmatmul.mubr.f32.gmra.mrb[0].mxu0 %v1236
        %v1460 = vpop.f32.mrb[0].mxu0
        %v1461 = vadd.f32 %v1137, %v1460
        %v1462 = vpop.f32.mrb[0].mxu0
        %1463 = vmatprep.mubr.f32.mxu0 0.0
        %1464 = vmatmul.mubr.f32.gmra.mrb[0].mxu0 %v1239
        %v1465 = vpop.f32.mrb[0].mxu0
        %v1466 = vadd.f32 %v1142, %v1465
        %v1467 = vpop.f32.mrb[0].mxu0
        %1468 = vdwg.mxu0
        %v1469 = vld [vmem:[%s700] sm:$0xff]
        %v1470 = vld [vmem:[%s700 + $0x8] sm:$0xff]
        %v1471 = vld [vmem:[%s700 + $0x10] sm:$0xff]
        %v1472 = vld [vmem:[%s700 + $0x18] sm:$0xff]
        %v1473 = vld [vmem:[%s700 + $0x20] sm:$0xff]
        %v1474 = vld [vmem:[%s700 + $0x28] sm:$0xff]
        %v1475 = vld [vmem:[%s700 + $0x30] sm:$0xff]
        %v1476 = vld [vmem:[%s700 + $0x38] sm:$0xff]
        %v1477 = vld [vmem:[%s700 + $0x40] sm:$0xff]
        %v1478 = vld [vmem:[%s700 + $0x48] sm:$0xff]
        %v1479 = vld [vmem:[%s700 + $0x50] sm:$0xff]
        %v1480 = vld [vmem:[%s700 + $0x58] sm:$0xff]
        %v1481 = vld [vmem:[%s700 + $0x60] sm:$0xff]
        %v1482 = vld [vmem:[%s700 + $0x68] sm:$0xff]
        %v1483 = vld [vmem:[%s700 + $0x70] sm:$0xff]
        %v1484 = vld [vmem:[%s700 + $0x78] sm:$0xff]
        %v1485 = vld [vmem:[%s700 + $0x80] sm:$0xff]
        %v1486 = vld [vmem:[%s700 + $0x88] sm:$0xff]
        %v1487 = vld [vmem:[%s700 + $0x90] sm:$0xff]
        %v1488 = vld [vmem:[%s700 + $0x98] sm:$0xff]
        %v1489 = vld [vmem:[%s700 + $0xa0] sm:$0xff]
        %v1490 = vld [vmem:[%s700 + $0xa8] sm:$0xff]
        %v1491 = vld [vmem:[%s700 + $0xb0] sm:$0xff]
        %v1492 = vld [vmem:[%s700 + $0xb8] sm:$0xff]
        %v1493 = vld [vmem:[%s700 + $0xc0] sm:$0xff]
        %v1494 = vld [vmem:[%s700 + $0xc8] sm:$0xff]
        %v1495 = vld [vmem:[%s700 + $0xd0] sm:$0xff]
        %v1496 = vld [vmem:[%s700 + $0xd8] sm:$0xff]
        %v1497 = vld [vmem:[%s700 + $0xe0] sm:$0xff]
        %v1498 = vld [vmem:[%s700 + $0xe8] sm:$0xff]
        %v1499 = vld [vmem:[%s700 + $0xf0] sm:$0xff]
        %v1500 = vld [vmem:[%s700 + $0xf8] sm:$0xff]
        %v1501 = vld [vmem:[%s6] sm:$0x7]
        %v1503 = vsel %vm819, %v1469, 0
        %v1506 = vsel %vm819, %v1470, 0
        %v1509 = vsel %vm819, %v1471, 0
        %v1512 = vsel %vm819, %v1472, 0
        %v1515 = vsel %vm819, %v1473, 0
        %v1518 = vsel %vm819, %v1474, 0
        %v1521 = vsel %vm819, %v1475, 0
        %v1524 = vsel %vm819, %v1476, 0
        %v1527 = vsel %vm819, %v1477, 0
        %v1530 = vsel %vm819, %v1478, 0
        %v1533 = vsel %vm819, %v1479, 0
        %v1536 = vsel %vm819, %v1480, 0
        %v1539 = vsel %vm819, %v1481, 0
        %v1542 = vsel %vm819, %v1482, 0
        %v1545 = vsel %vm819, %v1483, 0
        %v1548 = vsel %vm819, %v1484, 0
        %v1551 = vsel %vm819, %v1485, 0
        %v1554 = vsel %vm819, %v1486, 0
        %v1557 = vsel %vm819, %v1487, 0
        %v1560 = vsel %vm819, %v1488, 0
        %v1563 = vsel %vm819, %v1489, 0
        %v1566 = vsel %vm819, %v1490, 0
        %v1569 = vsel %vm819, %v1491, 0
        %v1572 = vsel %vm819, %v1492, 0
        %v1575 = vsel %vm819, %v1493, 0
        %v1578 = vsel %vm819, %v1494, 0
        %v1581 = vsel %vm819, %v1495, 0
        %v1584 = vsel %vm819, %v1496, 0
        %v1587 = vsel %vm819, %v1497, 0
        %v1590 = vsel %vm819, %v1498, 0
        %v1593 = vsel %vm819, %v1499, 0
        %v1596 = vsel %vm819, %v1500, 0
        %v1599 = vsel %vm916, %v1501, 0
        %1601 = vmatprep.subr.mxu0 0.0
        %1602 = vmatpush1.msra.mxu0 %v1599
        %1603 = vmatprep.subr.mxu0 0.0
        %1604 = vmatpush1.msra.mxu0 0.0
        %1605 = vmatprep.subr.mxu0 0.0
        %1606 = vmatpush1.msra.mxu0 0.0
        %1607 = vmatprep.subr.mxu0 0.0
        %1608 = vmatpush1.msra.mxu0 0.0
        %1609 = vmatprep.subr.mxu0 0.0
        %1610 = vmatpush1.msra.mxu0 0.0
        %1611 = vmatprep.subr.mxu0 0.0
        %1612 = vmatpush1.msra.mxu0 0.0
        %1613 = vmatprep.subr.mxu0 0.0
        %1614 = vmatpush1.msra.mxu0 0.0
        %1615 = vmatprep.subr.mxu0 0.0
        %1616 = vmatpush1.msra.mxu0 0.0
        %1617 = vmatprep.subr.mxu0 0.0
        %1618 = vmatpush1.msra.mxu0 0.0
        %1619 = vmatprep.subr.mxu0 0.0
        %1620 = vmatpush1.msra.mxu0 0.0
        %1621 = vmatprep.subr.mxu0 0.0
        %1622 = vmatpush1.msra.mxu0 0.0
        %1623 = vmatprep.subr.mxu0 0.0
        %1624 = vmatpush1.msra.mxu0 0.0
        %1625 = vmatprep.subr.mxu0 0.0
        %1626 = vmatpush1.msra.mxu0 0.0
        %1627 = vmatprep.subr.mxu0 0.0
        %1628 = vmatpush1.msra.mxu0 0.0
        %1629 = vmatprep.subr.mxu0 0.0
        %1630 = vmatpush1.msra.mxu0 0.0
        %1631 = vmatprep.subr.mxu0 0.0
        %1632 = vmatpush1.msra.mxu0 0.0
        %1633 = vmatprep.subr.mxu0 0.0
        %1634 = vmatpush1.msra.mxu0 0.0
        %1635 = vmatprep.subr.mxu0 0.0
        %1636 = vmatpush1.msra.mxu0 0.0
        %1637 = vmatprep.subr.mxu0 0.0
        %1638 = vmatpush1.msra.mxu0 0.0
        %1639 = vmatprep.subr.mxu0 0.0
        %1640 = vmatpush1.msra.mxu0 0.0
        %1641 = vmatprep.subr.mxu0 0.0
        %1642 = vmatpush1.msra.mxu0 0.0
        %1643 = vmatprep.subr.mxu0 0.0
        %1644 = vmatpush1.msra.mxu0 0.0
        %1645 = vmatprep.subr.mxu0 0.0
        %1646 = vmatpush1.msra.mxu0 0.0
        %1647 = vmatprep.subr.mxu0 0.0
        %1648 = vmatpush1.msra.mxu0 0.0
        %1649 = vmatprep.subr.mxu0 0.0
        %1650 = vmatpush1.msra.mxu0 0.0
        %1651 = vmatprep.subr.mxu0 0.0
        %1652 = vmatpush1.msra.mxu0 0.0
        %1653 = vmatprep.subr.mxu0 0.0
        %1654 = vmatpush1.msra.mxu0 0.0
        %1655 = vmatprep.subr.mxu0 0.0
        %1656 = vmatpush1.msra.mxu0 0.0
        %1657 = vmatprep.subr.mxu0 0.0
        %1658 = vmatpush1.msra.mxu0 0.0
        %1659 = vmatprep.subr.mxu0 0.0
        %1660 = vmatpush1.msra.mxu0 0.0
        %1661 = vmatprep.subr.mxu0 0.0
        %1662 = vmatpush1.msra.mxu0 0.0
        %1663 = vmatprep.subr.mxu0 0.0
        %1664 = vmatpush1.msra.mxu0 0.0
        %1665 = vmatprep.mubr.f32.mxu0 0.0
        %1666 = vmatmul.mubr.f32.gmra.mrb[0].mxu0 %v1503
        %v1667 = vpop.f32.mrb[0].mxu0
        %v1668 = vadd.f32 0.0, %v1667
        %v1669 = vpop.f32.mrb[0].mxu0
        %1670 = vmatprep.mubr.f32.mxu0 0.0
        %1671 = vmatmul.mubr.f32.gmra.mrb[0].mxu0 %v1506
        %v1672 = vpop.f32.mrb[0].mxu0
        %v1673 = vadd.f32 0.0, %v1672
        %v1674 = vpop.f32.mrb[0].mxu0
        %1675 = vmatprep.mubr.f32.mxu0 0.0
        %1676 = vmatmul.mubr.f32.gmra.mrb[0].mxu0 %v1509
        %v1677 = vpop.f32.mrb[0].mxu0
        %v1678 = vadd.f32 0.0, %v1677
        %v1679 = vpop.f32.mrb[0].mxu0
        %1680 = vmatprep.mubr.f32.mxu0 0.0
        %1681 = vmatmul.mubr.f32.gmra.mrb[0].mxu0 %v1512
        %v1682 = vpop.f32.mrb[0].mxu0
        %v1683 = vadd.f32 0.0, %v1682
        %v1684 = vpop.f32.mrb[0].mxu0
        %1685 = vmatprep.mubr.f32.mxu0 0.0
        %1686 = vmatmul.mubr.f32.gmra.mrb[0].mxu0 %v1515
        %v1687 = vpop.f32.mrb[0].mxu0
        %v1688 = vadd.f32 0.0, %v1687
        %v1689 = vpop.f32.mrb[0].mxu0
        %1690 = vmatprep.mubr.f32.mxu0 0.0
        %1691 = vmatmul.mubr.f32.gmra.mrb[0].mxu0 %v1518
        %v1692 = vpop.f32.mrb[0].mxu0
        %v1693 = vadd.f32 0.0, %v1692
        %v1694 = vpop.f32.mrb[0].mxu0
        %1695 = vmatprep.mubr.f32.mxu0 0.0
        %1696 = vmatmul.mubr.f32.gmra.mrb[0].mxu0 %v1521
        %v1697 = vpop.f32.mrb[0].mxu0
        %v1698 = vadd.f32 0.0, %v1697
        %v1699 = vpop.f32.mrb[0].mxu0
        %1700 = vmatprep.mubr.f32.mxu0 0.0
        %1701 = vmatmul.mubr.f32.gmra.mrb[0].mxu0 %v1524
        %v1702 = vpop.f32.mrb[0].mxu0
        %v1703 = vadd.f32 0.0, %v1702
        %v1704 = vpop.f32.mrb[0].mxu0
        %1705 = vmatprep.mubr.f32.mxu0 0.0
        %1706 = vmatmul.mubr.f32.gmra.mrb[0].mxu0 %v1527
        %v1707 = vpop.f32.mrb[0].mxu0
        %v1708 = vadd.f32 0.0, %v1707
        %v1709 = vpop.f32.mrb[0].mxu0
        %1710 = vmatprep.mubr.f32.mxu0 0.0
        %1711 = vmatmul.mubr.f32.gmra.mrb[0].mxu0 %v1530
        %v1712 = vpop.f32.mrb[0].mxu0
        %v1713 = vadd.f32 0.0, %v1712
        %v1714 = vpop.f32.mrb[0].mxu0
        %1715 = vmatprep.mubr.f32.mxu0 0.0
        %1716 = vmatmul.mubr.f32.gmra.mrb[0].mxu0 %v1533
        %v1717 = vpop.f32.mrb[0].mxu0
        %v1718 = vadd.f32 0.0, %v1717
        %v1719 = vpop.f32.mrb[0].mxu0
        %1720 = vmatprep.mubr.f32.mxu0 0.0
        %1721 = vmatmul.mubr.f32.gmra.mrb[0].mxu0 %v1536
        %v1722 = vpop.f32.mrb[0].mxu0
        %v1723 = vadd.f32 0.0, %v1722
        %v1724 = vpop.f32.mrb[0].mxu0
        %1725 = vmatprep.mubr.f32.mxu0 0.0
        %1726 = vmatmul.mubr.f32.gmra.mrb[0].mxu0 %v1539
        %v1727 = vpop.f32.mrb[0].mxu0
        %v1728 = vadd.f32 0.0, %v1727
        %v1729 = vpop.f32.mrb[0].mxu0
        %1730 = vmatprep.mubr.f32.mxu0 0.0
        %1731 = vmatmul.mubr.f32.gmra.mrb[0].mxu0 %v1542
        %v1732 = vpop.f32.mrb[0].mxu0
        %v1733 = vadd.f32 0.0, %v1732
        %v1734 = vpop.f32.mrb[0].mxu0
        %1735 = vmatprep.mubr.f32.mxu0 0.0
        %1736 = vmatmul.mubr.f32.gmra.mrb[0].mxu0 %v1545
        %v1737 = vpop.f32.mrb[0].mxu0
        %v1738 = vadd.f32 0.0, %v1737
        %v1739 = vpop.f32.mrb[0].mxu0
        %1740 = vmatprep.mubr.f32.mxu0 0.0
        %1741 = vmatmul.mubr.f32.gmra.mrb[0].mxu0 %v1548
        %v1742 = vpop.f32.mrb[0].mxu0
        %v1743 = vadd.f32 0.0, %v1742
        %v1744 = vpop.f32.mrb[0].mxu0
        %1745 = vmatprep.mubr.f32.mxu0 0.0
        %1746 = vmatmul.mubr.f32.gmra.mrb[0].mxu0 %v1551
        %v1747 = vpop.f32.mrb[0].mxu0
        %v1748 = vadd.f32 0.0, %v1747
        %v1749 = vpop.f32.mrb[0].mxu0
        %1750 = vmatprep.mubr.f32.mxu0 0.0
        %1751 = vmatmul.mubr.f32.gmra.mrb[0].mxu0 %v1554
        %v1752 = vpop.f32.mrb[0].mxu0
        %v1753 = vadd.f32 0.0, %v1752
        %v1754 = vpop.f32.mrb[0].mxu0
        %1755 = vmatprep.mubr.f32.mxu0 0.0
        %1756 = vmatmul.mubr.f32.gmra.mrb[0].mxu0 %v1557
        %v1757 = vpop.f32.mrb[0].mxu0
        %v1758 = vadd.f32 0.0, %v1757
        %v1759 = vpop.f32.mrb[0].mxu0
        %1760 = vmatprep.mubr.f32.mxu0 0.0
        %1761 = vmatmul.mubr.f32.gmra.mrb[0].mxu0 %v1560
        %v1762 = vpop.f32.mrb[0].mxu0
        %v1763 = vadd.f32 0.0, %v1762
        %v1764 = vpop.f32.mrb[0].mxu0
        %1765 = vmatprep.mubr.f32.mxu0 0.0
        %1766 = vmatmul.mubr.f32.gmra.mrb[0].mxu0 %v1563
        %v1767 = vpop.f32.mrb[0].mxu0
        %v1768 = vadd.f32 0.0, %v1767
        %v1769 = vpop.f32.mrb[0].mxu0
        %1770 = vmatprep.mubr.f32.mxu0 0.0
        %1771 = vmatmul.mubr.f32.gmra.mrb[0].mxu0 %v1566
        %v1772 = vpop.f32.mrb[0].mxu0
        %v1773 = vadd.f32 0.0, %v1772
        %v1774 = vpop.f32.mrb[0].mxu0
        %1775 = vmatprep.mubr.f32.mxu0 0.0
        %1776 = vmatmul.mubr.f32.gmra.mrb[0].mxu0 %v1569
        %v1777 = vpop.f32.mrb[0].mxu0
        %v1778 = vadd.f32 0.0, %v1777
        %v1779 = vpop.f32.mrb[0].mxu0
        %1780 = vmatprep.mubr.f32.mxu0 0.0
        %1781 = vmatmul.mubr.f32.gmra.mrb[0].mxu0 %v1572
        %v1782 = vpop.f32.mrb[0].mxu0
        %v1783 = vadd.f32 0.0, %v1782
        %v1784 = vpop.f32.mrb[0].mxu0
        %1785 = vmatprep.mubr.f32.mxu0 0.0
        %1786 = vmatmul.mubr.f32.gmra.mrb[0].mxu0 %v1575
        %v1787 = vpop.f32.mrb[0].mxu0
        %v1788 = vadd.f32 0.0, %v1787
        %v1789 = vpop.f32.mrb[0].mxu0
        %1790 = vmatprep.mubr.f32.mxu0 0.0
        %1791 = vmatmul.mubr.f32.gmra.mrb[0].mxu0 %v1578
        %v1792 = vpop.f32.mrb[0].mxu0
        %v1793 = vadd.f32 0.0, %v1792
        %v1794 = vpop.f32.mrb[0].mxu0
        %1795 = vmatprep.mubr.f32.mxu0 0.0
        %1796 = vmatmul.mubr.f32.gmra.mrb[0].mxu0 %v1581
        %v1797 = vpop.f32.mrb[0].mxu0
        %v1798 = vadd.f32 0.0, %v1797
        %v1799 = vpop.f32.mrb[0].mxu0
        %1800 = vmatprep.mubr.f32.mxu0 0.0
        %1801 = vmatmul.mubr.f32.gmra.mrb[0].mxu0 %v1584
        %v1802 = vpop.f32.mrb[0].mxu0
        %v1803 = vadd.f32 0.0, %v1802
        %v1804 = vpop.f32.mrb[0].mxu0
        %1805 = vmatprep.mubr.f32.mxu0 0.0
        %1806 = vmatmul.mubr.f32.gmra.mrb[0].mxu0 %v1587
        %v1807 = vpop.f32.mrb[0].mxu0
        %v1808 = vadd.f32 0.0, %v1807
        %v1809 = vpop.f32.mrb[0].mxu0
        %1810 = vmatprep.mubr.f32.mxu0 0.0
        %1811 = vmatmul.mubr.f32.gmra.mrb[0].mxu0 %v1590
        %v1812 = vpop.f32.mrb[0].mxu0
        %v1813 = vadd.f32 0.0, %v1812
        %v1814 = vpop.f32.mrb[0].mxu0
        %1815 = vmatprep.mubr.f32.mxu0 0.0
        %1816 = vmatmul.mubr.f32.gmra.mrb[0].mxu0 %v1593
        %v1817 = vpop.f32.mrb[0].mxu0
        %v1818 = vadd.f32 0.0, %v1817
        %v1819 = vpop.f32.mrb[0].mxu0
        %1820 = vmatprep.mubr.f32.mxu0 0.0
        %1821 = vmatmul.mubr.f32.gmra.mrb[0].mxu0 %v1596
        %v1822 = vpop.f32.mrb[0].mxu0
        %v1823 = vadd.f32 0.0, %v1822
        %v1824 = vpop.f32.mrb[0].mxu0
        %1825 = vdwg.mxu0
        %v1826 = vadd.f32 %v1311, %v1668
        %v1827 = vadd.f32 %v1316, %v1673
        %v1828 = vadd.f32 %v1321, %v1678
        %v1829 = vadd.f32 %v1326, %v1683
        %v1830 = vadd.f32 %v1331, %v1688
        %v1831 = vadd.f32 %v1336, %v1693
        %v1832 = vadd.f32 %v1341, %v1698
        %v1833 = vadd.f32 %v1346, %v1703
        %v1834 = vadd.f32 %v1351, %v1708
        %v1835 = vadd.f32 %v1356, %v1713
        %v1836 = vadd.f32 %v1361, %v1718
        %v1837 = vadd.f32 %v1366, %v1723
        %v1838 = vadd.f32 %v1371, %v1728
        %v1839 = vadd.f32 %v1376, %v1733
        %v1840 = vadd.f32 %v1381, %v1738
        %v1841 = vadd.f32 %v1386, %v1743
        %v1842 = vadd.f32 %v1391, %v1748
        %v1843 = vadd.f32 %v1396, %v1753
        %v1844 = vadd.f32 %v1401, %v1758
        %v1845 = vadd.f32 %v1406, %v1763
        %v1846 = vadd.f32 %v1411, %v1768
        %v1847 = vadd.f32 %v1416, %v1773
        %v1848 = vadd.f32 %v1421, %v1778
        %v1849 = vadd.f32 %v1426, %v1783
        %v1850 = vadd.f32 %v1431, %v1788
        %v1851 = vadd.f32 %v1436, %v1793
        %v1852 = vadd.f32 %v1441, %v1798
        %v1853 = vadd.f32 %v1446, %v1803
        %v1854 = vadd.f32 %v1451, %v1808
        %v1855 = vadd.f32 %v1456, %v1813
        %v1856 = vadd.f32 %v1461, %v1818
        %v1857 = vadd.f32 %v1466, %v1823
        %v1858 = vld [vmem:[%s714] sm:$0xff]
        %v1859 = vld [vmem:[%s714 + $0x8] sm:$0xff]
        %v1860 = vld [vmem:[%s714 + $0x10] sm:$0xff]
        %v1861 = vld [vmem:[%s714 + $0x18] sm:$0xff]
        %v1862 = vld [vmem:[%s714 + $0x20] sm:$0xff]
        %v1863 = vld [vmem:[%s714 + $0x28] sm:$0xff]
        %v1864 = vld [vmem:[%s714 + $0x30] sm:$0xff]
        %v1865 = vld [vmem:[%s714 + $0x38] sm:$0xff]
        %v1866 = vld [vmem:[%s714 + $0x40] sm:$0xff]
        %v1867 = vld [vmem:[%s714 + $0x48] sm:$0xff]
        %v1868 = vld [vmem:[%s714 + $0x50] sm:$0xff]
        %v1869 = vld [vmem:[%s714 + $0x58] sm:$0xff]
        %v1870 = vld [vmem:[%s714 + $0x60] sm:$0xff]
        %v1871 = vld [vmem:[%s714 + $0x68] sm:$0xff]
        %v1872 = vld [vmem:[%s714 + $0x70] sm:$0xff]
        %v1873 = vld [vmem:[%s714 + $0x78] sm:$0xff]
        %v1874 = vld [vmem:[%s714 + $0x80] sm:$0xff]
        %v1875 = vld [vmem:[%s714 + $0x88] sm:$0xff]
        %v1876 = vld [vmem:[%s714 + $0x90] sm:$0xff]
        %v1877 = vld [vmem:[%s714 + $0x98] sm:$0xff]
        %v1878 = vld [vmem:[%s714 + $0xa0] sm:$0xff]
        %v1879 = vld [vmem:[%s714 + $0xa8] sm:$0xff]
        %v1880 = vld [vmem:[%s714 + $0xb0] sm:$0xff]
        %v1881 = vld [vmem:[%s714 + $0xb8] sm:$0xff]
        %v1882 = vld [vmem:[%s714 + $0xc0] sm:$0xff]
        %v1883 = vld [vmem:[%s714 + $0xc8] sm:$0xff]
        %v1884 = vld [vmem:[%s714 + $0xd0] sm:$0xff]
        %v1885 = vld [vmem:[%s714 + $0xd8] sm:$0xff]
        %v1886 = vld [vmem:[%s714 + $0xe0] sm:$0xff]
        %v1887 = vld [vmem:[%s714 + $0xe8] sm:$0xff]
        %v1888 = vld [vmem:[%s714 + $0xf0] sm:$0xff]
        %v1889 = vld [vmem:[%s714 + $0xf8] sm:$0xff]
        %v1890 = vld [vmem:[%s7] sm:$0xff]
        %v1891 = vld [vmem:[%s7 + $0x8] sm:$0xff]
        %v1892 = vld [vmem:[%s7 + $0x10] sm:$0xff]
        %v1893 = vld [vmem:[%s7 + $0x18] sm:$0xff]
        %vm1894 = vcmask 261120
        %v1896 = vsel %vm1894, %v1858, 0
        %v1899 = vsel %vm1894, %v1859, 0
        %v1902 = vsel %vm1894, %v1860, 0
        %v1905 = vsel %vm1894, %v1861, 0
        %v1908 = vsel %vm1894, %v1862, 0
        %v1911 = vsel %vm1894, %v1863, 0
        %v1914 = vsel %vm1894, %v1864, 0
        %v1917 = vsel %vm1894, %v1865, 0
        %v1920 = vsel %vm1894, %v1866, 0
        %v1923 = vsel %vm1894, %v1867, 0
        %v1926 = vsel %vm1894, %v1868, 0
        %v1929 = vsel %vm1894, %v1869, 0
        %v1932 = vsel %vm1894, %v1870, 0
        %v1935 = vsel %vm1894, %v1871, 0
        %v1938 = vsel %vm1894, %v1872, 0
        %v1941 = vsel %vm1894, %v1873, 0
        %v1944 = vsel %vm1894, %v1874, 0
        %v1947 = vsel %vm1894, %v1875, 0
        %v1950 = vsel %vm1894, %v1876, 0
        %v1953 = vsel %vm1894, %v1877, 0
        %v1956 = vsel %vm1894, %v1878, 0
        %v1959 = vsel %vm1894, %v1879, 0
        %v1962 = vsel %vm1894, %v1880, 0
        %v1965 = vsel %vm1894, %v1881, 0
        %v1968 = vsel %vm1894, %v1882, 0
        %v1971 = vsel %vm1894, %v1883, 0
        %v1974 = vsel %vm1894, %v1884, 0
        %v1977 = vsel %vm1894, %v1885, 0
        %v1980 = vsel %vm1894, %v1886, 0
        %v1983 = vsel %vm1894, %v1887, 0
        %v1986 = vsel %vm1894, %v1888, 0
        %v1989 = vsel %vm1894, %v1889, 0
        %1991 = vmatprep.subr.mxu0 0.0
        %1992 = vmatpush1.msra.mxu0 %v1890
        %1993 = vmatprep.subr.mxu0 0.0
        %1994 = vmatpush1.msra.mxu0 %v1891
        %1995 = vmatprep.subr.mxu0 0.0
        %1996 = vmatpush1.msra.mxu0 %v1892
        %1997 = vmatprep.subr.mxu0 0.0
        %1998 = vmatpush1.msra.mxu0 %v1893
        %1999 = vmatprep.subr.mxu0 0.0
        %2000 = vmatpush1.msra.mxu0 0.0
        %2001 = vmatprep.subr.mxu0 0.0
        %2002 = vmatpush1.msra.mxu0 0.0
        %2003 = vmatprep.subr.mxu0 0.0
        %2004 = vmatpush1.msra.mxu0 0.0
        %2005 = vmatprep.subr.mxu0 0.0
        %2006 = vmatpush1.msra.mxu0 0.0
        %2007 = vmatprep.subr.mxu0 0.0
        %2008 = vmatpush1.msra.mxu0 0.0
        %2009 = vmatprep.subr.mxu0 0.0
        %2010 = vmatpush1.msra.mxu0 0.0
        %2011 = vmatprep.subr.mxu0 0.0
        %2012 = vmatpush1.msra.mxu0 0.0
        %2013 = vmatprep.subr.mxu0 0.0
        %2014 = vmatpush1.msra.mxu0 0.0
        %2015 = vmatprep.subr.mxu0 0.0
        %2016 = vmatpush1.msra.mxu0 0.0
        %2017 = vmatprep.subr.mxu0 0.0
        %2018 = vmatpush1.msra.mxu0 0.0
        %2019 = vmatprep.subr.mxu0 0.0
        %2020 = vmatpush1.msra.mxu0 0.0
        %2021 = vmatprep.subr.mxu0 0.0
        %2022 = vmatpush1.msra.mxu0 0.0
        %2023 = vmatprep.subr.mxu0 0.0
        %2024 = vmatpush1.msra.mxu0 0.0
        %2025 = vmatprep.subr.mxu0 0.0
        %2026 = vmatpush1.msra.mxu0 0.0
        %2027 = vmatprep.subr.mxu0 0.0
        %2028 = vmatpush1.msra.mxu0 0.0
        %2029 = vmatprep.subr.mxu0 0.0
        %2030 = vmatpush1.msra.mxu0 0.0
        %2031 = vmatprep.subr.mxu0 0.0
        %2032 = vmatpush1.msra.mxu0 0.0
        %2033 = vmatprep.subr.mxu0 0.0
        %2034 = vmatpush1.msra.mxu0 0.0
        %2035 = vmatprep.subr.mxu0 0.0
        %2036 = vmatpush1.msra.mxu0 0.0
        %2037 = vmatprep.subr.mxu0 0.0
        %2038 = vmatpush1.msra.mxu0 0.0
        %2039 = vmatprep.subr.mxu0 0.0
        %2040 = vmatpush1.msra.mxu0 0.0
        %2041 = vmatprep.subr.mxu0 0.0
        %2042 = vmatpush1.msra.mxu0 0.0
        %2043 = vmatprep.subr.mxu0 0.0
        %2044 = vmatpush1.msra.mxu0 0.0
        %2045 = vmatprep.subr.mxu0 0.0
        %2046 = vmatpush1.msra.mxu0 0.0
        %2047 = vmatprep.subr.mxu0 0.0
        %2048 = vmatpush1.msra.mxu0 0.0
        %2049 = vmatprep.subr.mxu0 0.0
        %2050 = vmatpush1.msra.mxu0 0.0
        %2051 = vmatprep.subr.mxu0 0.0
        %2052 = vmatpush1.msra.mxu0 0.0
        %2053 = vmatprep.subr.mxu0 0.0
        %2054 = vmatpush1.msra.mxu0 0.0
        %2055 = vmatprep.mubr.f32.mxu0 0.0
        %2056 = vmatmul.mubr.f32.gmra.mrb[0].mxu0 %v1896
        %v2057 = vpop.f32.mrb[0].mxu0
        %v2058 = vadd.f32 0.0, %v2057
        %v2059 = vpop.f32.mrb[0].mxu0
        %2060 = vmatprep.mubr.f32.mxu0 0.0
        %2061 = vmatmul.mubr.f32.gmra.mrb[0].mxu0 %v1899
        %v2062 = vpop.f32.mrb[0].mxu0
        %v2063 = vadd.f32 0.0, %v2062
        %v2064 = vpop.f32.mrb[0].mxu0
        %2065 = vmatprep.mubr.f32.mxu0 0.0
        %2066 = vmatmul.mubr.f32.gmra.mrb[0].mxu0 %v1902
        %v2067 = vpop.f32.mrb[0].mxu0
        %v2068 = vadd.f32 0.0, %v2067
        %v2069 = vpop.f32.mrb[0].mxu0
        %2070 = vmatprep.mubr.f32.mxu0 0.0
        %2071 = vmatmul.mubr.f32.gmra.mrb[0].mxu0 %v1905
        %v2072 = vpop.f32.mrb[0].mxu0
        %v2073 = vadd.f32 0.0, %v2072
        %v2074 = vpop.f32.mrb[0].mxu0
        %2075 = vmatprep.mubr.f32.mxu0 0.0
        %2076 = vmatmul.mubr.f32.gmra.mrb[0].mxu0 %v1908
        %v2077 = vpop.f32.mrb[0].mxu0
        %v2078 = vadd.f32 0.0, %v2077
        %v2079 = vpop.f32.mrb[0].mxu0
        %2080 = vmatprep.mubr.f32.mxu0 0.0
        %2081 = vmatmul.mubr.f32.gmra.mrb[0].mxu0 %v1911
        %v2082 = vpop.f32.mrb[0].mxu0
        %v2083 = vadd.f32 0.0, %v2082
        %v2084 = vpop.f32.mrb[0].mxu0
        %2085 = vmatprep.mubr.f32.mxu0 0.0
        %2086 = vmatmul.mubr.f32.gmra.mrb[0].mxu0 %v1914
        %v2087 = vpop.f32.mrb[0].mxu0
        %v2088 = vadd.f32 0.0, %v2087
        %v2089 = vpop.f32.mrb[0].mxu0
        %2090 = vmatprep.mubr.f32.mxu0 0.0
        %2091 = vmatmul.mubr.f32.gmra.mrb[0].mxu0 %v1917
        %v2092 = vpop.f32.mrb[0].mxu0
        %v2093 = vadd.f32 0.0, %v2092
        %v2094 = vpop.f32.mrb[0].mxu0
        %2095 = vmatprep.mubr.f32.mxu0 0.0
        %2096 = vmatmul.mubr.f32.gmra.mrb[0].mxu0 %v1920
        %v2097 = vpop.f32.mrb[0].mxu0
        %v2098 = vadd.f32 0.0, %v2097
        %v2099 = vpop.f32.mrb[0].mxu0
        %2100 = vmatprep.mubr.f32.mxu0 0.0
        %2101 = vmatmul.mubr.f32.gmra.mrb[0].mxu0 %v1923
        %v2102 = vpop.f32.mrb[0].mxu0
        %v2103 = vadd.f32 0.0, %v2102
        %v2104 = vpop.f32.mrb[0].mxu0
        %2105 = vmatprep.mubr.f32.mxu0 0.0
        %2106 = vmatmul.mubr.f32.gmra.mrb[0].mxu0 %v1926
        %v2107 = vpop.f32.mrb[0].mxu0
        %v2108 = vadd.f32 0.0, %v2107
        %v2109 = vpop.f32.mrb[0].mxu0
        %2110 = vmatprep.mubr.f32.mxu0 0.0
        %2111 = vmatmul.mubr.f32.gmra.mrb[0].mxu0 %v1929
        %v2112 = vpop.f32.mrb[0].mxu0
        %v2113 = vadd.f32 0.0, %v2112
        %v2114 = vpop.f32.mrb[0].mxu0
        %2115 = vmatprep.mubr.f32.mxu0 0.0
        %2116 = vmatmul.mubr.f32.gmra.mrb[0].mxu0 %v1932
        %v2117 = vpop.f32.mrb[0].mxu0
        %v2118 = vadd.f32 0.0, %v2117
        %v2119 = vpop.f32.mrb[0].mxu0
        %2120 = vmatprep.mubr.f32.mxu0 0.0
        %2121 = vmatmul.mubr.f32.gmra.mrb[0].mxu0 %v1935
        %v2122 = vpop.f32.mrb[0].mxu0
        %v2123 = vadd.f32 0.0, %v2122
        %v2124 = vpop.f32.mrb[0].mxu0
        %2125 = vmatprep.mubr.f32.mxu0 0.0
        %2126 = vmatmul.mubr.f32.gmra.mrb[0].mxu0 %v1938
        %v2127 = vpop.f32.mrb[0].mxu0
        %v2128 = vadd.f32 0.0, %v2127
        %v2129 = vpop.f32.mrb[0].mxu0
        %2130 = vmatprep.mubr.f32.mxu0 0.0
        %2131 = vmatmul.mubr.f32.gmra.mrb[0].mxu0 %v1941
        %v2132 = vpop.f32.mrb[0].mxu0
        %v2133 = vadd.f32 0.0, %v2132
        %v2134 = vpop.f32.mrb[0].mxu0
        %2135 = vmatprep.mubr.f32.mxu0 0.0
        %2136 = vmatmul.mubr.f32.gmra.mrb[0].mxu0 %v1944
        %v2137 = vpop.f32.mrb[0].mxu0
        %v2138 = vadd.f32 0.0, %v2137
        %v2139 = vpop.f32.mrb[0].mxu0
        %2140 = vmatprep.mubr.f32.mxu0 0.0
        %2141 = vmatmul.mubr.f32.gmra.mrb[0].mxu0 %v1947
        %v2142 = vpop.f32.mrb[0].mxu0
        %v2143 = vadd.f32 0.0, %v2142
        %v2144 = vpop.f32.mrb[0].mxu0
        %2145 = vmatprep.mubr.f32.mxu0 0.0
        %2146 = vmatmul.mubr.f32.gmra.mrb[0].mxu0 %v1950
        %v2147 = vpop.f32.mrb[0].mxu0
        %v2148 = vadd.f32 0.0, %v2147
        %v2149 = vpop.f32.mrb[0].mxu0
        %2150 = vmatprep.mubr.f32.mxu0 0.0
        %2151 = vmatmul.mubr.f32.gmra.mrb[0].mxu0 %v1953
        %v2152 = vpop.f32.mrb[0].mxu0
        %v2153 = vadd.f32 0.0, %v2152
        %v2154 = vpop.f32.mrb[0].mxu0
        %2155 = vmatprep.mubr.f32.mxu0 0.0
        %2156 = vmatmul.mubr.f32.gmra.mrb[0].mxu0 %v1956
        %v2157 = vpop.f32.mrb[0].mxu0
        %v2158 = vadd.f32 0.0, %v2157
        %v2159 = vpop.f32.mrb[0].mxu0
        %2160 = vmatprep.mubr.f32.mxu0 0.0
        %2161 = vmatmul.mubr.f32.gmra.mrb[0].mxu0 %v1959
        %v2162 = vpop.f32.mrb[0].mxu0
        %v2163 = vadd.f32 0.0, %v2162
        %v2164 = vpop.f32.mrb[0].mxu0
        %2165 = vmatprep.mubr.f32.mxu0 0.0
        %2166 = vmatmul.mubr.f32.gmra.mrb[0].mxu0 %v1962
        %v2167 = vpop.f32.mrb[0].mxu0
        %v2168 = vadd.f32 0.0, %v2167
        %v2169 = vpop.f32.mrb[0].mxu0
        %2170 = vmatprep.mubr.f32.mxu0 0.0
        %2171 = vmatmul.mubr.f32.gmra.mrb[0].mxu0 %v1965
        %v2172 = vpop.f32.mrb[0].mxu0
        %v2173 = vadd.f32 0.0, %v2172
        %v2174 = vpop.f32.mrb[0].mxu0
        %2175 = vmatprep.mubr.f32.mxu0 0.0
        %2176 = vmatmul.mubr.f32.gmra.mrb[0].mxu0 %v1968
        %v2177 = vpop.f32.mrb[0].mxu0
        %v2178 = vadd.f32 0.0, %v2177
        %v2179 = vpop.f32.mrb[0].mxu0
        %2180 = vmatprep.mubr.f32.mxu0 0.0
        %2181 = vmatmul.mubr.f32.gmra.mrb[0].mxu0 %v1971
        %v2182 = vpop.f32.mrb[0].mxu0
        %v2183 = vadd.f32 0.0, %v2182
        %v2184 = vpop.f32.mrb[0].mxu0
        %2185 = vmatprep.mubr.f32.mxu0 0.0
        %2186 = vmatmul.mubr.f32.gmra.mrb[0].mxu0 %v1974
        %v2187 = vpop.f32.mrb[0].mxu0
        %v2188 = vadd.f32 0.0, %v2187
        %v2189 = vpop.f32.mrb[0].mxu0
        %2190 = vmatprep.mubr.f32.mxu0 0.0
        %2191 = vmatmul.mubr.f32.gmra.mrb[0].mxu0 %v1977
        %v2192 = vpop.f32.mrb[0].mxu0
        %v2193 = vadd.f32 0.0, %v2192
        %v2194 = vpop.f32.mrb[0].mxu0
        %2195 = vmatprep.mubr.f32.mxu0 0.0
        %2196 = vmatmul.mubr.f32.gmra.mrb[0].mxu0 %v1980
        %v2197 = vpop.f32.mrb[0].mxu0
        %v2198 = vadd.f32 0.0, %v2197
        %v2199 = vpop.f32.mrb[0].mxu0
        %2200 = vmatprep.mubr.f32.mxu0 0.0
        %2201 = vmatmul.mubr.f32.gmra.mrb[0].mxu0 %v1983
        %v2202 = vpop.f32.mrb[0].mxu0
        %v2203 = vadd.f32 0.0, %v2202
        %v2204 = vpop.f32.mrb[0].mxu0
        %2205 = vmatprep.mubr.f32.mxu0 0.0
        %2206 = vmatmul.mubr.f32.gmra.mrb[0].mxu0 %v1986
        %v2207 = vpop.f32.mrb[0].mxu0
        %v2208 = vadd.f32 0.0, %v2207
        %v2209 = vpop.f32.mrb[0].mxu0
        %2210 = vmatprep.mubr.f32.mxu0 0.0
        %2211 = vmatmul.mubr.f32.gmra.mrb[0].mxu0 %v1989
        %v2212 = vpop.f32.mrb[0].mxu0
        %v2213 = vadd.f32 0.0, %v2212
        %v2214 = vpop.f32.mrb[0].mxu0
        %2215 = vdwg.mxu0
        %v2216 = vadd.f32 %v1826, %v2058
        %v2217 = vadd.f32 %v1827, %v2063
        %v2218 = vadd.f32 %v1828, %v2068
        %v2219 = vadd.f32 %v1829, %v2073
        %v2220 = vadd.f32 %v1830, %v2078
        %v2221 = vadd.f32 %v1831, %v2083
        %v2222 = vadd.f32 %v1832, %v2088
        %v2223 = vadd.f32 %v1833, %v2093
        %v2224 = vadd.f32 %v1834, %v2098
        %v2225 = vadd.f32 %v1835, %v2103
        %v2226 = vadd.f32 %v1836, %v2108
        %v2227 = vadd.f32 %v1837, %v2113
        %v2228 = vadd.f32 %v1838, %v2118
        %v2229 = vadd.f32 %v1839, %v2123
        %v2230 = vadd.f32 %v1840, %v2128
        %v2231 = vadd.f32 %v1841, %v2133
        %v2232 = vadd.f32 %v1842, %v2138
        %v2233 = vadd.f32 %v1843, %v2143
        %v2234 = vadd.f32 %v1844, %v2148
        %v2235 = vadd.f32 %v1845, %v2153
        %v2236 = vadd.f32 %v1846, %v2158
        %v2237 = vadd.f32 %v1847, %v2163
        %v2238 = vadd.f32 %v1848, %v2168
        %v2239 = vadd.f32 %v1849, %v2173
        %v2240 = vadd.f32 %v1850, %v2178
        %v2241 = vadd.f32 %v1851, %v2183
        %v2242 = vadd.f32 %v1852, %v2188
        %v2243 = vadd.f32 %v1853, %v2193
        %v2244 = vadd.f32 %v1854, %v2198
        %v2245 = vadd.f32 %v1855, %v2203
        %v2246 = vadd.f32 %v1856, %v2208
        %v2247 = vadd.f32 %v1857, %v2213
        %v2248 = vld [vmem:[%s8] sm:$0x1]
        %v2250 = vlaneseq
        %v2251 = vshrl.u32 %v2250, 7
        %v2252 = vsub.s32 0, %v2251
        %v2253 = vrot.slane %v2248, %v2252
        %v2255 = vadd.f32 %v2216, %v2253
        %v2256 = vadd.f32 %v2217, %v2253
        %v2257 = vadd.f32 %v2218, %v2253
        %v2258 = vadd.f32 %v2219, %v2253
        %v2259 = vadd.f32 %v2220, %v2253
        %v2260 = vadd.f32 %v2221, %v2253
        %v2261 = vadd.f32 %v2222, %v2253
        %v2262 = vadd.f32 %v2223, %v2253
        %v2263 = vadd.f32 %v2224, %v2253
        %v2264 = vadd.f32 %v2225, %v2253
        %v2265 = vadd.f32 %v2226, %v2253
        %v2266 = vadd.f32 %v2227, %v2253
        %v2267 = vadd.f32 %v2228, %v2253
        %v2268 = vadd.f32 %v2229, %v2253
        %v2269 = vadd.f32 %v2230, %v2253
        %v2270 = vadd.f32 %v2231, %v2253
        %v2271 = vadd.f32 %v2232, %v2253
        %v2272 = vadd.f32 %v2233, %v2253
        %v2273 = vadd.f32 %v2234, %v2253
        %v2274 = vadd.f32 %v2235, %v2253
        %v2275 = vadd.f32 %v2236, %v2253
        %v2276 = vadd.f32 %v2237, %v2253
        %v2277 = vadd.f32 %v2238, %v2253
        %v2278 = vadd.f32 %v2239, %v2253
        %v2279 = vadd.f32 %v2240, %v2253
        %v2280 = vadd.f32 %v2241, %v2253
        %v2281 = vadd.f32 %v2242, %v2253
        %v2282 = vadd.f32 %v2243, %v2253
        %v2283 = vadd.f32 %v2244, %v2253
        %v2284 = vadd.f32 %v2245, %v2253
        %v2285 = vadd.f32 %v2246, %v2253
        %v2286 = vadd.f32 %v2247, %v2253
        %v2287 = vmax.f32 %v2255, 0.0
        %v2288 = vmax.f32 %v2256, 0.0
        %v2289 = vmax.f32 %v2257, 0.0
        %v2290 = vmax.f32 %v2258, 0.0
        %v2291 = vmax.f32 %v2259, 0.0
        %v2292 = vmax.f32 %v2260, 0.0
        %v2293 = vmax.f32 %v2261, 0.0
        %v2294 = vmax.f32 %v2262, 0.0
        %v2295 = vmax.f32 %v2263, 0.0
        %v2296 = vmax.f32 %v2264, 0.0
        %v2297 = vmax.f32 %v2265, 0.0
        %v2298 = vmax.f32 %v2266, 0.0
        %v2299 = vmax.f32 %v2267, 0.0
        %v2300 = vmax.f32 %v2268, 0.0
        %v2301 = vmax.f32 %v2269, 0.0
        %v2302 = vmax.f32 %v2270, 0.0
        %v2303 = vmax.f32 %v2271, 0.0
        %v2304 = vmax.f32 %v2272, 0.0
        %v2305 = vmax.f32 %v2273, 0.0
        %v2306 = vmax.f32 %v2274, 0.0
        %v2307 = vmax.f32 %v2275, 0.0
        %v2308 = vmax.f32 %v2276, 0.0
        %v2309 = vmax.f32 %v2277, 0.0
        %v2310 = vmax.f32 %v2278, 0.0
        %v2311 = vmax.f32 %v2279, 0.0
        %v2312 = vmax.f32 %v2280, 0.0
        %v2313 = vmax.f32 %v2281, 0.0
        %v2314 = vmax.f32 %v2282, 0.0
        %v2315 = vmax.f32 %v2283, 0.0
        %v2316 = vmax.f32 %v2284, 0.0
        %v2317 = vmax.f32 %v2285, 0.0
        %v2318 = vmax.f32 %v2286, 0.0
        %v2319 = vld [vmem:[%s9] sm:$0xff]
        %v2320 = vld [vmem:[%s9 + $0x8] sm:$0xff]
        %v2321 = vld [vmem:[%s9 + $0x10] sm:$0xff]
        %v2322 = vld [vmem:[%s9 + $0x18] sm:$0xff]
        %v2323 = vld [vmem:[%s10] sm:$0x1]
        %v2325 = vlaneseq
        %v2326 = vshrl.u32 %v2325, 7
        %v2327 = vsub.s32 0, %v2326
        %v2328 = vrot.slane %v2323, %v2327
        %v2331 = vsel %vm1894, %v2287, 0
        %v2334 = vsel %vm1894, %v2288, 0
        %v2337 = vsel %vm1894, %v2289, 0
        %v2340 = vsel %vm1894, %v2290, 0
        %v2343 = vsel %vm1894, %v2291, 0
        %v2346 = vsel %vm1894, %v2292, 0
        %v2349 = vsel %vm1894, %v2293, 0
        %v2352 = vsel %vm1894, %v2294, 0
        %v2355 = vsel %vm1894, %v2295, 0
        %v2358 = vsel %vm1894, %v2296, 0
        %v2361 = vsel %vm1894, %v2297, 0
        %v2364 = vsel %vm1894, %v2298, 0
        %v2367 = vsel %vm1894, %v2299, 0
        %v2370 = vsel %vm1894, %v2300, 0
        %v2373 = vsel %vm1894, %v2301, 0
        %v2376 = vsel %vm1894, %v2302, 0
        %v2379 = vsel %vm1894, %v2303, 0
        %v2382 = vsel %vm1894, %v2304, 0
        %v2385 = vsel %vm1894, %v2305, 0
        %v2388 = vsel %vm1894, %v2306, 0
        %v2391 = vsel %vm1894, %v2307, 0
        %v2394 = vsel %vm1894, %v2308, 0
        %v2397 = vsel %vm1894, %v2309, 0
        %v2400 = vsel %vm1894, %v2310, 0
        %v2403 = vsel %vm1894, %v2311, 0
        %v2406 = vsel %vm1894, %v2312, 0
        %v2409 = vsel %vm1894, %v2313, 0
        %v2412 = vsel %vm1894, %v2314, 0
        %v2415 = vsel %vm1894, %v2315, 0
        %v2418 = vsel %vm1894, %v2316, 0
        %v2421 = vsel %vm1894, %v2317, 0
        %v2424 = vsel %vm1894, %v2318, 0
        %2426 = vmatprep.subr.mxu0 0.0
        %2427 = vmatpush1.msra.mxu0 %v2319
        %2428 = vmatprep.subr.mxu0 0.0
        %2429 = vmatpush1.msra.mxu0 %v2320
        %2430 = vmatprep.subr.mxu0 0.0
        %2431 = vmatpush1.msra.mxu0 %v2321
        %2432 = vmatprep.subr.mxu0 0.0
        %2433 = vmatpush1.msra.mxu0 %v2322
        %2434 = vmatprep.subr.mxu0 0.0
        %2435 = vmatpush1.msra.mxu0 0.0
        %2436 = vmatprep.subr.mxu0 0.0
        %2437 = vmatpush1.msra.mxu0 0.0
        %2438 = vmatprep.subr.mxu0 0.0
        %2439 = vmatpush1.msra.mxu0 0.0
        %2440 = vmatprep.subr.mxu0 0.0
        %2441 = vmatpush1.msra.mxu0 0.0
        %2442 = vmatprep.subr.mxu0 0.0
        %2443 = vmatpush1.msra.mxu0 0.0
        %2444 = vmatprep.subr.mxu0 0.0
        %2445 = vmatpush1.msra.mxu0 0.0
        %2446 = vmatprep.subr.mxu0 0.0
        %2447 = vmatpush1.msra.mxu0 0.0
        %2448 = vmatprep.subr.mxu0 0.0
        %2449 = vmatpush1.msra.mxu0 0.0
        %2450 = vmatprep.subr.mxu0 0.0
        %2451 = vmatpush1.msra.mxu0 0.0
        %2452 = vmatprep.subr.mxu0 0.0
        %2453 = vmatpush1.msra.mxu0 0.0
        %2454 = vmatprep.subr.mxu0 0.0
        %2455 = vmatpush1.msra.mxu0 0.0
        %2456 = vmatprep.subr.mxu0 0.0
        %2457 = vmatpush1.msra.mxu0 0.0
        %2458 = vmatprep.subr.mxu0 0.0
        %2459 = vmatpush1.msra.mxu0 0.0
        %2460 = vmatprep.subr.mxu0 0.0
        %2461 = vmatpush1.msra.mxu0 0.0
        %2462 = vmatprep.subr.mxu0 0.0
        %2463 = vmatpush1.msra.mxu0 0.0
        %2464 = vmatprep.subr.mxu0 0.0
        %2465 = vmatpush1.msra.mxu0 0.0
        %2466 = vmatprep.subr.mxu0 0.0
        %2467 = vmatpush1.msra.mxu0 0.0
        %2468 = vmatprep.subr.mxu0 0.0
        %2469 = vmatpush1.msra.mxu0 0.0
        %2470 = vmatprep.subr.mxu0 0.0
        %2471 = vmatpush1.msra.mxu0 0.0
        %2472 = vmatprep.subr.mxu0 0.0
        %2473 = vmatpush1.msra.mxu0 0.0
        %2474 = vmatprep.subr.mxu0 0.0
        %2475 = vmatpush1.msra.mxu0 0.0
        %2476 = vmatprep.subr.mxu0 0.0
        %2477 = vmatpush1.msra.mxu0 0.0
        %2478 = vmatprep.subr.mxu0 0.0
        %2479 = vmatpush1.msra.mxu0 0.0
        %2480 = vmatprep.subr.mxu0 0.0
        %2481 = vmatpush1.msra.mxu0 0.0
        %2482 = vmatprep.subr.mxu0 0.0
        %2483 = vmatpush1.msra.mxu0 0.0
        %2484 = vmatprep.subr.mxu0 0.0
        %2485 = vmatpush1.msra.mxu0 0.0
        %2486 = vmatprep.subr.mxu0 0.0
        %2487 = vmatpush1.msra.mxu0 0.0
        %2488 = vmatprep.subr.mxu0 0.0
        %2489 = vmatpush1.msra.mxu0 0.0
        %2490 = vmatprep.mubr.f32.mxu0 0.0
        %2491 = vmatmul.mubr.f32.gmra.mrb[0].mxu0 %v2331
        %v2492 = vpop.f32.mrb[0].mxu0
        %v2493 = vadd.f32 %v2328, %v2492
        %v2494 = vpop.f32.mrb[0].mxu0
        %2495 = vmatprep.mubr.f32.mxu0 0.0
        %2496 = vmatmul.mubr.f32.gmra.mrb[0].mxu0 %v2334
        %v2497 = vpop.f32.mrb[0].mxu0
        %v2498 = vadd.f32 %v2328, %v2497
        %v2499 = vpop.f32.mrb[0].mxu0
        %2500 = vmatprep.mubr.f32.mxu0 0.0
        %2501 = vmatmul.mubr.f32.gmra.mrb[0].mxu0 %v2337
        %v2502 = vpop.f32.mrb[0].mxu0
        %v2503 = vadd.f32 %v2328, %v2502
        %v2504 = vpop.f32.mrb[0].mxu0
        %2505 = vmatprep.mubr.f32.mxu0 0.0
        %2506 = vmatmul.mubr.f32.gmra.mrb[0].mxu0 %v2340
        %v2507 = vpop.f32.mrb[0].mxu0
        %v2508 = vadd.f32 %v2328, %v2507
        %v2509 = vpop.f32.mrb[0].mxu0
        %2510 = vmatprep.mubr.f32.mxu0 0.0
        %2511 = vmatmul.mubr.f32.gmra.mrb[0].mxu0 %v2343
        %v2512 = vpop.f32.mrb[0].mxu0
        %v2513 = vadd.f32 %v2328, %v2512
        %v2514 = vpop.f32.mrb[0].mxu0
        %2515 = vmatprep.mubr.f32.mxu0 0.0
        %2516 = vmatmul.mubr.f32.gmra.mrb[0].mxu0 %v2346
        %v2517 = vpop.f32.mrb[0].mxu0
        %v2518 = vadd.f32 %v2328, %v2517
        %v2519 = vpop.f32.mrb[0].mxu0
        %2520 = vmatprep.mubr.f32.mxu0 0.0
        %2521 = vmatmul.mubr.f32.gmra.mrb[0].mxu0 %v2349
        %v2522 = vpop.f32.mrb[0].mxu0
        %v2523 = vadd.f32 %v2328, %v2522
        %v2524 = vpop.f32.mrb[0].mxu0
        %2525 = vmatprep.mubr.f32.mxu0 0.0
        %2526 = vmatmul.mubr.f32.gmra.mrb[0].mxu0 %v2352
        %v2527 = vpop.f32.mrb[0].mxu0
        %v2528 = vadd.f32 %v2328, %v2527
        %v2529 = vpop.f32.mrb[0].mxu0
        %2530 = vmatprep.mubr.f32.mxu0 0.0
        %2531 = vmatmul.mubr.f32.gmra.mrb[0].mxu0 %v2355
        %v2532 = vpop.f32.mrb[0].mxu0
        %v2533 = vadd.f32 %v2328, %v2532
        %v2534 = vpop.f32.mrb[0].mxu0
        %2535 = vmatprep.mubr.f32.mxu0 0.0
        %2536 = vmatmul.mubr.f32.gmra.mrb[0].mxu0 %v2358
        %v2537 = vpop.f32.mrb[0].mxu0
        %v2538 = vadd.f32 %v2328, %v2537
        %v2539 = vpop.f32.mrb[0].mxu0
        %2540 = vmatprep.mubr.f32.mxu0 0.0
        %2541 = vmatmul.mubr.f32.gmra.mrb[0].mxu0 %v2361
        %v2542 = vpop.f32.mrb[0].mxu0
        %v2543 = vadd.f32 %v2328, %v2542
        %v2544 = vpop.f32.mrb[0].mxu0
        %2545 = vmatprep.mubr.f32.mxu0 0.0
        %2546 = vmatmul.mubr.f32.gmra.mrb[0].mxu0 %v2364
        %v2547 = vpop.f32.mrb[0].mxu0
        %v2548 = vadd.f32 %v2328, %v2547
        %v2549 = vpop.f32.mrb[0].mxu0
        %2550 = vmatprep.mubr.f32.mxu0 0.0
        %2551 = vmatmul.mubr.f32.gmra.mrb[0].mxu0 %v2367
        %v2552 = vpop.f32.mrb[0].mxu0
        %v2553 = vadd.f32 %v2328, %v2552
        %v2554 = vpop.f32.mrb[0].mxu0
        %2555 = vmatprep.mubr.f32.mxu0 0.0
        %2556 = vmatmul.mubr.f32.gmra.mrb[0].mxu0 %v2370
        %v2557 = vpop.f32.mrb[0].mxu0
        %v2558 = vadd.f32 %v2328, %v2557
        %v2559 = vpop.f32.mrb[0].mxu0
        %2560 = vmatprep.mubr.f32.mxu0 0.0
        %2561 = vmatmul.mubr.f32.gmra.mrb[0].mxu0 %v2373
        %v2562 = vpop.f32.mrb[0].mxu0
        %v2563 = vadd.f32 %v2328, %v2562
        %v2564 = vpop.f32.mrb[0].mxu0
        %2565 = vmatprep.mubr.f32.mxu0 0.0
        %2566 = vmatmul.mubr.f32.gmra.mrb[0].mxu0 %v2376
        %v2567 = vpop.f32.mrb[0].mxu0
        %v2568 = vadd.f32 %v2328, %v2567
        %v2569 = vpop.f32.mrb[0].mxu0
        %2570 = vmatprep.mubr.f32.mxu0 0.0
        %2571 = vmatmul.mubr.f32.gmra.mrb[0].mxu0 %v2379
        %v2572 = vpop.f32.mrb[0].mxu0
        %v2573 = vadd.f32 %v2328, %v2572
        %v2574 = vpop.f32.mrb[0].mxu0
        %2575 = vmatprep.mubr.f32.mxu0 0.0
        %2576 = vmatmul.mubr.f32.gmra.mrb[0].mxu0 %v2382
        %v2577 = vpop.f32.mrb[0].mxu0
        %v2578 = vadd.f32 %v2328, %v2577
        %v2579 = vpop.f32.mrb[0].mxu0
        %2580 = vmatprep.mubr.f32.mxu0 0.0
        %2581 = vmatmul.mubr.f32.gmra.mrb[0].mxu0 %v2385
        %v2582 = vpop.f32.mrb[0].mxu0
        %v2583 = vadd.f32 %v2328, %v2582
        %v2584 = vpop.f32.mrb[0].mxu0
        %2585 = vmatprep.mubr.f32.mxu0 0.0
        %2586 = vmatmul.mubr.f32.gmra.mrb[0].mxu0 %v2388
        %v2587 = vpop.f32.mrb[0].mxu0
        %v2588 = vadd.f32 %v2328, %v2587
        %v2589 = vpop.f32.mrb[0].mxu0
        %2590 = vmatprep.mubr.f32.mxu0 0.0
        %2591 = vmatmul.mubr.f32.gmra.mrb[0].mxu0 %v2391
        %v2592 = vpop.f32.mrb[0].mxu0
        %v2593 = vadd.f32 %v2328, %v2592
        %v2594 = vpop.f32.mrb[0].mxu0
        %2595 = vmatprep.mubr.f32.mxu0 0.0
        %2596 = vmatmul.mubr.f32.gmra.mrb[0].mxu0 %v2394
        %v2597 = vpop.f32.mrb[0].mxu0
        %v2598 = vadd.f32 %v2328, %v2597
        %v2599 = vpop.f32.mrb[0].mxu0
        %2600 = vmatprep.mubr.f32.mxu0 0.0
        %2601 = vmatmul.mubr.f32.gmra.mrb[0].mxu0 %v2397
        %v2602 = vpop.f32.mrb[0].mxu0
        %v2603 = vadd.f32 %v2328, %v2602
        %v2604 = vpop.f32.mrb[0].mxu0
        %2605 = vmatprep.mubr.f32.mxu0 0.0
        %2606 = vmatmul.mubr.f32.gmra.mrb[0].mxu0 %v2400
        %v2607 = vpop.f32.mrb[0].mxu0
        %v2608 = vadd.f32 %v2328, %v2607
        %v2609 = vpop.f32.mrb[0].mxu0
        %2610 = vmatprep.mubr.f32.mxu0 0.0
        %2611 = vmatmul.mubr.f32.gmra.mrb[0].mxu0 %v2403
        %v2612 = vpop.f32.mrb[0].mxu0
        %v2613 = vadd.f32 %v2328, %v2612
        %v2614 = vpop.f32.mrb[0].mxu0
        %2615 = vmatprep.mubr.f32.mxu0 0.0
        %2616 = vmatmul.mubr.f32.gmra.mrb[0].mxu0 %v2406
        %v2617 = vpop.f32.mrb[0].mxu0
        %v2618 = vadd.f32 %v2328, %v2617
        %v2619 = vpop.f32.mrb[0].mxu0
        %2620 = vmatprep.mubr.f32.mxu0 0.0
        %2621 = vmatmul.mubr.f32.gmra.mrb[0].mxu0 %v2409
        %v2622 = vpop.f32.mrb[0].mxu0
        %v2623 = vadd.f32 %v2328, %v2622
        %v2624 = vpop.f32.mrb[0].mxu0
        %2625 = vmatprep.mubr.f32.mxu0 0.0
        %2626 = vmatmul.mubr.f32.gmra.mrb[0].mxu0 %v2412
        %v2627 = vpop.f32.mrb[0].mxu0
        %v2628 = vadd.f32 %v2328, %v2627
        %v2629 = vpop.f32.mrb[0].mxu0
        %2630 = vmatprep.mubr.f32.mxu0 0.0
        %2631 = vmatmul.mubr.f32.gmra.mrb[0].mxu0 %v2415
        %v2632 = vpop.f32.mrb[0].mxu0
        %v2633 = vadd.f32 %v2328, %v2632
        %v2634 = vpop.f32.mrb[0].mxu0
        %2635 = vmatprep.mubr.f32.mxu0 0.0
        %2636 = vmatmul.mubr.f32.gmra.mrb[0].mxu0 %v2418
        %v2637 = vpop.f32.mrb[0].mxu0
        %v2638 = vadd.f32 %v2328, %v2637
        %v2639 = vpop.f32.mrb[0].mxu0
        %2640 = vmatprep.mubr.f32.mxu0 0.0
        %2641 = vmatmul.mubr.f32.gmra.mrb[0].mxu0 %v2421
        %v2642 = vpop.f32.mrb[0].mxu0
        %v2643 = vadd.f32 %v2328, %v2642
        %v2644 = vpop.f32.mrb[0].mxu0
        %2645 = vmatprep.mubr.f32.mxu0 0.0
        %2646 = vmatmul.mubr.f32.gmra.mrb[0].mxu0 %v2424
        %v2647 = vpop.f32.mrb[0].mxu0
        %v2648 = vadd.f32 %v2328, %v2647
        %v2649 = vpop.f32.mrb[0].mxu0
        %2650 = vdwg.mxu0
        %v2651 = vmax.f32 %v2493, 0.0
        %v2652 = vmax.f32 %v2498, 0.0
        %v2653 = vmax.f32 %v2503, 0.0
        %v2654 = vmax.f32 %v2508, 0.0
        %v2655 = vmax.f32 %v2513, 0.0
        %v2656 = vmax.f32 %v2518, 0.0
        %v2657 = vmax.f32 %v2523, 0.0
        %v2658 = vmax.f32 %v2528, 0.0
        %v2659 = vmax.f32 %v2533, 0.0
        %v2660 = vmax.f32 %v2538, 0.0
        %v2661 = vmax.f32 %v2543, 0.0
        %v2662 = vmax.f32 %v2548, 0.0
        %v2663 = vmax.f32 %v2553, 0.0
        %v2664 = vmax.f32 %v2558, 0.0
        %v2665 = vmax.f32 %v2563, 0.0
        %v2666 = vmax.f32 %v2568, 0.0
        %v2667 = vmax.f32 %v2573, 0.0
        %v2668 = vmax.f32 %v2578, 0.0
        %v2669 = vmax.f32 %v2583, 0.0
        %v2670 = vmax.f32 %v2588, 0.0
        %v2671 = vmax.f32 %v2593, 0.0
        %v2672 = vmax.f32 %v2598, 0.0
        %v2673 = vmax.f32 %v2603, 0.0
        %v2674 = vmax.f32 %v2608, 0.0
        %v2675 = vmax.f32 %v2613, 0.0
        %v2676 = vmax.f32 %v2618, 0.0
        %v2677 = vmax.f32 %v2623, 0.0
        %v2678 = vmax.f32 %v2628, 0.0
        %v2679 = vmax.f32 %v2633, 0.0
        %v2680 = vmax.f32 %v2638, 0.0
        %v2681 = vmax.f32 %v2643, 0.0
        %v2682 = vmax.f32 %v2648, 0.0
        %v2683 = vld [vmem:[%s11] sm:$0xff]
        %v2684 = vld [vmem:[%s11 + $0x8] sm:$0xff]
        %v2685 = vld [vmem:[%s11 + $0x10] sm:$0xff]
        %v2686 = vld [vmem:[%s11 + $0x18] sm:$0xff]
        %v2687 = vld [vmem:[%s12] sm:$0x1]
        %v2689 = vlaneseq
        %v2690 = vshrl.u32 %v2689, 7
        %v2691 = vsub.s32 0, %v2690
        %v2692 = vrot.slane %v2687, %v2691
        %v2695 = vsel %vm1894, %v2651, 0
        %v2698 = vsel %vm1894, %v2652, 0
        %v2701 = vsel %vm1894, %v2653, 0
        %v2704 = vsel %vm1894, %v2654, 0
        %v2707 = vsel %vm1894, %v2655, 0
        %v2710 = vsel %vm1894, %v2656, 0
        %v2713 = vsel %vm1894, %v2657, 0
        %v2716 = vsel %vm1894, %v2658, 0
        %v2719 = vsel %vm1894, %v2659, 0
        %v2722 = vsel %vm1894, %v2660, 0
        %v2725 = vsel %vm1894, %v2661, 0
        %v2728 = vsel %vm1894, %v2662, 0
        %v2731 = vsel %vm1894, %v2663, 0
        %v2734 = vsel %vm1894, %v2664, 0
        %v2737 = vsel %vm1894, %v2665, 0
        %v2740 = vsel %vm1894, %v2666, 0
        %v2743 = vsel %vm1894, %v2667, 0
        %v2746 = vsel %vm1894, %v2668, 0
        %v2749 = vsel %vm1894, %v2669, 0
        %v2752 = vsel %vm1894, %v2670, 0
        %v2755 = vsel %vm1894, %v2671, 0
        %v2758 = vsel %vm1894, %v2672, 0
        %v2761 = vsel %vm1894, %v2673, 0
        %v2764 = vsel %vm1894, %v2674, 0
        %v2767 = vsel %vm1894, %v2675, 0
        %v2770 = vsel %vm1894, %v2676, 0
        %v2773 = vsel %vm1894, %v2677, 0
        %v2776 = vsel %vm1894, %v2678, 0
        %v2779 = vsel %vm1894, %v2679, 0
        %v2782 = vsel %vm1894, %v2680, 0
        %v2785 = vsel %vm1894, %v2681, 0
        %v2788 = vsel %vm1894, %v2682, 0
        %2790 = vmatprep.subr.mxu0 0.0
        %2791 = vmatpush1.msra.mxu0 %v2683
        %2792 = vmatprep.subr.mxu0 0.0
        %2793 = vmatpush1.msra.mxu0 %v2684
        %2794 = vmatprep.subr.mxu0 0.0
        %2795 = vmatpush1.msra.mxu0 %v2685
        %2796 = vmatprep.subr.mxu0 0.0
        %2797 = vmatpush1.msra.mxu0 %v2686
        %2798 = vmatprep.subr.mxu0 0.0
        %2799 = vmatpush1.msra.mxu0 0.0
        %2800 = vmatprep.subr.mxu0 0.0
        %2801 = vmatpush1.msra.mxu0 0.0
        %2802 = vmatprep.subr.mxu0 0.0
        %2803 = vmatpush1.msra.mxu0 0.0
        %2804 = vmatprep.subr.mxu0 0.0
        %2805 = vmatpush1.msra.mxu0 0.0
        %2806 = vmatprep.subr.mxu0 0.0
        %2807 = vmatpush1.msra.mxu0 0.0
        %2808 = vmatprep.subr.mxu0 0.0
        %2809 = vmatpush1.msra.mxu0 0.0
        %2810 = vmatprep.subr.mxu0 0.0
        %2811 = vmatpush1.msra.mxu0 0.0
        %2812 = vmatprep.subr.mxu0 0.0
        %2813 = vmatpush1.msra.mxu0 0.0
        %2814 = vmatprep.subr.mxu0 0.0
        %2815 = vmatpush1.msra.mxu0 0.0
        %2816 = vmatprep.subr.mxu0 0.0
        %2817 = vmatpush1.msra.mxu0 0.0
        %2818 = vmatprep.subr.mxu0 0.0
        %2819 = vmatpush1.msra.mxu0 0.0
        %2820 = vmatprep.subr.mxu0 0.0
        %2821 = vmatpush1.msra.mxu0 0.0
        %2822 = vmatprep.subr.mxu0 0.0
        %2823 = vmatpush1.msra.mxu0 0.0
        %2824 = vmatprep.subr.mxu0 0.0
        %2825 = vmatpush1.msra.mxu0 0.0
        %2826 = vmatprep.subr.mxu0 0.0
        %2827 = vmatpush1.msra.mxu0 0.0
        %2828 = vmatprep.subr.mxu0 0.0
        %2829 = vmatpush1.msra.mxu0 0.0
        %2830 = vmatprep.subr.mxu0 0.0
        %2831 = vmatpush1.msra.mxu0 0.0
        %2832 = vmatprep.subr.mxu0 0.0
        %2833 = vmatpush1.msra.mxu0 0.0
        %2834 = vmatprep.subr.mxu0 0.0
        %2835 = vmatpush1.msra.mxu0 0.0
        %2836 = vmatprep.subr.mxu0 0.0
        %2837 = vmatpush1.msra.mxu0 0.0
        %2838 = vmatprep.subr.mxu0 0.0
        %2839 = vmatpush1.msra.mxu0 0.0
        %2840 = vmatprep.subr.mxu0 0.0
        %2841 = vmatpush1.msra.mxu0 0.0
        %2842 = vmatprep.subr.mxu0 0.0
        %2843 = vmatpush1.msra.mxu0 0.0
        %2844 = vmatprep.subr.mxu0 0.0
        %2845 = vmatpush1.msra.mxu0 0.0
        %2846 = vmatprep.subr.mxu0 0.0
        %2847 = vmatpush1.msra.mxu0 0.0
        %2848 = vmatprep.subr.mxu0 0.0
        %2849 = vmatpush1.msra.mxu0 0.0
        %2850 = vmatprep.subr.mxu0 0.0
        %2851 = vmatpush1.msra.mxu0 0.0
        %2852 = vmatprep.subr.mxu0 0.0
        %2853 = vmatpush1.msra.mxu0 0.0
        %2854 = vmatprep.mubr.f32.mxu0 0.0
        %2855 = vmatmul.mubr.f32.gmra.mrb[0].mxu0 %v2695
        %v2856 = vpop.f32.mrb[0].mxu0
        %v2857 = vadd.f32 %v2692, %v2856
        %v2858 = vpop.f32.mrb[0].mxu0
        %2859 = vmatprep.mubr.f32.mxu0 0.0
        %2860 = vmatmul.mubr.f32.gmra.mrb[0].mxu0 %v2698
        %v2861 = vpop.f32.mrb[0].mxu0
        %v2862 = vadd.f32 %v2692, %v2861
        %v2863 = vpop.f32.mrb[0].mxu0
        %2864 = vmatprep.mubr.f32.mxu0 0.0
        %2865 = vmatmul.mubr.f32.gmra.mrb[0].mxu0 %v2701
        %v2866 = vpop.f32.mrb[0].mxu0
        %v2867 = vadd.f32 %v2692, %v2866
        %v2868 = vpop.f32.mrb[0].mxu0
        %2869 = vmatprep.mubr.f32.mxu0 0.0
        %2870 = vmatmul.mubr.f32.gmra.mrb[0].mxu0 %v2704
        %v2871 = vpop.f32.mrb[0].mxu0
        %v2872 = vadd.f32 %v2692, %v2871
        %v2873 = vpop.f32.mrb[0].mxu0
        %2874 = vmatprep.mubr.f32.mxu0 0.0
        %2875 = vmatmul.mubr.f32.gmra.mrb[0].mxu0 %v2707
        %v2876 = vpop.f32.mrb[0].mxu0
        %v2877 = vadd.f32 %v2692, %v2876
        %v2878 = vpop.f32.mrb[0].mxu0
        %2879 = vmatprep.mubr.f32.mxu0 0.0
        %2880 = vmatmul.mubr.f32.gmra.mrb[0].mxu0 %v2710
        %v2881 = vpop.f32.mrb[0].mxu0
        %v2882 = vadd.f32 %v2692, %v2881
        %v2883 = vpop.f32.mrb[0].mxu0
        %2884 = vmatprep.mubr.f32.mxu0 0.0
        %2885 = vmatmul.mubr.f32.gmra.mrb[0].mxu0 %v2713
        %v2886 = vpop.f32.mrb[0].mxu0
        %v2887 = vadd.f32 %v2692, %v2886
        %v2888 = vpop.f32.mrb[0].mxu0
        %2889 = vmatprep.mubr.f32.mxu0 0.0
        %2890 = vmatmul.mubr.f32.gmra.mrb[0].mxu0 %v2716
        %v2891 = vpop.f32.mrb[0].mxu0
        %v2892 = vadd.f32 %v2692, %v2891
        %v2893 = vpop.f32.mrb[0].mxu0
        %2894 = vmatprep.mubr.f32.mxu0 0.0
        %2895 = vmatmul.mubr.f32.gmra.mrb[0].mxu0 %v2719
        %v2896 = vpop.f32.mrb[0].mxu0
        %v2897 = vadd.f32 %v2692, %v2896
        %v2898 = vpop.f32.mrb[0].mxu0
        %2899 = vmatprep.mubr.f32.mxu0 0.0
        %2900 = vmatmul.mubr.f32.gmra.mrb[0].mxu0 %v2722
        %v2901 = vpop.f32.mrb[0].mxu0
        %v2902 = vadd.f32 %v2692, %v2901
        %v2903 = vpop.f32.mrb[0].mxu0
        %2904 = vmatprep.mubr.f32.mxu0 0.0
        %2905 = vmatmul.mubr.f32.gmra.mrb[0].mxu0 %v2725
        %v2906 = vpop.f32.mrb[0].mxu0
        %v2907 = vadd.f32 %v2692, %v2906
        %v2908 = vpop.f32.mrb[0].mxu0
        %2909 = vmatprep.mubr.f32.mxu0 0.0
        %2910 = vmatmul.mubr.f32.gmra.mrb[0].mxu0 %v2728
        %v2911 = vpop.f32.mrb[0].mxu0
        %v2912 = vadd.f32 %v2692, %v2911
        %v2913 = vpop.f32.mrb[0].mxu0
        %2914 = vmatprep.mubr.f32.mxu0 0.0
        %2915 = vmatmul.mubr.f32.gmra.mrb[0].mxu0 %v2731
        %v2916 = vpop.f32.mrb[0].mxu0
        %v2917 = vadd.f32 %v2692, %v2916
        %v2918 = vpop.f32.mrb[0].mxu0
        %2919 = vmatprep.mubr.f32.mxu0 0.0
        %2920 = vmatmul.mubr.f32.gmra.mrb[0].mxu0 %v2734
        %v2921 = vpop.f32.mrb[0].mxu0
        %v2922 = vadd.f32 %v2692, %v2921
        %v2923 = vpop.f32.mrb[0].mxu0
        %2924 = vmatprep.mubr.f32.mxu0 0.0
        %2925 = vmatmul.mubr.f32.gmra.mrb[0].mxu0 %v2737
        %v2926 = vpop.f32.mrb[0].mxu0
        %v2927 = vadd.f32 %v2692, %v2926
        %v2928 = vpop.f32.mrb[0].mxu0
        %2929 = vmatprep.mubr.f32.mxu0 0.0
        %2930 = vmatmul.mubr.f32.gmra.mrb[0].mxu0 %v2740
        %v2931 = vpop.f32.mrb[0].mxu0
        %v2932 = vadd.f32 %v2692, %v2931
        %v2933 = vpop.f32.mrb[0].mxu0
        %2934 = vmatprep.mubr.f32.mxu0 0.0
        %2935 = vmatmul.mubr.f32.gmra.mrb[0].mxu0 %v2743
        %v2936 = vpop.f32.mrb[0].mxu0
        %v2937 = vadd.f32 %v2692, %v2936
        %v2938 = vpop.f32.mrb[0].mxu0
        %2939 = vmatprep.mubr.f32.mxu0 0.0
        %2940 = vmatmul.mubr.f32.gmra.mrb[0].mxu0 %v2746
        %v2941 = vpop.f32.mrb[0].mxu0
        %v2942 = vadd.f32 %v2692, %v2941
        %v2943 = vpop.f32.mrb[0].mxu0
        %2944 = vmatprep.mubr.f32.mxu0 0.0
        %2945 = vmatmul.mubr.f32.gmra.mrb[0].mxu0 %v2749
        %v2946 = vpop.f32.mrb[0].mxu0
        %v2947 = vadd.f32 %v2692, %v2946
        %v2948 = vpop.f32.mrb[0].mxu0
        %2949 = vmatprep.mubr.f32.mxu0 0.0
        %2950 = vmatmul.mubr.f32.gmra.mrb[0].mxu0 %v2752
        %v2951 = vpop.f32.mrb[0].mxu0
        %v2952 = vadd.f32 %v2692, %v2951
        %v2953 = vpop.f32.mrb[0].mxu0
        %2954 = vmatprep.mubr.f32.mxu0 0.0
        %2955 = vmatmul.mubr.f32.gmra.mrb[0].mxu0 %v2755
        %v2956 = vpop.f32.mrb[0].mxu0
        %v2957 = vadd.f32 %v2692, %v2956
        %v2958 = vpop.f32.mrb[0].mxu0
        %2959 = vmatprep.mubr.f32.mxu0 0.0
        %2960 = vmatmul.mubr.f32.gmra.mrb[0].mxu0 %v2758
        %v2961 = vpop.f32.mrb[0].mxu0
        %v2962 = vadd.f32 %v2692, %v2961
        %v2963 = vpop.f32.mrb[0].mxu0
        %2964 = vmatprep.mubr.f32.mxu0 0.0
        %2965 = vmatmul.mubr.f32.gmra.mrb[0].mxu0 %v2761
        %v2966 = vpop.f32.mrb[0].mxu0
        %v2967 = vadd.f32 %v2692, %v2966
        %v2968 = vpop.f32.mrb[0].mxu0
        %2969 = vmatprep.mubr.f32.mxu0 0.0
        %2970 = vmatmul.mubr.f32.gmra.mrb[0].mxu0 %v2764
        %v2971 = vpop.f32.mrb[0].mxu0
        %v2972 = vadd.f32 %v2692, %v2971
        %v2973 = vpop.f32.mrb[0].mxu0
        %2974 = vmatprep.mubr.f32.mxu0 0.0
        %2975 = vmatmul.mubr.f32.gmra.mrb[0].mxu0 %v2767
        %v2976 = vpop.f32.mrb[0].mxu0
        %v2977 = vadd.f32 %v2692, %v2976
        %v2978 = vpop.f32.mrb[0].mxu0
        %2979 = vmatprep.mubr.f32.mxu0 0.0
        %2980 = vmatmul.mubr.f32.gmra.mrb[0].mxu0 %v2770
        %v2981 = vpop.f32.mrb[0].mxu0
        %v2982 = vadd.f32 %v2692, %v2981
        %v2983 = vpop.f32.mrb[0].mxu0
        %2984 = vmatprep.mubr.f32.mxu0 0.0
        %2985 = vmatmul.mubr.f32.gmra.mrb[0].mxu0 %v2773
        %v2986 = vpop.f32.mrb[0].mxu0
        %v2987 = vadd.f32 %v2692, %v2986
        %v2988 = vpop.f32.mrb[0].mxu0
        %2989 = vmatprep.mubr.f32.mxu0 0.0
        %2990 = vmatmul.mubr.f32.gmra.mrb[0].mxu0 %v2776
        %v2991 = vpop.f32.mrb[0].mxu0
        %v2992 = vadd.f32 %v2692, %v2991
        %v2993 = vpop.f32.mrb[0].mxu0
        %2994 = vmatprep.mubr.f32.mxu0 0.0
        %2995 = vmatmul.mubr.f32.gmra.mrb[0].mxu0 %v2779
        %v2996 = vpop.f32.mrb[0].mxu0
        %v2997 = vadd.f32 %v2692, %v2996
        %v2998 = vpop.f32.mrb[0].mxu0
        %2999 = vmatprep.mubr.f32.mxu0 0.0
        %3000 = vmatmul.mubr.f32.gmra.mrb[0].mxu0 %v2782
        %v3001 = vpop.f32.mrb[0].mxu0
        %v3002 = vadd.f32 %v2692, %v3001
        %v3003 = vpop.f32.mrb[0].mxu0
        %3004 = vmatprep.mubr.f32.mxu0 0.0
        %3005 = vmatmul.mubr.f32.gmra.mrb[0].mxu0 %v2785
        %v3006 = vpop.f32.mrb[0].mxu0
        %v3007 = vadd.f32 %v2692, %v3006
        %v3008 = vpop.f32.mrb[0].mxu0
        %3009 = vmatprep.mubr.f32.mxu0 0.0
        %3010 = vmatmul.mubr.f32.gmra.mrb[0].mxu0 %v2788
        %v3011 = vpop.f32.mrb[0].mxu0
        %v3012 = vadd.f32 %v2692, %v3011
        %v3013 = vpop.f32.mrb[0].mxu0
        %3014 = vdwg.mxu0
        %v3015 = vld [vmem:[%s13] sm:$0x1]
        %v3017 = vlaneseq
        %v3018 = vshrl.u32 %v3017, 7
        %v3019 = vsub.s32 0, %v3018
        %v3020 = vrot.slane %v3015, %v3019
        %v3022 = vadd.f32 %v2857, %v3020
        %v3023 = vadd.f32 %v2862, %v3020
        %v3024 = vadd.f32 %v2867, %v3020
        %v3025 = vadd.f32 %v2872, %v3020
        %v3026 = vadd.f32 %v2877, %v3020
        %v3027 = vadd.f32 %v2882, %v3020
        %v3028 = vadd.f32 %v2887, %v3020
        %v3029 = vadd.f32 %v2892, %v3020
        %v3030 = vadd.f32 %v2897, %v3020
        %v3031 = vadd.f32 %v2902, %v3020
        %v3032 = vadd.f32 %v2907, %v3020
        %v3033 = vadd.f32 %v2912, %v3020
        %v3034 = vadd.f32 %v2917, %v3020
        %v3035 = vadd.f32 %v2922, %v3020
        %v3036 = vadd.f32 %v2927, %v3020
        %v3037 = vadd.f32 %v2932, %v3020
        %v3038 = vadd.f32 %v2937, %v3020
        %v3039 = vadd.f32 %v2942, %v3020
        %v3040 = vadd.f32 %v2947, %v3020
        %v3041 = vadd.f32 %v2952, %v3020
        %v3042 = vadd.f32 %v2957, %v3020
        %v3043 = vadd.f32 %v2962, %v3020
        %v3044 = vadd.f32 %v2967, %v3020
        %v3045 = vadd.f32 %v2972, %v3020
        %v3046 = vadd.f32 %v2977, %v3020
        %v3047 = vadd.f32 %v2982, %v3020
        %v3048 = vadd.f32 %v2987, %v3020
        %v3049 = vadd.f32 %v2992, %v3020
        %v3050 = vadd.f32 %v2997, %v3020
        %v3051 = vadd.f32 %v3002, %v3020
        %v3052 = vadd.f32 %v3007, %v3020
        %v3053 = vadd.f32 %v3012, %v3020
        %vm3054 = vcmask 64512
        %v3055 = vsel %vm3054, %v3022, -inf
        %3056 = vmax.xlane.f32.xlu0 %v3055
        %v3057 = vpop.xlane.xlu0 %3056
        %v3058 = vsel %vm3054, %v3023, -inf
        %3059 = vmax.xlane.f32.xlu0 %v3058
        %v3060 = vpop.xlane.xlu0 %3059
        %v3061 = vsel %vm3054, %v3024, -inf
        %3062 = vmax.xlane.f32.xlu0 %v3061
        %v3063 = vpop.xlane.xlu0 %3062
        %v3064 = vsel %vm3054, %v3025, -inf
        %3065 = vmax.xlane.f32.xlu0 %v3064
        %v3066 = vpop.xlane.xlu0 %3065
        %v3067 = vsel %vm3054, %v3026, -inf
        %3068 = vmax.xlane.f32.xlu0 %v3067
        %v3069 = vpop.xlane.xlu0 %3068
        %v3070 = vsel %vm3054, %v3027, -inf
        %3071 = vmax.xlane.f32.xlu0 %v3070
        %v3072 = vpop.xlane.xlu0 %3071
        %v3073 = vsel %vm3054, %v3028, -inf
        %3074 = vmax.xlane.f32.xlu0 %v3073
        %v3075 = vpop.xlane.xlu0 %3074
        %v3076 = vsel %vm3054, %v3029, -inf
        %3077 = vmax.xlane.f32.xlu0 %v3076
        %v3078 = vpop.xlane.xlu0 %3077
        %v3079 = vsel %vm3054, %v3030, -inf
        %3080 = vmax.xlane.f32.xlu0 %v3079
        %v3081 = vpop.xlane.xlu0 %3080
        %v3082 = vsel %vm3054, %v3031, -inf
        %3083 = vmax.xlane.f32.xlu0 %v3082
        %v3084 = vpop.xlane.xlu0 %3083
        %v3085 = vsel %vm3054, %v3032, -inf
        %3086 = vmax.xlane.f32.xlu0 %v3085
        %v3087 = vpop.xlane.xlu0 %3086
        %v3088 = vsel %vm3054, %v3033, -inf
        %3089 = vmax.xlane.f32.xlu0 %v3088
        %v3090 = vpop.xlane.xlu0 %3089
        %v3091 = vsel %vm3054, %v3034, -inf
        %3092 = vmax.xlane.f32.xlu0 %v3091
        %v3093 = vpop.xlane.xlu0 %3092
        %v3094 = vsel %vm3054, %v3035, -inf
        %3095 = vmax.xlane.f32.xlu0 %v3094
        %v3096 = vpop.xlane.xlu0 %3095
        %v3097 = vsel %vm3054, %v3036, -inf
        %3098 = vmax.xlane.f32.xlu0 %v3097
        %v3099 = vpop.xlane.xlu0 %3098
        %v3100 = vsel %vm3054, %v3037, -inf
        %3101 = vmax.xlane.f32.xlu0 %v3100
        %v3102 = vpop.xlane.xlu0 %3101
        %v3103 = vsel %vm3054, %v3038, -inf
        %3104 = vmax.xlane.f32.xlu0 %v3103
        %v3105 = vpop.xlane.xlu0 %3104
        %v3106 = vsel %vm3054, %v3039, -inf
        %3107 = vmax.xlane.f32.xlu0 %v3106
        %v3108 = vpop.xlane.xlu0 %3107
        %v3109 = vsel %vm3054, %v3040, -inf
        %3110 = vmax.xlane.f32.xlu0 %v3109
        %v3111 = vpop.xlane.xlu0 %3110
        %v3112 = vsel %vm3054, %v3041, -inf
        %3113 = vmax.xlane.f32.xlu0 %v3112
        %v3114 = vpop.xlane.xlu0 %3113
        %v3115 = vsel %vm3054, %v3042, -inf
        %3116 = vmax.xlane.f32.xlu0 %v3115
        %v3117 = vpop.xlane.xlu0 %3116
        %v3118 = vsel %vm3054, %v3043, -inf
        %3119 = vmax.xlane.f32.xlu0 %v3118
        %v3120 = vpop.xlane.xlu0 %3119
        %v3121 = vsel %vm3054, %v3044, -inf
        %3122 = vmax.xlane.f32.xlu0 %v3121
        %v3123 = vpop.xlane.xlu0 %3122
        %v3124 = vsel %vm3054, %v3045, -inf
        %3125 = vmax.xlane.f32.xlu0 %v3124
        %v3126 = vpop.xlane.xlu0 %3125
        %v3127 = vsel %vm3054, %v3046, -inf
        %3128 = vmax.xlane.f32.xlu0 %v3127
        %v3129 = vpop.xlane.xlu0 %3128
        %v3130 = vsel %vm3054, %v3047, -inf
        %3131 = vmax.xlane.f32.xlu0 %v3130
        %v3132 = vpop.xlane.xlu0 %3131
        %v3133 = vsel %vm3054, %v3048, -inf
        %3134 = vmax.xlane.f32.xlu0 %v3133
        %v3135 = vpop.xlane.xlu0 %3134
        %v3136 = vsel %vm3054, %v3049, -inf
        %3137 = vmax.xlane.f32.xlu0 %v3136
        %v3138 = vpop.xlane.xlu0 %3137
        %v3139 = vsel %vm3054, %v3050, -inf
        %3140 = vmax.xlane.f32.xlu0 %v3139
        %v3141 = vpop.xlane.xlu0 %3140
        %v3142 = vsel %vm3054, %v3051, -inf
        %3143 = vmax.xlane.f32.xlu0 %v3142
        %v3144 = vpop.xlane.xlu0 %3143
        %v3145 = vsel %vm3054, %v3052, -inf
        %3146 = vmax.xlane.f32.xlu0 %v3145
        %v3147 = vpop.xlane.xlu0 %3146
        %v3148 = vsel %vm3054, %v3053, -inf
        %3149 = vmax.xlane.f32.xlu0 %v3148
        %v3150 = vpop.xlane.xlu0 %3149
        %v3151 = vsub.f32 %v3022, %v3057
        %v3152 = vsub.f32 %v3023, %v3060
        %v3153 = vsub.f32 %v3024, %v3063
        %v3154 = vsub.f32 %v3025, %v3066
        %v3155 = vsub.f32 %v3026, %v3069
        %v3156 = vsub.f32 %v3027, %v3072
        %v3157 = vsub.f32 %v3028, %v3075
        %v3158 = vsub.f32 %v3029, %v3078
        %v3159 = vsub.f32 %v3030, %v3081
        %v3160 = vsub.f32 %v3031, %v3084
        %v3161 = vsub.f32 %v3032, %v3087
        %v3162 = vsub.f32 %v3033, %v3090
        %v3163 = vsub.f32 %v3034, %v3093
        %v3164 = vsub.f32 %v3035, %v3096
        %v3165 = vsub.f32 %v3036, %v3099
        %v3166 = vsub.f32 %v3037, %v3102
        %v3167 = vsub.f32 %v3038, %v3105
        %v3168 = vsub.f32 %v3039, %v3108
        %v3169 = vsub.f32 %v3040, %v3111
        %v3170 = vsub.f32 %v3041, %v3114
        %v3171 = vsub.f32 %v3042, %v3117
        %v3172 = vsub.f32 %v3043, %v3120
        %v3173 = vsub.f32 %v3044, %v3123
        %v3174 = vsub.f32 %v3045, %v3126
        %v3175 = vsub.f32 %v3046, %v3129
        %v3176 = vsub.f32 %v3047, %v3132
        %v3177 = vsub.f32 %v3048, %v3135
        %v3178 = vsub.f32 %v3049, %v3138
        %v3179 = vsub.f32 %v3050, %v3141
        %v3180 = vsub.f32 %v3051, %v3144
        %v3181 = vsub.f32 %v3052, %v3147
        %v3182 = vsub.f32 %v3053, %v3150
        %v3183 = vmul.f32 %v3151, 1.442695
        %v3184 = vpow.pop %v3183
        %v3185 = vmul.f32 %v3152, 1.442695
        %v3186 = vpow.pop %v3185
        %v3187 = vmul.f32 %v3153, 1.442695
        %v3188 = vpow.pop %v3187
        %v3189 = vmul.f32 %v3154, 1.442695
        %v3190 = vpow.pop %v3189
        %v3191 = vmul.f32 %v3155, 1.442695
        %v3192 = vpow.pop %v3191
        %v3193 = vmul.f32 %v3156, 1.442695
        %v3194 = vpow.pop %v3193
        %v3195 = vmul.f32 %v3157, 1.442695
        %v3196 = vpow.pop %v3195
        %v3197 = vmul.f32 %v3158, 1.442695
        %v3198 = vpow.pop %v3197
        %v3199 = vmul.f32 %v3159, 1.442695
        %v3200 = vpow.pop %v3199
        %v3201 = vmul.f32 %v3160, 1.442695
        %v3202 = vpow.pop %v3201
        %v3203 = vmul.f32 %v3161, 1.442695
        %v3204 = vpow.pop %v3203
        %v3205 = vmul.f32 %v3162, 1.442695
        %v3206 = vpow.pop %v3205
        %v3207 = vmul.f32 %v3163, 1.442695
        %v3208 = vpow.pop %v3207
        %v3209 = vmul.f32 %v3164, 1.442695
        %v3210 = vpow.pop %v3209
        %v3211 = vmul.f32 %v3165, 1.442695
        %v3212 = vpow.pop %v3211
        %v3213 = vmul.f32 %v3166, 1.442695
        %v3214 = vpow.pop %v3213
        %v3215 = vmul.f32 %v3167, 1.442695
        %v3216 = vpow.pop %v3215
        %v3217 = vmul.f32 %v3168, 1.442695
        %v3218 = vpow.pop %v3217
        %v3219 = vmul.f32 %v3169, 1.442695
        %v3220 = vpow.pop %v3219
        %v3221 = vmul.f32 %v3170, 1.442695
        %v3222 = vpow.pop %v3221
        %v3223 = vmul.f32 %v3171, 1.442695
        %v3224 = vpow.pop %v3223
        %v3225 = vmul.f32 %v3172, 1.442695
        %v3226 = vpow.pop %v3225
        %v3227 = vmul.f32 %v3173, 1.442695
        %v3228 = vpow.pop %v3227
        %v3229 = vmul.f32 %v3174, 1.442695
        %v3230 = vpow.pop %v3229
        %v3231 = vmul.f32 %v3175, 1.442695
        %v3232 = vpow.pop %v3231
        %v3233 = vmul.f32 %v3176, 1.442695
        %v3234 = vpow.pop %v3233
        %v3235 = vmul.f32 %v3177, 1.442695
        %v3236 = vpow.pop %v3235
        %v3237 = vmul.f32 %v3178, 1.442695
        %v3238 = vpow.pop %v3237
        %v3239 = vmul.f32 %v3179, 1.442695
        %v3240 = vpow.pop %v3239
        %v3241 = vmul.f32 %v3180, 1.442695
        %v3242 = vpow.pop %v3241
        %v3243 = vmul.f32 %v3181, 1.442695
        %v3244 = vpow.pop %v3243
        %v3245 = vmul.f32 %v3182, 1.442695
        %v3246 = vpow.pop %v3245
        %v3247 = vld [vmem:[%s728] sm:$0xff]
        %v3248 = vld [vmem:[%s728 + $0x8] sm:$0xff]
        %v3249 = vld [vmem:[%s728 + $0x10] sm:$0xff]
        %v3250 = vld [vmem:[%s728 + $0x18] sm:$0xff]
        %v3251 = vld [vmem:[%s728 + $0x20] sm:$0xff]
        %v3252 = vld [vmem:[%s728 + $0x28] sm:$0xff]
        %v3253 = vld [vmem:[%s728 + $0x30] sm:$0xff]
        %v3254 = vld [vmem:[%s728 + $0x38] sm:$0xff]
        %v3255 = vld [vmem:[%s728 + $0x40] sm:$0xff]
        %v3256 = vld [vmem:[%s728 + $0x48] sm:$0xff]
        %v3257 = vld [vmem:[%s728 + $0x50] sm:$0xff]
        %v3258 = vld [vmem:[%s728 + $0x58] sm:$0xff]
        %v3259 = vld [vmem:[%s728 + $0x60] sm:$0xff]
        %v3260 = vld [vmem:[%s728 + $0x68] sm:$0xff]
        %v3261 = vld [vmem:[%s728 + $0x70] sm:$0xff]
        %v3262 = vld [vmem:[%s728 + $0x78] sm:$0xff]
        %v3263 = vld [vmem:[%s728 + $0x80] sm:$0xff]
        %v3264 = vld [vmem:[%s728 + $0x88] sm:$0xff]
        %v3265 = vld [vmem:[%s728 + $0x90] sm:$0xff]
        %v3266 = vld [vmem:[%s728 + $0x98] sm:$0xff]
        %v3267 = vld [vmem:[%s728 + $0xa0] sm:$0xff]
        %v3268 = vld [vmem:[%s728 + $0xa8] sm:$0xff]
        %v3269 = vld [vmem:[%s728 + $0xb0] sm:$0xff]
        %v3270 = vld [vmem:[%s728 + $0xb8] sm:$0xff]
        %v3271 = vld [vmem:[%s728 + $0xc0] sm:$0xff]
        %v3272 = vld [vmem:[%s728 + $0xc8] sm:$0xff]
        %v3273 = vld [vmem:[%s728 + $0xd0] sm:$0xff]
        %v3274 = vld [vmem:[%s728 + $0xd8] sm:$0xff]
        %v3275 = vld [vmem:[%s728 + $0xe0] sm:$0xff]
        %v3276 = vld [vmem:[%s728 + $0xe8] sm:$0xff]
        %v3277 = vld [vmem:[%s728 + $0xf0] sm:$0xff]
        %v3278 = vld [vmem:[%s728 + $0xf8] sm:$0xff]
        %v3279 = vmul.f32 %v3184, %v3247
        %v3280 = vmul.f32 %v3186, %v3248
        %v3281 = vmul.f32 %v3188, %v3249
        %v3282 = vmul.f32 %v3190, %v3250
        %v3283 = vmul.f32 %v3192, %v3251
        %v3284 = vmul.f32 %v3194, %v3252
        %v3285 = vmul.f32 %v3196, %v3253
        %v3286 = vmul.f32 %v3198, %v3254
        %v3287 = vmul.f32 %v3200, %v3255
        %v3288 = vmul.f32 %v3202, %v3256
        %v3289 = vmul.f32 %v3204, %v3257
        %v3290 = vmul.f32 %v3206, %v3258
        %v3291 = vmul.f32 %v3208, %v3259
        %v3292 = vmul.f32 %v3210, %v3260
        %v3293 = vmul.f32 %v3212, %v3261
        %v3294 = vmul.f32 %v3214, %v3262
        %v3295 = vmul.f32 %v3216, %v3263
        %v3296 = vmul.f32 %v3218, %v3264
        %v3297 = vmul.f32 %v3220, %v3265
        %v3298 = vmul.f32 %v3222, %v3266
        %v3299 = vmul.f32 %v3224, %v3267
        %v3300 = vmul.f32 %v3226, %v3268
        %v3301 = vmul.f32 %v3228, %v3269
        %v3302 = vmul.f32 %v3230, %v3270
        %v3303 = vmul.f32 %v3232, %v3271
        %v3304 = vmul.f32 %v3234, %v3272
        %v3305 = vmul.f32 %v3236, %v3273
        %v3306 = vmul.f32 %v3238, %v3274
        %v3307 = vmul.f32 %v3240, %v3275
        %v3308 = vmul.f32 %v3242, %v3276
        %v3309 = vmul.f32 %v3244, %v3277
        %v3310 = vmul.f32 %v3246, %v3278
        %v3311 = vsel %vm3054, %v3279, 0.0
        %3312 = vadd.xlane.f32.xlu0 %v3311
        %v3313 = vpop.xlane.xlu0 %3312
        %v3314 = vsel %vm3054, %v3280, 0.0
        %3315 = vadd.xlane.f32.xlu0 %v3314
        %v3316 = vpop.xlane.xlu0 %3315
        %v3317 = vsel %vm3054, %v3281, 0.0
        %3318 = vadd.xlane.f32.xlu0 %v3317
        %v3319 = vpop.xlane.xlu0 %3318
        %v3320 = vsel %vm3054, %v3282, 0.0
        %3321 = vadd.xlane.f32.xlu0 %v3320
        %v3322 = vpop.xlane.xlu0 %3321
        %v3323 = vsel %vm3054, %v3283, 0.0
        %3324 = vadd.xlane.f32.xlu0 %v3323
        %v3325 = vpop.xlane.xlu0 %3324
        %v3326 = vsel %vm3054, %v3284, 0.0
        %3327 = vadd.xlane.f32.xlu0 %v3326
        %v3328 = vpop.xlane.xlu0 %3327
        %v3329 = vsel %vm3054, %v3285, 0.0
        %3330 = vadd.xlane.f32.xlu0 %v3329
        %v3331 = vpop.xlane.xlu0 %3330
        %v3332 = vsel %vm3054, %v3286, 0.0
        %3333 = vadd.xlane.f32.xlu0 %v3332
        %v3334 = vpop.xlane.xlu0 %3333
        %v3335 = vsel %vm3054, %v3287, 0.0
        %3336 = vadd.xlane.f32.xlu0 %v3335
        %v3337 = vpop.xlane.xlu0 %3336
        %v3338 = vsel %vm3054, %v3288, 0.0
        %3339 = vadd.xlane.f32.xlu0 %v3338
        %v3340 = vpop.xlane.xlu0 %3339
        %v3341 = vsel %vm3054, %v3289, 0.0
        %3342 = vadd.xlane.f32.xlu0 %v3341
        %v3343 = vpop.xlane.xlu0 %3342
        %v3344 = vsel %vm3054, %v3290, 0.0
        %3345 = vadd.xlane.f32.xlu0 %v3344
        %v3346 = vpop.xlane.xlu0 %3345
        %v3347 = vsel %vm3054, %v3291, 0.0
        %3348 = vadd.xlane.f32.xlu0 %v3347
        %v3349 = vpop.xlane.xlu0 %3348
        %v3350 = vsel %vm3054, %v3292, 0.0
        %3351 = vadd.xlane.f32.xlu0 %v3350
        %v3352 = vpop.xlane.xlu0 %3351
        %v3353 = vsel %vm3054, %v3293, 0.0
        %3354 = vadd.xlane.f32.xlu0 %v3353
        %v3355 = vpop.xlane.xlu0 %3354
        %v3356 = vsel %vm3054, %v3294, 0.0
        %3357 = vadd.xlane.f32.xlu0 %v3356
        %v3358 = vpop.xlane.xlu0 %3357
        %v3359 = vsel %vm3054, %v3295, 0.0
        %3360 = vadd.xlane.f32.xlu0 %v3359
        %v3361 = vpop.xlane.xlu0 %3360
        %v3362 = vsel %vm3054, %v3296, 0.0
        %3363 = vadd.xlane.f32.xlu0 %v3362
        %v3364 = vpop.xlane.xlu0 %3363
        %v3365 = vsel %vm3054, %v3297, 0.0
        %3366 = vadd.xlane.f32.xlu0 %v3365
        %v3367 = vpop.xlane.xlu0 %3366
        %v3368 = vsel %vm3054, %v3298, 0.0
        %3369 = vadd.xlane.f32.xlu0 %v3368
        %v3370 = vpop.xlane.xlu0 %3369
        %v3371 = vsel %vm3054, %v3299, 0.0
        %3372 = vadd.xlane.f32.xlu0 %v3371
        %v3373 = vpop.xlane.xlu0 %3372
        %v3374 = vsel %vm3054, %v3300, 0.0
        %3375 = vadd.xlane.f32.xlu0 %v3374
        %v3376 = vpop.xlane.xlu0 %3375
        %v3377 = vsel %vm3054, %v3301, 0.0
        %3378 = vadd.xlane.f32.xlu0 %v3377
        %v3379 = vpop.xlane.xlu0 %3378
        %v3380 = vsel %vm3054, %v3302, 0.0
        %3381 = vadd.xlane.f32.xlu0 %v3380
        %v3382 = vpop.xlane.xlu0 %3381
        %v3383 = vsel %vm3054, %v3303, 0.0
        %3384 = vadd.xlane.f32.xlu0 %v3383
        %v3385 = vpop.xlane.xlu0 %3384
        %v3386 = vsel %vm3054, %v3304, 0.0
        %3387 = vadd.xlane.f32.xlu0 %v3386
        %v3388 = vpop.xlane.xlu0 %3387
        %v3389 = vsel %vm3054, %v3305, 0.0
        %3390 = vadd.xlane.f32.xlu0 %v3389
        %v3391 = vpop.xlane.xlu0 %3390
        %v3392 = vsel %vm3054, %v3306, 0.0
        %3393 = vadd.xlane.f32.xlu0 %v3392
        %v3394 = vpop.xlane.xlu0 %3393
        %v3395 = vsel %vm3054, %v3307, 0.0
        %3396 = vadd.xlane.f32.xlu0 %v3395
        %v3397 = vpop.xlane.xlu0 %3396
        %v3398 = vsel %vm3054, %v3308, 0.0
        %3399 = vadd.xlane.f32.xlu0 %v3398
        %v3400 = vpop.xlane.xlu0 %3399
        %v3401 = vsel %vm3054, %v3309, 0.0
        %3402 = vadd.xlane.f32.xlu0 %v3401
        %v3403 = vpop.xlane.xlu0 %3402
        %v3404 = vsel %vm3054, %v3310, 0.0
        %3405 = vadd.xlane.f32.xlu0 %v3404
        %v3406 = vpop.xlane.xlu0 %3405
        %v3407 = vsel %vm3054, %v3184, 0.0
        %3408 = vadd.xlane.f32.xlu0 %v3407
        %v3409 = vpop.xlane.xlu0 %3408
        %v3410 = vsel %vm3054, %v3186, 0.0
        %3411 = vadd.xlane.f32.xlu0 %v3410
        %v3412 = vpop.xlane.xlu0 %3411
        %v3413 = vsel %vm3054, %v3188, 0.0
        %3414 = vadd.xlane.f32.xlu0 %v3413
        %v3415 = vpop.xlane.xlu0 %3414
        %v3416 = vsel %vm3054, %v3190, 0.0
        %3417 = vadd.xlane.f32.xlu0 %v3416
        %v3418 = vpop.xlane.xlu0 %3417
        %v3419 = vsel %vm3054, %v3192, 0.0
        %3420 = vadd.xlane.f32.xlu0 %v3419
        %v3421 = vpop.xlane.xlu0 %3420
        %v3422 = vsel %vm3054, %v3194, 0.0
        %3423 = vadd.xlane.f32.xlu0 %v3422
        %v3424 = vpop.xlane.xlu0 %3423
        %v3425 = vsel %vm3054, %v3196, 0.0
        %3426 = vadd.xlane.f32.xlu0 %v3425
        %v3427 = vpop.xlane.xlu0 %3426
        %v3428 = vsel %vm3054, %v3198, 0.0
        %3429 = vadd.xlane.f32.xlu0 %v3428
        %v3430 = vpop.xlane.xlu0 %3429
        %v3431 = vsel %vm3054, %v3200, 0.0
        %3432 = vadd.xlane.f32.xlu0 %v3431
        %v3433 = vpop.xlane.xlu0 %3432
        %v3434 = vsel %vm3054, %v3202, 0.0
        %3435 = vadd.xlane.f32.xlu0 %v3434
        %v3436 = vpop.xlane.xlu0 %3435
        %v3437 = vsel %vm3054, %v3204, 0.0
        %3438 = vadd.xlane.f32.xlu0 %v3437
        %v3439 = vpop.xlane.xlu0 %3438
        %v3440 = vsel %vm3054, %v3206, 0.0
        %3441 = vadd.xlane.f32.xlu0 %v3440
        %v3442 = vpop.xlane.xlu0 %3441
        %v3443 = vsel %vm3054, %v3208, 0.0
        %3444 = vadd.xlane.f32.xlu0 %v3443
        %v3445 = vpop.xlane.xlu0 %3444
        %v3446 = vsel %vm3054, %v3210, 0.0
        %3447 = vadd.xlane.f32.xlu0 %v3446
        %v3448 = vpop.xlane.xlu0 %3447
        %v3449 = vsel %vm3054, %v3212, 0.0
        %3450 = vadd.xlane.f32.xlu0 %v3449
        %v3451 = vpop.xlane.xlu0 %3450
        %v3452 = vsel %vm3054, %v3214, 0.0
        %3453 = vadd.xlane.f32.xlu0 %v3452
        %v3454 = vpop.xlane.xlu0 %3453
        %v3455 = vsel %vm3054, %v3216, 0.0
        %3456 = vadd.xlane.f32.xlu0 %v3455
        %v3457 = vpop.xlane.xlu0 %3456
        %v3458 = vsel %vm3054, %v3218, 0.0
        %3459 = vadd.xlane.f32.xlu0 %v3458
        %v3460 = vpop.xlane.xlu0 %3459
        %v3461 = vsel %vm3054, %v3220, 0.0
        %3462 = vadd.xlane.f32.xlu0 %v3461
        %v3463 = vpop.xlane.xlu0 %3462
        %v3464 = vsel %vm3054, %v3222, 0.0
        %3465 = vadd.xlane.f32.xlu0 %v3464
        %v3466 = vpop.xlane.xlu0 %3465
        %v3467 = vsel %vm3054, %v3224, 0.0
        %3468 = vadd.xlane.f32.xlu0 %v3467
        %v3469 = vpop.xlane.xlu0 %3468
        %v3470 = vsel %vm3054, %v3226, 0.0
        %3471 = vadd.xlane.f32.xlu0 %v3470
        %v3472 = vpop.xlane.xlu0 %3471
        %v3473 = vsel %vm3054, %v3228, 0.0
        %3474 = vadd.xlane.f32.xlu0 %v3473
        %v3475 = vpop.xlane.xlu0 %3474
        %v3476 = vsel %vm3054, %v3230, 0.0
        %3477 = vadd.xlane.f32.xlu0 %v3476
        %v3478 = vpop.xlane.xlu0 %3477
        %v3479 = vsel %vm3054, %v3232, 0.0
        %3480 = vadd.xlane.f32.xlu0 %v3479
        %v3481 = vpop.xlane.xlu0 %3480
        %v3482 = vsel %vm3054, %v3234, 0.0
        %3483 = vadd.xlane.f32.xlu0 %v3482
        %v3484 = vpop.xlane.xlu0 %3483
        %v3485 = vsel %vm3054, %v3236, 0.0
        %3486 = vadd.xlane.f32.xlu0 %v3485
        %v3487 = vpop.xlane.xlu0 %3486
        %v3488 = vsel %vm3054, %v3238, 0.0
        %3489 = vadd.xlane.f32.xlu0 %v3488
        %v3490 = vpop.xlane.xlu0 %3489
        %v3491 = vsel %vm3054, %v3240, 0.0
        %3492 = vadd.xlane.f32.xlu0 %v3491
        %v3493 = vpop.xlane.xlu0 %3492
        %v3494 = vsel %vm3054, %v3242, 0.0
        %3495 = vadd.xlane.f32.xlu0 %v3494
        %v3496 = vpop.xlane.xlu0 %3495
        %v3497 = vsel %vm3054, %v3244, 0.0
        %3498 = vadd.xlane.f32.xlu0 %v3497
        %v3499 = vpop.xlane.xlu0 %3498
        %v3500 = vsel %vm3054, %v3246, 0.0
        %3501 = vadd.xlane.f32.xlu0 %v3500
        %v3502 = vpop.xlane.xlu0 %3501
        %v3503 = vmul.f32 %v3409, 1e-08
        %v3504 = vmul.f32 %v3412, 1e-08
        %v3505 = vmul.f32 %v3415, 1e-08
        %v3506 = vmul.f32 %v3418, 1e-08
        %v3507 = vmul.f32 %v3421, 1e-08
        %v3508 = vmul.f32 %v3424, 1e-08
        %v3509 = vmul.f32 %v3427, 1e-08
        %v3510 = vmul.f32 %v3430, 1e-08
        %v3511 = vmul.f32 %v3433, 1e-08
        %v3512 = vmul.f32 %v3436, 1e-08
        %v3513 = vmul.f32 %v3439, 1e-08
        %v3514 = vmul.f32 %v3442, 1e-08
        %v3515 = vmul.f32 %v3445, 1e-08
        %v3516 = vmul.f32 %v3448, 1e-08
        %v3517 = vmul.f32 %v3451, 1e-08
        %v3518 = vmul.f32 %v3454, 1e-08
        %v3519 = vmul.f32 %v3457, 1e-08
        %v3520 = vmul.f32 %v3460, 1e-08
        %v3521 = vmul.f32 %v3463, 1e-08
        %v3522 = vmul.f32 %v3466, 1e-08
        %v3523 = vmul.f32 %v3469, 1e-08
        %v3524 = vmul.f32 %v3472, 1e-08
        %v3525 = vmul.f32 %v3475, 1e-08
        %v3526 = vmul.f32 %v3478, 1e-08
        %v3527 = vmul.f32 %v3481, 1e-08
        %v3528 = vmul.f32 %v3484, 1e-08
        %v3529 = vmul.f32 %v3487, 1e-08
        %v3530 = vmul.f32 %v3490, 1e-08
        %v3531 = vmul.f32 %v3493, 1e-08
        %v3532 = vmul.f32 %v3496, 1e-08
        %v3533 = vmul.f32 %v3499, 1e-08
        %v3534 = vmul.f32 %v3502, 1e-08
        %v3535 = vadd.f32 %v3313, %v3503
        %v3536 = vadd.f32 %v3316, %v3504
        %v3537 = vadd.f32 %v3319, %v3505
        %v3538 = vadd.f32 %v3322, %v3506
        %v3539 = vadd.f32 %v3325, %v3507
        %v3540 = vadd.f32 %v3328, %v3508
        %v3541 = vadd.f32 %v3331, %v3509
        %v3542 = vadd.f32 %v3334, %v3510
        %v3543 = vadd.f32 %v3337, %v3511
        %v3544 = vadd.f32 %v3340, %v3512
        %v3545 = vadd.f32 %v3343, %v3513
        %v3546 = vadd.f32 %v3346, %v3514
        %v3547 = vadd.f32 %v3349, %v3515
        %v3548 = vadd.f32 %v3352, %v3516
        %v3549 = vadd.f32 %v3355, %v3517
        %v3550 = vadd.f32 %v3358, %v3518
        %v3551 = vadd.f32 %v3361, %v3519
        %v3552 = vadd.f32 %v3364, %v3520
        %v3553 = vadd.f32 %v3367, %v3521
        %v3554 = vadd.f32 %v3370, %v3522
        %v3555 = vadd.f32 %v3373, %v3523
        %v3556 = vadd.f32 %v3376, %v3524
        %v3557 = vadd.f32 %v3379, %v3525
        %v3558 = vadd.f32 %v3382, %v3526
        %v3559 = vadd.f32 %v3385, %v3527
        %v3560 = vadd.f32 %v3388, %v3528
        %v3561 = vadd.f32 %v3391, %v3529
        %v3562 = vadd.f32 %v3394, %v3530
        %v3563 = vadd.f32 %v3397, %v3531
        %v3564 = vadd.f32 %v3400, %v3532
        %v3565 = vadd.f32 %v3403, %v3533
        %v3566 = vadd.f32 %v3406, %v3534
        %v3567 = vrcp.pop %v3535
        %v3568 = vrcp.pop %v3536
        %v3569 = vrcp.pop %v3537
        %v3570 = vrcp.pop %v3538
        %v3571 = vrcp.pop %v3539
        %v3572 = vrcp.pop %v3540
        %v3573 = vrcp.pop %v3541
        %v3574 = vrcp.pop %v3542
        %v3575 = vrcp.pop %v3543
        %v3576 = vrcp.pop %v3544
        %v3577 = vrcp.pop %v3545
        %v3578 = vrcp.pop %v3546
        %v3579 = vrcp.pop %v3547
        %v3580 = vrcp.pop %v3548
        %v3581 = vrcp.pop %v3549
        %v3582 = vrcp.pop %v3550
        %v3583 = vrcp.pop %v3551
        %v3584 = vrcp.pop %v3552
        %v3585 = vrcp.pop %v3553
        %v3586 = vrcp.pop %v3554
        %v3587 = vrcp.pop %v3555
        %v3588 = vrcp.pop %v3556
        %v3589 = vrcp.pop %v3557
        %v3590 = vrcp.pop %v3558
        %v3591 = vrcp.pop %v3559
        %v3592 = vrcp.pop %v3560
        %v3593 = vrcp.pop %v3561
        %v3594 = vrcp.pop %v3562
        %v3595 = vrcp.pop %v3563
        %v3596 = vrcp.pop %v3564
        %v3597 = vrcp.pop %v3565
        %v3598 = vrcp.pop %v3566
        %v3599 = vmul.f32 %v3279, %v3567
        %v3600 = vmul.f32 %v3280, %v3568
        %v3601 = vmul.f32 %v3281, %v3569
        %v3602 = vmul.f32 %v3282, %v3570
        %v3603 = vmul.f32 %v3283, %v3571
        %v3604 = vmul.f32 %v3284, %v3572
        %v3605 = vmul.f32 %v3285, %v3573
        %v3606 = vmul.f32 %v3286, %v3574
        %v3607 = vmul.f32 %v3287, %v3575
        %v3608 = vmul.f32 %v3288, %v3576
        %v3609 = vmul.f32 %v3289, %v3577
        %v3610 = vmul.f32 %v3290, %v3578
        %v3611 = vmul.f32 %v3291, %v3579
        %v3612 = vmul.f32 %v3292, %v3580
        %v3613 = vmul.f32 %v3293, %v3581
        %v3614 = vmul.f32 %v3294, %v3582
        %v3615 = vmul.f32 %v3295, %v3583
        %v3616 = vmul.f32 %v3296, %v3584
        %v3617 = vmul.f32 %v3297, %v3585
        %v3618 = vmul.f32 %v3298, %v3586
        %v3619 = vmul.f32 %v3299, %v3587
        %v3620 = vmul.f32 %v3300, %v3588
        %v3621 = vmul.f32 %v3301, %v3589
        %v3622 = vmul.f32 %v3302, %v3590
        %v3623 = vmul.f32 %v3303, %v3591
        %v3624 = vmul.f32 %v3304, %v3592
        %v3625 = vmul.f32 %v3305, %v3593
        %v3626 = vmul.f32 %v3306, %v3594
        %v3627 = vmul.f32 %v3307, %v3595
        %v3628 = vmul.f32 %v3308, %v3596
        %v3629 = vmul.f32 %v3309, %v3597
        %v3630 = vmul.f32 %v3310, %v3598
        %v3631 = vld [vmem:[%s742] sm:$0xff]
        %v3632 = vld [vmem:[%s742 + $0x8] sm:$0xff]
        %v3633 = vld [vmem:[%s742 + $0x10] sm:$0xff]
        %v3634 = vld [vmem:[%s742 + $0x18] sm:$0xff]
        %v3635 = vld [vmem:[%s742 + $0x20] sm:$0xff]
        %v3636 = vld [vmem:[%s742 + $0x28] sm:$0xff]
        %v3637 = vld [vmem:[%s742 + $0x30] sm:$0xff]
        %v3638 = vld [vmem:[%s742 + $0x38] sm:$0xff]
        %v3639 = vld [vmem:[%s742 + $0x40] sm:$0xff]
        %v3640 = vld [vmem:[%s742 + $0x48] sm:$0xff]
        %v3641 = vld [vmem:[%s742 + $0x50] sm:$0xff]
        %v3642 = vld [vmem:[%s742 + $0x58] sm:$0xff]
        %v3643 = vld [vmem:[%s742 + $0x60] sm:$0xff]
        %v3644 = vld [vmem:[%s742 + $0x68] sm:$0xff]
        %v3645 = vld [vmem:[%s742 + $0x70] sm:$0xff]
        %v3646 = vld [vmem:[%s742 + $0x78] sm:$0xff]
        %v3647 = vld [vmem:[%s742 + $0x80] sm:$0xff]
        %v3648 = vld [vmem:[%s742 + $0x88] sm:$0xff]
        %v3649 = vld [vmem:[%s742 + $0x90] sm:$0xff]
        %v3650 = vld [vmem:[%s742 + $0x98] sm:$0xff]
        %v3651 = vld [vmem:[%s742 + $0xa0] sm:$0xff]
        %v3652 = vld [vmem:[%s742 + $0xa8] sm:$0xff]
        %v3653 = vld [vmem:[%s742 + $0xb0] sm:$0xff]
        %v3654 = vld [vmem:[%s742 + $0xb8] sm:$0xff]
        %v3655 = vld [vmem:[%s742 + $0xc0] sm:$0xff]
        %v3656 = vld [vmem:[%s742 + $0xc8] sm:$0xff]
        %v3657 = vld [vmem:[%s742 + $0xd0] sm:$0xff]
        %v3658 = vld [vmem:[%s742 + $0xd8] sm:$0xff]
        %v3659 = vld [vmem:[%s742 + $0xe0] sm:$0xff]
        %v3660 = vld [vmem:[%s742 + $0xe8] sm:$0xff]
        %v3661 = vld [vmem:[%s742 + $0xf0] sm:$0xff]
        %v3662 = vld [vmem:[%s742 + $0xf8] sm:$0xff]
        %3664 = vset.pattern.permute.xlu0 0
        %3665 = vperm.xlu0 %3664, %v3599
        %v3666 = vpop.permute.xlu0 %3665
        %3669 = vset.pattern.permute.xlu0 0
        %3670 = vperm.xlu0 %3669, %v3600
        %v3671 = vpop.permute.xlu0 %3670
        %3674 = vset.pattern.permute.xlu0 0
        %3675 = vperm.xlu0 %3674, %v3601
        %v3676 = vpop.permute.xlu0 %3675
        %3679 = vset.pattern.permute.xlu0 0
        %3680 = vperm.xlu0 %3679, %v3602
        %v3681 = vpop.permute.xlu0 %3680
        %3684 = vset.pattern.permute.xlu0 0
        %3685 = vperm.xlu0 %3684, %v3603
        %v3686 = vpop.permute.xlu0 %3685
        %3689 = vset.pattern.permute.xlu0 0
        %3690 = vperm.xlu0 %3689, %v3604
        %v3691 = vpop.permute.xlu0 %3690
        %3694 = vset.pattern.permute.xlu0 0
        %3695 = vperm.xlu0 %3694, %v3605
        %v3696 = vpop.permute.xlu0 %3695
        %3699 = vset.pattern.permute.xlu0 0
        %3700 = vperm.xlu0 %3699, %v3606
        %v3701 = vpop.permute.xlu0 %3700
        %3704 = vset.pattern.permute.xlu0 0
        %3705 = vperm.xlu0 %3704, %v3607
        %v3706 = vpop.permute.xlu0 %3705
        %3709 = vset.pattern.permute.xlu0 0
        %3710 = vperm.xlu0 %3709, %v3608
        %v3711 = vpop.permute.xlu0 %3710
        %3714 = vset.pattern.permute.xlu0 0
        %3715 = vperm.xlu0 %3714, %v3609
        %v3716 = vpop.permute.xlu0 %3715
        %3719 = vset.pattern.permute.xlu0 0
        %3720 = vperm.xlu0 %3719, %v3610
        %v3721 = vpop.permute.xlu0 %3720
        %3724 = vset.pattern.permute.xlu0 0
        %3725 = vperm.xlu0 %3724, %v3611
        %v3726 = vpop.permute.xlu0 %3725
        %3729 = vset.pattern.permute.xlu0 0
        %3730 = vperm.xlu0 %3729, %v3612
        %v3731 = vpop.permute.xlu0 %3730
        %3734 = vset.pattern.permute.xlu0 0
        %3735 = vperm.xlu0 %3734, %v3613
        %v3736 = vpop.permute.xlu0 %3735
        %3739 = vset.pattern.permute.xlu0 0
        %3740 = vperm.xlu0 %3739, %v3614
        %v3741 = vpop.permute.xlu0 %3740
        %3744 = vset.pattern.permute.xlu0 0
        %3745 = vperm.xlu0 %3744, %v3615
        %v3746 = vpop.permute.xlu0 %3745
        %3749 = vset.pattern.permute.xlu0 0
        %3750 = vperm.xlu0 %3749, %v3616
        %v3751 = vpop.permute.xlu0 %3750
        %3754 = vset.pattern.permute.xlu0 0
        %3755 = vperm.xlu0 %3754, %v3617
        %v3756 = vpop.permute.xlu0 %3755
        %3759 = vset.pattern.permute.xlu0 0
        %3760 = vperm.xlu0 %3759, %v3618
        %v3761 = vpop.permute.xlu0 %3760
        %3764 = vset.pattern.permute.xlu0 0
        %3765 = vperm.xlu0 %3764, %v3619
        %v3766 = vpop.permute.xlu0 %3765
        %3769 = vset.pattern.permute.xlu0 0
        %3770 = vperm.xlu0 %3769, %v3620
        %v3771 = vpop.permute.xlu0 %3770
        %3774 = vset.pattern.permute.xlu0 0
        %3775 = vperm.xlu0 %3774, %v3621
        %v3776 = vpop.permute.xlu0 %3775
        %3779 = vset.pattern.permute.xlu0 0
        %3780 = vperm.xlu0 %3779, %v3622
        %v3781 = vpop.permute.xlu0 %3780
        %3784 = vset.pattern.permute.xlu0 0
        %3785 = vperm.xlu0 %3784, %v3623
        %v3786 = vpop.permute.xlu0 %3785
        %3789 = vset.pattern.permute.xlu0 0
        %3790 = vperm.xlu0 %3789, %v3624
        %v3791 = vpop.permute.xlu0 %3790
        %3794 = vset.pattern.permute.xlu0 0
        %3795 = vperm.xlu0 %3794, %v3625
        %v3796 = vpop.permute.xlu0 %3795
        %3799 = vset.pattern.permute.xlu0 0
        %3800 = vperm.xlu0 %3799, %v3626
        %v3801 = vpop.permute.xlu0 %3800
        %3804 = vset.pattern.permute.xlu0 0
        %3805 = vperm.xlu0 %3804, %v3627
        %v3806 = vpop.permute.xlu0 %3805
        %3809 = vset.pattern.permute.xlu0 0
        %3810 = vperm.xlu0 %3809, %v3628
        %v3811 = vpop.permute.xlu0 %3810
        %3814 = vset.pattern.permute.xlu0 0
        %3815 = vperm.xlu0 %3814, %v3629
        %v3816 = vpop.permute.xlu0 %3815
        %3819 = vset.pattern.permute.xlu0 0
        %3820 = vperm.xlu0 %3819, %v3630
        %v3821 = vpop.permute.xlu0 %3820
        %v3823 = vmul.f32 %v3666, %v3631
        %v3824 = vmul.f32 %v3671, %v3632
        %v3825 = vmul.f32 %v3676, %v3633
        %v3826 = vmul.f32 %v3681, %v3634
        %v3827 = vmul.f32 %v3686, %v3635
        %v3828 = vmul.f32 %v3691, %v3636
        %v3829 = vmul.f32 %v3696, %v3637
        %v3830 = vmul.f32 %v3701, %v3638
        %v3831 = vmul.f32 %v3706, %v3639
        %v3832 = vmul.f32 %v3711, %v3640
        %v3833 = vmul.f32 %v3716, %v3641
        %v3834 = vmul.f32 %v3721, %v3642
        %v3835 = vmul.f32 %v3726, %v3643
        %v3836 = vmul.f32 %v3731, %v3644
        %v3837 = vmul.f32 %v3736, %v3645
        %v3838 = vmul.f32 %v3741, %v3646
        %v3839 = vmul.f32 %v3746, %v3647
        %v3840 = vmul.f32 %v3751, %v3648
        %v3841 = vmul.f32 %v3756, %v3649
        %v3842 = vmul.f32 %v3761, %v3650
        %v3843 = vmul.f32 %v3766, %v3651
        %v3844 = vmul.f32 %v3771, %v3652
        %v3845 = vmul.f32 %v3776, %v3653
        %v3846 = vmul.f32 %v3781, %v3654
        %v3847 = vmul.f32 %v3786, %v3655
        %v3848 = vmul.f32 %v3791, %v3656
        %v3849 = vmul.f32 %v3796, %v3657
        %v3850 = vmul.f32 %v3801, %v3658
        %v3851 = vmul.f32 %v3806, %v3659
        %v3852 = vmul.f32 %v3811, %v3660
        %v3853 = vmul.f32 %v3816, %v3661
        %v3854 = vmul.f32 %v3821, %v3662
        %3855 = vset.pattern.permute.xlu0 1
        %3856 = vperm.xlu0 %3855, %v3599
        %v3857 = vpop.permute.xlu0 %3856
        %3859 = vset.pattern.permute.xlu0 1
        %3860 = vperm.xlu0 %3859, %v3600
        %v3861 = vpop.permute.xlu0 %3860
        %3863 = vset.pattern.permute.xlu0 1
        %3864 = vperm.xlu0 %3863, %v3601
        %v3865 = vpop.permute.xlu0 %3864
        %3867 = vset.pattern.permute.xlu0 1
        %3868 = vperm.xlu0 %3867, %v3602
        %v3869 = vpop.permute.xlu0 %3868
        %3871 = vset.pattern.permute.xlu0 1
        %3872 = vperm.xlu0 %3871, %v3603
        %v3873 = vpop.permute.xlu0 %3872
        %3875 = vset.pattern.permute.xlu0 1
        %3876 = vperm.xlu0 %3875, %v3604
        %v3877 = vpop.permute.xlu0 %3876
        %3879 = vset.pattern.permute.xlu0 1
        %3880 = vperm.xlu0 %3879, %v3605
        %v3881 = vpop.permute.xlu0 %3880
        %3883 = vset.pattern.permute.xlu0 1
        %3884 = vperm.xlu0 %3883, %v3606
        %v3885 = vpop.permute.xlu0 %3884
        %3887 = vset.pattern.permute.xlu0 1
        %3888 = vperm.xlu0 %3887, %v3607
        %v3889 = vpop.permute.xlu0 %3888
        %3891 = vset.pattern.permute.xlu0 1
        %3892 = vperm.xlu0 %3891, %v3608
        %v3893 = vpop.permute.xlu0 %3892
        %3895 = vset.pattern.permute.xlu0 1
        %3896 = vperm.xlu0 %3895, %v3609
        %v3897 = vpop.permute.xlu0 %3896
        %3899 = vset.pattern.permute.xlu0 1
        %3900 = vperm.xlu0 %3899, %v3610
        %v3901 = vpop.permute.xlu0 %3900
        %3903 = vset.pattern.permute.xlu0 1
        %3904 = vperm.xlu0 %3903, %v3611
        %v3905 = vpop.permute.xlu0 %3904
        %3907 = vset.pattern.permute.xlu0 1
        %3908 = vperm.xlu0 %3907, %v3612
        %v3909 = vpop.permute.xlu0 %3908
        %3911 = vset.pattern.permute.xlu0 1
        %3912 = vperm.xlu0 %3911, %v3613
        %v3913 = vpop.permute.xlu0 %3912
        %3915 = vset.pattern.permute.xlu0 1
        %3916 = vperm.xlu0 %3915, %v3614
        %v3917 = vpop.permute.xlu0 %3916
        %3919 = vset.pattern.permute.xlu0 1
        %3920 = vperm.xlu0 %3919, %v3615
        %v3921 = vpop.permute.xlu0 %3920
        %3923 = vset.pattern.permute.xlu0 1
        %3924 = vperm.xlu0 %3923, %v3616
        %v3925 = vpop.permute.xlu0 %3924
        %3927 = vset.pattern.permute.xlu0 1
        %3928 = vperm.xlu0 %3927, %v3617
        %v3929 = vpop.permute.xlu0 %3928
        %3931 = vset.pattern.permute.xlu0 1
        %3932 = vperm.xlu0 %3931, %v3618
        %v3933 = vpop.permute.xlu0 %3932
        %3935 = vset.pattern.permute.xlu0 1
        %3936 = vperm.xlu0 %3935, %v3619
        %v3937 = vpop.permute.xlu0 %3936
        %3939 = vset.pattern.permute.xlu0 1
        %3940 = vperm.xlu0 %3939, %v3620
        %v3941 = vpop.permute.xlu0 %3940
        %3943 = vset.pattern.permute.xlu0 1
        %3944 = vperm.xlu0 %3943, %v3621
        %v3945 = vpop.permute.xlu0 %3944
        %3947 = vset.pattern.permute.xlu0 1
        %3948 = vperm.xlu0 %3947, %v3622
        %v3949 = vpop.permute.xlu0 %3948
        %3951 = vset.pattern.permute.xlu0 1
        %3952 = vperm.xlu0 %3951, %v3623
        %v3953 = vpop.permute.xlu0 %3952
        %3955 = vset.pattern.permute.xlu0 1
        %3956 = vperm.xlu0 %3955, %v3624
        %v3957 = vpop.permute.xlu0 %3956
        %3959 = vset.pattern.permute.xlu0 1
        %3960 = vperm.xlu0 %3959, %v3625
        %v3961 = vpop.permute.xlu0 %3960
        %3963 = vset.pattern.permute.xlu0 1
        %3964 = vperm.xlu0 %3963, %v3626
        %v3965 = vpop.permute.xlu0 %3964
        %3967 = vset.pattern.permute.xlu0 1
        %3968 = vperm.xlu0 %3967, %v3627
        %v3969 = vpop.permute.xlu0 %3968
        %3971 = vset.pattern.permute.xlu0 1
        %3972 = vperm.xlu0 %3971, %v3628
        %v3973 = vpop.permute.xlu0 %3972
        %3975 = vset.pattern.permute.xlu0 1
        %3976 = vperm.xlu0 %3975, %v3629
        %v3977 = vpop.permute.xlu0 %3976
        %3979 = vset.pattern.permute.xlu0 1
        %3980 = vperm.xlu0 %3979, %v3630
        %v3981 = vpop.permute.xlu0 %3980
        %v3983 = vmul.f32 %v3857, %v3631
        %v3984 = vmul.f32 %v3861, %v3632
        %v3985 = vmul.f32 %v3865, %v3633
        %v3986 = vmul.f32 %v3869, %v3634
        %v3987 = vmul.f32 %v3873, %v3635
        %v3988 = vmul.f32 %v3877, %v3636
        %v3989 = vmul.f32 %v3881, %v3637
        %v3990 = vmul.f32 %v3885, %v3638
        %v3991 = vmul.f32 %v3889, %v3639
        %v3992 = vmul.f32 %v3893, %v3640
        %v3993 = vmul.f32 %v3897, %v3641
        %v3994 = vmul.f32 %v3901, %v3642
        %v3995 = vmul.f32 %v3905, %v3643
        %v3996 = vmul.f32 %v3909, %v3644
        %v3997 = vmul.f32 %v3913, %v3645
        %v3998 = vmul.f32 %v3917, %v3646
        %v3999 = vmul.f32 %v3921, %v3647
        %v4000 = vmul.f32 %v3925, %v3648
        %v4001 = vmul.f32 %v3929, %v3649
        %v4002 = vmul.f32 %v3933, %v3650
        %v4003 = vmul.f32 %v3937, %v3651
        %v4004 = vmul.f32 %v3941, %v3652
        %v4005 = vmul.f32 %v3945, %v3653
        %v4006 = vmul.f32 %v3949, %v3654
        %v4007 = vmul.f32 %v3953, %v3655
        %v4008 = vmul.f32 %v3957, %v3656
        %v4009 = vmul.f32 %v3961, %v3657
        %v4010 = vmul.f32 %v3965, %v3658
        %v4011 = vmul.f32 %v3969, %v3659
        %v4012 = vmul.f32 %v3973, %v3660
        %v4013 = vmul.f32 %v3977, %v3661
        %v4014 = vmul.f32 %v3981, %v3662
        %4047 = vrot.lane.b32.xlu0 %v3983, 125
        %v4048 = vpop.permute.xlu0 %4047
        %4049 = vrot.lane.b32.xlu0 %v3984, 125
        %v4050 = vpop.permute.xlu0 %4049
        %4051 = vrot.lane.b32.xlu0 %v3985, 125
        %v4052 = vpop.permute.xlu0 %4051
        %4053 = vrot.lane.b32.xlu0 %v3986, 125
        %v4054 = vpop.permute.xlu0 %4053
        %4055 = vrot.lane.b32.xlu0 %v3987, 125
        %v4056 = vpop.permute.xlu0 %4055
        %4057 = vrot.lane.b32.xlu0 %v3988, 125
        %v4058 = vpop.permute.xlu0 %4057
        %4059 = vrot.lane.b32.xlu0 %v3989, 125
        %v4060 = vpop.permute.xlu0 %4059
        %4061 = vrot.lane.b32.xlu0 %v3990, 125
        %v4062 = vpop.permute.xlu0 %4061
        %4063 = vrot.lane.b32.xlu0 %v3991, 125
        %v4064 = vpop.permute.xlu0 %4063
        %4065 = vrot.lane.b32.xlu0 %v3992, 125
        %v4066 = vpop.permute.xlu0 %4065
        %4067 = vrot.lane.b32.xlu0 %v3993, 125
        %v4068 = vpop.permute.xlu0 %4067
        %4069 = vrot.lane.b32.xlu0 %v3994, 125
        %v4070 = vpop.permute.xlu0 %4069
        %4071 = vrot.lane.b32.xlu0 %v3995, 125
        %v4072 = vpop.permute.xlu0 %4071
        %4073 = vrot.lane.b32.xlu0 %v3996, 125
        %v4074 = vpop.permute.xlu0 %4073
        %4075 = vrot.lane.b32.xlu0 %v3997, 125
        %v4076 = vpop.permute.xlu0 %4075
        %4077 = vrot.lane.b32.xlu0 %v3998, 125
        %v4078 = vpop.permute.xlu0 %4077
        %4079 = vrot.lane.b32.xlu0 %v3999, 125
        %v4080 = vpop.permute.xlu0 %4079
        %4081 = vrot.lane.b32.xlu0 %v4000, 125
        %v4082 = vpop.permute.xlu0 %4081
        %4083 = vrot.lane.b32.xlu0 %v4001, 125
        %v4084 = vpop.permute.xlu0 %4083
        %4085 = vrot.lane.b32.xlu0 %v4002, 125
        %v4086 = vpop.permute.xlu0 %4085
        %4087 = vrot.lane.b32.xlu0 %v4003, 125
        %v4088 = vpop.permute.xlu0 %4087
        %4089 = vrot.lane.b32.xlu0 %v4004, 125
        %v4090 = vpop.permute.xlu0 %4089
        %4091 = vrot.lane.b32.xlu0 %v4005, 125
        %v4092 = vpop.permute.xlu0 %4091
        %4093 = vrot.lane.b32.xlu0 %v4006, 125
        %v4094 = vpop.permute.xlu0 %4093
        %4095 = vrot.lane.b32.xlu0 %v4007, 125
        %v4096 = vpop.permute.xlu0 %4095
        %4097 = vrot.lane.b32.xlu0 %v4008, 125
        %v4098 = vpop.permute.xlu0 %4097
        %4099 = vrot.lane.b32.xlu0 %v4009, 125
        %v4100 = vpop.permute.xlu0 %4099
        %4101 = vrot.lane.b32.xlu0 %v4010, 125
        %v4102 = vpop.permute.xlu0 %4101
        %4103 = vrot.lane.b32.xlu0 %v4011, 125
        %v4104 = vpop.permute.xlu0 %4103
        %4105 = vrot.lane.b32.xlu0 %v4012, 125
        %v4106 = vpop.permute.xlu0 %4105
        %4107 = vrot.lane.b32.xlu0 %v4013, 125
        %v4108 = vpop.permute.xlu0 %4107
        %4109 = vrot.lane.b32.xlu0 %v4014, 125
        %v4110 = vpop.permute.xlu0 %4109
        %v4143 = vadd.f32 %v3823, %v4048
        %v4144 = vadd.f32 %v3824, %v4050
        %v4145 = vadd.f32 %v3825, %v4052
        %v4146 = vadd.f32 %v3826, %v4054
        %v4147 = vadd.f32 %v3827, %v4056
        %v4148 = vadd.f32 %v3828, %v4058
        %v4149 = vadd.f32 %v3829, %v4060
        %v4150 = vadd.f32 %v3830, %v4062
        %v4151 = vadd.f32 %v3831, %v4064
        %v4152 = vadd.f32 %v3832, %v4066
        %v4153 = vadd.f32 %v3833, %v4068
        %v4154 = vadd.f32 %v3834, %v4070
        %v4155 = vadd.f32 %v3835, %v4072
        %v4156 = vadd.f32 %v3836, %v4074
        %v4157 = vadd.f32 %v3837, %v4076
        %v4158 = vadd.f32 %v3838, %v4078
        %v4159 = vadd.f32 %v3839, %v4080
        %v4160 = vadd.f32 %v3840, %v4082
        %v4161 = vadd.f32 %v3841, %v4084
        %v4162 = vadd.f32 %v3842, %v4086
        %v4163 = vadd.f32 %v3843, %v4088
        %v4164 = vadd.f32 %v3844, %v4090
        %v4165 = vadd.f32 %v3845, %v4092
        %v4166 = vadd.f32 %v3846, %v4094
        %v4167 = vadd.f32 %v3847, %v4096
        %v4168 = vadd.f32 %v3848, %v4098
        %v4169 = vadd.f32 %v3849, %v4100
        %v4170 = vadd.f32 %v3850, %v4102
        %v4171 = vadd.f32 %v3851, %v4104
        %v4172 = vadd.f32 %v3852, %v4106
        %v4173 = vadd.f32 %v3853, %v4108
        %v4174 = vadd.f32 %v3854, %v4110
        %4175 = vset.pattern.permute.xlu0 2
        %4176 = vperm.xlu0 %4175, %v3599
        %v4177 = vpop.permute.xlu0 %4176
        %4179 = vset.pattern.permute.xlu0 2
        %4180 = vperm.xlu0 %4179, %v3600
        %v4181 = vpop.permute.xlu0 %4180
        %4183 = vset.pattern.permute.xlu0 2
        %4184 = vperm.xlu0 %4183, %v3601
        %v4185 = vpop.permute.xlu0 %4184
        %4187 = vset.pattern.permute.xlu0 2
        %4188 = vperm.xlu0 %4187, %v3602
        %v4189 = vpop.permute.xlu0 %4188
        %4191 = vset.pattern.permute.xlu0 2
        %4192 = vperm.xlu0 %4191, %v3603
        %v4193 = vpop.permute.xlu0 %4192
        %4195 = vset.pattern.permute.xlu0 2
        %4196 = vperm.xlu0 %4195, %v3604
        %v4197 = vpop.permute.xlu0 %4196
        %4199 = vset.pattern.permute.xlu0 2
        %4200 = vperm.xlu0 %4199, %v3605
        %v4201 = vpop.permute.xlu0 %4200
        %4203 = vset.pattern.permute.xlu0 2
        %4204 = vperm.xlu0 %4203, %v3606
        %v4205 = vpop.permute.xlu0 %4204
        %4207 = vset.pattern.permute.xlu0 2
        %4208 = vperm.xlu0 %4207, %v3607
        %v4209 = vpop.permute.xlu0 %4208
        %4211 = vset.pattern.permute.xlu0 2
        %4212 = vperm.xlu0 %4211, %v3608
        %v4213 = vpop.permute.xlu0 %4212
        %4215 = vset.pattern.permute.xlu0 2
        %4216 = vperm.xlu0 %4215, %v3609
        %v4217 = vpop.permute.xlu0 %4216
        %4219 = vset.pattern.permute.xlu0 2
        %4220 = vperm.xlu0 %4219, %v3610
        %v4221 = vpop.permute.xlu0 %4220
        %4223 = vset.pattern.permute.xlu0 2
        %4224 = vperm.xlu0 %4223, %v3611
        %v4225 = vpop.permute.xlu0 %4224
        %4227 = vset.pattern.permute.xlu0 2
        %4228 = vperm.xlu0 %4227, %v3612
        %v4229 = vpop.permute.xlu0 %4228
        %4231 = vset.pattern.permute.xlu0 2
        %4232 = vperm.xlu0 %4231, %v3613
        %v4233 = vpop.permute.xlu0 %4232
        %4235 = vset.pattern.permute.xlu0 2
        %4236 = vperm.xlu0 %4235, %v3614
        %v4237 = vpop.permute.xlu0 %4236
        %4239 = vset.pattern.permute.xlu0 2
        %4240 = vperm.xlu0 %4239, %v3615
        %v4241 = vpop.permute.xlu0 %4240
        %4243 = vset.pattern.permute.xlu0 2
        %4244 = vperm.xlu0 %4243, %v3616
        %v4245 = vpop.permute.xlu0 %4244
        %4247 = vset.pattern.permute.xlu0 2
        %4248 = vperm.xlu0 %4247, %v3617
        %v4249 = vpop.permute.xlu0 %4248
        %4251 = vset.pattern.permute.xlu0 2
        %4252 = vperm.xlu0 %4251, %v3618
        %v4253 = vpop.permute.xlu0 %4252
        %4255 = vset.pattern.permute.xlu0 2
        %4256 = vperm.xlu0 %4255, %v3619
        %v4257 = vpop.permute.xlu0 %4256
        %4259 = vset.pattern.permute.xlu0 2
        %4260 = vperm.xlu0 %4259, %v3620
        %v4261 = vpop.permute.xlu0 %4260
        %4263 = vset.pattern.permute.xlu0 2
        %4264 = vperm.xlu0 %4263, %v3621
        %v4265 = vpop.permute.xlu0 %4264
        %4267 = vset.pattern.permute.xlu0 2
        %4268 = vperm.xlu0 %4267, %v3622
        %v4269 = vpop.permute.xlu0 %4268
        %4271 = vset.pattern.permute.xlu0 2
        %4272 = vperm.xlu0 %4271, %v3623
        %v4273 = vpop.permute.xlu0 %4272
        %4275 = vset.pattern.permute.xlu0 2
        %4276 = vperm.xlu0 %4275, %v3624
        %v4277 = vpop.permute.xlu0 %4276
        %4279 = vset.pattern.permute.xlu0 2
        %4280 = vperm.xlu0 %4279, %v3625
        %v4281 = vpop.permute.xlu0 %4280
        %4283 = vset.pattern.permute.xlu0 2
        %4284 = vperm.xlu0 %4283, %v3626
        %v4285 = vpop.permute.xlu0 %4284
        %4287 = vset.pattern.permute.xlu0 2
        %4288 = vperm.xlu0 %4287, %v3627
        %v4289 = vpop.permute.xlu0 %4288
        %4291 = vset.pattern.permute.xlu0 2
        %4292 = vperm.xlu0 %4291, %v3628
        %v4293 = vpop.permute.xlu0 %4292
        %4295 = vset.pattern.permute.xlu0 2
        %4296 = vperm.xlu0 %4295, %v3629
        %v4297 = vpop.permute.xlu0 %4296
        %4299 = vset.pattern.permute.xlu0 2
        %4300 = vperm.xlu0 %4299, %v3630
        %v4301 = vpop.permute.xlu0 %4300
        %v4303 = vmul.f32 %v4177, %v3631
        %v4304 = vmul.f32 %v4181, %v3632
        %v4305 = vmul.f32 %v4185, %v3633
        %v4306 = vmul.f32 %v4189, %v3634
        %v4307 = vmul.f32 %v4193, %v3635
        %v4308 = vmul.f32 %v4197, %v3636
        %v4309 = vmul.f32 %v4201, %v3637
        %v4310 = vmul.f32 %v4205, %v3638
        %v4311 = vmul.f32 %v4209, %v3639
        %v4312 = vmul.f32 %v4213, %v3640
        %v4313 = vmul.f32 %v4217, %v3641
        %v4314 = vmul.f32 %v4221, %v3642
        %v4315 = vmul.f32 %v4225, %v3643
        %v4316 = vmul.f32 %v4229, %v3644
        %v4317 = vmul.f32 %v4233, %v3645
        %v4318 = vmul.f32 %v4237, %v3646
        %v4319 = vmul.f32 %v4241, %v3647
        %v4320 = vmul.f32 %v4245, %v3648
        %v4321 = vmul.f32 %v4249, %v3649
        %v4322 = vmul.f32 %v4253, %v3650
        %v4323 = vmul.f32 %v4257, %v3651
        %v4324 = vmul.f32 %v4261, %v3652
        %v4325 = vmul.f32 %v4265, %v3653
        %v4326 = vmul.f32 %v4269, %v3654
        %v4327 = vmul.f32 %v4273, %v3655
        %v4328 = vmul.f32 %v4277, %v3656
        %v4329 = vmul.f32 %v4281, %v3657
        %v4330 = vmul.f32 %v4285, %v3658
        %v4331 = vmul.f32 %v4289, %v3659
        %v4332 = vmul.f32 %v4293, %v3660
        %v4333 = vmul.f32 %v4297, %v3661
        %v4334 = vmul.f32 %v4301, %v3662
        %4367 = vrot.lane.b32.xlu0 %v4303, 122
        %v4368 = vpop.permute.xlu0 %4367
        %4369 = vrot.lane.b32.xlu0 %v4304, 122
        %v4370 = vpop.permute.xlu0 %4369
        %4371 = vrot.lane.b32.xlu0 %v4305, 122
        %v4372 = vpop.permute.xlu0 %4371
        %4373 = vrot.lane.b32.xlu0 %v4306, 122
        %v4374 = vpop.permute.xlu0 %4373
        %4375 = vrot.lane.b32.xlu0 %v4307, 122
        %v4376 = vpop.permute.xlu0 %4375
        %4377 = vrot.lane.b32.xlu0 %v4308, 122
        %v4378 = vpop.permute.xlu0 %4377
        %4379 = vrot.lane.b32.xlu0 %v4309, 122
        %v4380 = vpop.permute.xlu0 %4379
        %4381 = vrot.lane.b32.xlu0 %v4310, 122
        %v4382 = vpop.permute.xlu0 %4381
        %4383 = vrot.lane.b32.xlu0 %v4311, 122
        %v4384 = vpop.permute.xlu0 %4383
        %4385 = vrot.lane.b32.xlu0 %v4312, 122
        %v4386 = vpop.permute.xlu0 %4385
        %4387 = vrot.lane.b32.xlu0 %v4313, 122
        %v4388 = vpop.permute.xlu0 %4387
        %4389 = vrot.lane.b32.xlu0 %v4314, 122
        %v4390 = vpop.permute.xlu0 %4389
        %4391 = vrot.lane.b32.xlu0 %v4315, 122
        %v4392 = vpop.permute.xlu0 %4391
        %4393 = vrot.lane.b32.xlu0 %v4316, 122
        %v4394 = vpop.permute.xlu0 %4393
        %4395 = vrot.lane.b32.xlu0 %v4317, 122
        %v4396 = vpop.permute.xlu0 %4395
        %4397 = vrot.lane.b32.xlu0 %v4318, 122
        %v4398 = vpop.permute.xlu0 %4397
        %4399 = vrot.lane.b32.xlu0 %v4319, 122
        %v4400 = vpop.permute.xlu0 %4399
        %4401 = vrot.lane.b32.xlu0 %v4320, 122
        %v4402 = vpop.permute.xlu0 %4401
        %4403 = vrot.lane.b32.xlu0 %v4321, 122
        %v4404 = vpop.permute.xlu0 %4403
        %4405 = vrot.lane.b32.xlu0 %v4322, 122
        %v4406 = vpop.permute.xlu0 %4405
        %4407 = vrot.lane.b32.xlu0 %v4323, 122
        %v4408 = vpop.permute.xlu0 %4407
        %4409 = vrot.lane.b32.xlu0 %v4324, 122
        %v4410 = vpop.permute.xlu0 %4409
        %4411 = vrot.lane.b32.xlu0 %v4325, 122
        %v4412 = vpop.permute.xlu0 %4411
        %4413 = vrot.lane.b32.xlu0 %v4326, 122
        %v4414 = vpop.permute.xlu0 %4413
        %4415 = vrot.lane.b32.xlu0 %v4327, 122
        %v4416 = vpop.permute.xlu0 %4415
        %4417 = vrot.lane.b32.xlu0 %v4328, 122
        %v4418 = vpop.permute.xlu0 %4417
        %4419 = vrot.lane.b32.xlu0 %v4329, 122
        %v4420 = vpop.permute.xlu0 %4419
        %4421 = vrot.lane.b32.xlu0 %v4330, 122
        %v4422 = vpop.permute.xlu0 %4421
        %4423 = vrot.lane.b32.xlu0 %v4331, 122
        %v4424 = vpop.permute.xlu0 %4423
        %4425 = vrot.lane.b32.xlu0 %v4332, 122
        %v4426 = vpop.permute.xlu0 %4425
        %4427 = vrot.lane.b32.xlu0 %v4333, 122
        %v4428 = vpop.permute.xlu0 %4427
        %4429 = vrot.lane.b32.xlu0 %v4334, 122
        %v4430 = vpop.permute.xlu0 %4429
        %v4463 = vadd.f32 %v4143, %v4368
        %v4464 = vadd.f32 %v4144, %v4370
        %v4465 = vadd.f32 %v4145, %v4372
        %v4466 = vadd.f32 %v4146, %v4374
        %v4467 = vadd.f32 %v4147, %v4376
        %v4468 = vadd.f32 %v4148, %v4378
        %v4469 = vadd.f32 %v4149, %v4380
        %v4470 = vadd.f32 %v4150, %v4382
        %v4471 = vadd.f32 %v4151, %v4384
        %v4472 = vadd.f32 %v4152, %v4386
        %v4473 = vadd.f32 %v4153, %v4388
        %v4474 = vadd.f32 %v4154, %v4390
        %v4475 = vadd.f32 %v4155, %v4392
        %v4476 = vadd.f32 %v4156, %v4394
        %v4477 = vadd.f32 %v4157, %v4396
        %v4478 = vadd.f32 %v4158, %v4398
        %v4479 = vadd.f32 %v4159, %v4400
        %v4480 = vadd.f32 %v4160, %v4402
        %v4481 = vadd.f32 %v4161, %v4404
        %v4482 = vadd.f32 %v4162, %v4406
        %v4483 = vadd.f32 %v4163, %v4408
        %v4484 = vadd.f32 %v4164, %v4410
        %v4485 = vadd.f32 %v4165, %v4412
        %v4486 = vadd.f32 %v4166, %v4414
        %v4487 = vadd.f32 %v4167, %v4416
        %v4488 = vadd.f32 %v4168, %v4418
        %v4489 = vadd.f32 %v4169, %v4420
        %v4490 = vadd.f32 %v4170, %v4422
        %v4491 = vadd.f32 %v4171, %v4424
        %v4492 = vadd.f32 %v4172, %v4426
        %v4493 = vadd.f32 %v4173, %v4428
        %v4494 = vadd.f32 %v4174, %v4430
        %4495 = vset.pattern.permute.xlu0 3
        %4496 = vperm.xlu0 %4495, %v3599
        %v4497 = vpop.permute.xlu0 %4496
        %4499 = vset.pattern.permute.xlu0 3
        %4500 = vperm.xlu0 %4499, %v3600
        %v4501 = vpop.permute.xlu0 %4500
        %4503 = vset.pattern.permute.xlu0 3
        %4504 = vperm.xlu0 %4503, %v3601
        %v4505 = vpop.permute.xlu0 %4504
        %4507 = vset.pattern.permute.xlu0 3
        %4508 = vperm.xlu0 %4507, %v3602
        %v4509 = vpop.permute.xlu0 %4508
        %4511 = vset.pattern.permute.xlu0 3
        %4512 = vperm.xlu0 %4511, %v3603
        %v4513 = vpop.permute.xlu0 %4512
        %4515 = vset.pattern.permute.xlu0 3
        %4516 = vperm.xlu0 %4515, %v3604
        %v4517 = vpop.permute.xlu0 %4516
        %4519 = vset.pattern.permute.xlu0 3
        %4520 = vperm.xlu0 %4519, %v3605
        %v4521 = vpop.permute.xlu0 %4520
        %4523 = vset.pattern.permute.xlu0 3
        %4524 = vperm.xlu0 %4523, %v3606
        %v4525 = vpop.permute.xlu0 %4524
        %4527 = vset.pattern.permute.xlu0 3
        %4528 = vperm.xlu0 %4527, %v3607
        %v4529 = vpop.permute.xlu0 %4528
        %4531 = vset.pattern.permute.xlu0 3
        %4532 = vperm.xlu0 %4531, %v3608
        %v4533 = vpop.permute.xlu0 %4532
        %4535 = vset.pattern.permute.xlu0 3
        %4536 = vperm.xlu0 %4535, %v3609
        %v4537 = vpop.permute.xlu0 %4536
        %4539 = vset.pattern.permute.xlu0 3
        %4540 = vperm.xlu0 %4539, %v3610
        %v4541 = vpop.permute.xlu0 %4540
        %4543 = vset.pattern.permute.xlu0 3
        %4544 = vperm.xlu0 %4543, %v3611
        %v4545 = vpop.permute.xlu0 %4544
        %4547 = vset.pattern.permute.xlu0 3
        %4548 = vperm.xlu0 %4547, %v3612
        %v4549 = vpop.permute.xlu0 %4548
        %4551 = vset.pattern.permute.xlu0 3
        %4552 = vperm.xlu0 %4551, %v3613
        %v4553 = vpop.permute.xlu0 %4552
        %4555 = vset.pattern.permute.xlu0 3
        %4556 = vperm.xlu0 %4555, %v3614
        %v4557 = vpop.permute.xlu0 %4556
        %4559 = vset.pattern.permute.xlu0 3
        %4560 = vperm.xlu0 %4559, %v3615
        %v4561 = vpop.permute.xlu0 %4560
        %4563 = vset.pattern.permute.xlu0 3
        %4564 = vperm.xlu0 %4563, %v3616
        %v4565 = vpop.permute.xlu0 %4564
        %4567 = vset.pattern.permute.xlu0 3
        %4568 = vperm.xlu0 %4567, %v3617
        %v4569 = vpop.permute.xlu0 %4568
        %4571 = vset.pattern.permute.xlu0 3
        %4572 = vperm.xlu0 %4571, %v3618
        %v4573 = vpop.permute.xlu0 %4572
        %4575 = vset.pattern.permute.xlu0 3
        %4576 = vperm.xlu0 %4575, %v3619
        %v4577 = vpop.permute.xlu0 %4576
        %4579 = vset.pattern.permute.xlu0 3
        %4580 = vperm.xlu0 %4579, %v3620
        %v4581 = vpop.permute.xlu0 %4580
        %4583 = vset.pattern.permute.xlu0 3
        %4584 = vperm.xlu0 %4583, %v3621
        %v4585 = vpop.permute.xlu0 %4584
        %4587 = vset.pattern.permute.xlu0 3
        %4588 = vperm.xlu0 %4587, %v3622
        %v4589 = vpop.permute.xlu0 %4588
        %4591 = vset.pattern.permute.xlu0 3
        %4592 = vperm.xlu0 %4591, %v3623
        %v4593 = vpop.permute.xlu0 %4592
        %4595 = vset.pattern.permute.xlu0 3
        %4596 = vperm.xlu0 %4595, %v3624
        %v4597 = vpop.permute.xlu0 %4596
        %4599 = vset.pattern.permute.xlu0 3
        %4600 = vperm.xlu0 %4599, %v3625
        %v4601 = vpop.permute.xlu0 %4600
        %4603 = vset.pattern.permute.xlu0 3
        %4604 = vperm.xlu0 %4603, %v3626
        %v4605 = vpop.permute.xlu0 %4604
        %4607 = vset.pattern.permute.xlu0 3
        %4608 = vperm.xlu0 %4607, %v3627
        %v4609 = vpop.permute.xlu0 %4608
        %4611 = vset.pattern.permute.xlu0 3
        %4612 = vperm.xlu0 %4611, %v3628
        %v4613 = vpop.permute.xlu0 %4612
        %4615 = vset.pattern.permute.xlu0 3
        %4616 = vperm.xlu0 %4615, %v3629
        %v4617 = vpop.permute.xlu0 %4616
        %4619 = vset.pattern.permute.xlu0 3
        %4620 = vperm.xlu0 %4619, %v3630
        %v4621 = vpop.permute.xlu0 %4620
        %v4623 = vmul.f32 %v4497, %v3631
        %v4624 = vmul.f32 %v4501, %v3632
        %v4625 = vmul.f32 %v4505, %v3633
        %v4626 = vmul.f32 %v4509, %v3634
        %v4627 = vmul.f32 %v4513, %v3635
        %v4628 = vmul.f32 %v4517, %v3636
        %v4629 = vmul.f32 %v4521, %v3637
        %v4630 = vmul.f32 %v4525, %v3638
        %v4631 = vmul.f32 %v4529, %v3639
        %v4632 = vmul.f32 %v4533, %v3640
        %v4633 = vmul.f32 %v4537, %v3641
        %v4634 = vmul.f32 %v4541, %v3642
        %v4635 = vmul.f32 %v4545, %v3643
        %v4636 = vmul.f32 %v4549, %v3644
        %v4637 = vmul.f32 %v4553, %v3645
        %v4638 = vmul.f32 %v4557, %v3646
        %v4639 = vmul.f32 %v4561, %v3647
        %v4640 = vmul.f32 %v4565, %v3648
        %v4641 = vmul.f32 %v4569, %v3649
        %v4642 = vmul.f32 %v4573, %v3650
        %v4643 = vmul.f32 %v4577, %v3651
        %v4644 = vmul.f32 %v4581, %v3652
        %v4645 = vmul.f32 %v4585, %v3653
        %v4646 = vmul.f32 %v4589, %v3654
        %v4647 = vmul.f32 %v4593, %v3655
        %v4648 = vmul.f32 %v4597, %v3656
        %v4649 = vmul.f32 %v4601, %v3657
        %v4650 = vmul.f32 %v4605, %v3658
        %v4651 = vmul.f32 %v4609, %v3659
        %v4652 = vmul.f32 %v4613, %v3660
        %v4653 = vmul.f32 %v4617, %v3661
        %v4654 = vmul.f32 %v4621, %v3662
        %4687 = vrot.lane.b32.xlu0 %v4623, 119
        %v4688 = vpop.permute.xlu0 %4687
        %4689 = vrot.lane.b32.xlu0 %v4624, 119
        %v4690 = vpop.permute.xlu0 %4689
        %4691 = vrot.lane.b32.xlu0 %v4625, 119
        %v4692 = vpop.permute.xlu0 %4691
        %4693 = vrot.lane.b32.xlu0 %v4626, 119
        %v4694 = vpop.permute.xlu0 %4693
        %4695 = vrot.lane.b32.xlu0 %v4627, 119
        %v4696 = vpop.permute.xlu0 %4695
        %4697 = vrot.lane.b32.xlu0 %v4628, 119
        %v4698 = vpop.permute.xlu0 %4697
        %4699 = vrot.lane.b32.xlu0 %v4629, 119
        %v4700 = vpop.permute.xlu0 %4699
        %4701 = vrot.lane.b32.xlu0 %v4630, 119
        %v4702 = vpop.permute.xlu0 %4701
        %4703 = vrot.lane.b32.xlu0 %v4631, 119
        %v4704 = vpop.permute.xlu0 %4703
        %4705 = vrot.lane.b32.xlu0 %v4632, 119
        %v4706 = vpop.permute.xlu0 %4705
        %4707 = vrot.lane.b32.xlu0 %v4633, 119
        %v4708 = vpop.permute.xlu0 %4707
        %4709 = vrot.lane.b32.xlu0 %v4634, 119
        %v4710 = vpop.permute.xlu0 %4709
        %4711 = vrot.lane.b32.xlu0 %v4635, 119
        %v4712 = vpop.permute.xlu0 %4711
        %4713 = vrot.lane.b32.xlu0 %v4636, 119
        %v4714 = vpop.permute.xlu0 %4713
        %4715 = vrot.lane.b32.xlu0 %v4637, 119
        %v4716 = vpop.permute.xlu0 %4715
        %4717 = vrot.lane.b32.xlu0 %v4638, 119
        %v4718 = vpop.permute.xlu0 %4717
        %4719 = vrot.lane.b32.xlu0 %v4639, 119
        %v4720 = vpop.permute.xlu0 %4719
        %4721 = vrot.lane.b32.xlu0 %v4640, 119
        %v4722 = vpop.permute.xlu0 %4721
        %4723 = vrot.lane.b32.xlu0 %v4641, 119
        %v4724 = vpop.permute.xlu0 %4723
        %4725 = vrot.lane.b32.xlu0 %v4642, 119
        %v4726 = vpop.permute.xlu0 %4725
        %4727 = vrot.lane.b32.xlu0 %v4643, 119
        %v4728 = vpop.permute.xlu0 %4727
        %4729 = vrot.lane.b32.xlu0 %v4644, 119
        %v4730 = vpop.permute.xlu0 %4729
        %4731 = vrot.lane.b32.xlu0 %v4645, 119
        %v4732 = vpop.permute.xlu0 %4731
        %4733 = vrot.lane.b32.xlu0 %v4646, 119
        %v4734 = vpop.permute.xlu0 %4733
        %4735 = vrot.lane.b32.xlu0 %v4647, 119
        %v4736 = vpop.permute.xlu0 %4735
        %4737 = vrot.lane.b32.xlu0 %v4648, 119
        %v4738 = vpop.permute.xlu0 %4737
        %4739 = vrot.lane.b32.xlu0 %v4649, 119
        %v4740 = vpop.permute.xlu0 %4739
        %4741 = vrot.lane.b32.xlu0 %v4650, 119
        %v4742 = vpop.permute.xlu0 %4741
        %4743 = vrot.lane.b32.xlu0 %v4651, 119
        %v4744 = vpop.permute.xlu0 %4743
        %4745 = vrot.lane.b32.xlu0 %v4652, 119
        %v4746 = vpop.permute.xlu0 %4745
        %4747 = vrot.lane.b32.xlu0 %v4653, 119
        %v4748 = vpop.permute.xlu0 %4747
        %4749 = vrot.lane.b32.xlu0 %v4654, 119
        %v4750 = vpop.permute.xlu0 %4749
        %v4783 = vadd.f32 %v4463, %v4688
        %v4784 = vadd.f32 %v4464, %v4690
        %v4785 = vadd.f32 %v4465, %v4692
        %v4786 = vadd.f32 %v4466, %v4694
        %v4787 = vadd.f32 %v4467, %v4696
        %v4788 = vadd.f32 %v4468, %v4698
        %v4789 = vadd.f32 %v4469, %v4700
        %v4790 = vadd.f32 %v4470, %v4702
        %v4791 = vadd.f32 %v4471, %v4704
        %v4792 = vadd.f32 %v4472, %v4706
        %v4793 = vadd.f32 %v4473, %v4708
        %v4794 = vadd.f32 %v4474, %v4710
        %v4795 = vadd.f32 %v4475, %v4712
        %v4796 = vadd.f32 %v4476, %v4714
        %v4797 = vadd.f32 %v4477, %v4716
        %v4798 = vadd.f32 %v4478, %v4718
        %v4799 = vadd.f32 %v4479, %v4720
        %v4800 = vadd.f32 %v4480, %v4722
        %v4801 = vadd.f32 %v4481, %v4724
        %v4802 = vadd.f32 %v4482, %v4726
        %v4803 = vadd.f32 %v4483, %v4728
        %v4804 = vadd.f32 %v4484, %v4730
        %v4805 = vadd.f32 %v4485, %v4732
        %v4806 = vadd.f32 %v4486, %v4734
        %v4807 = vadd.f32 %v4487, %v4736
        %v4808 = vadd.f32 %v4488, %v4738
        %v4809 = vadd.f32 %v4489, %v4740
        %v4810 = vadd.f32 %v4490, %v4742
        %v4811 = vadd.f32 %v4491, %v4744
        %v4812 = vadd.f32 %v4492, %v4746
        %v4813 = vadd.f32 %v4493, %v4748
        %v4814 = vadd.f32 %v4494, %v4750
        %4815 = vset.pattern.permute.xlu0 4
        %4816 = vperm.xlu0 %4815, %v3599
        %v4817 = vpop.permute.xlu0 %4816
        %4819 = vset.pattern.permute.xlu0 4
        %4820 = vperm.xlu0 %4819, %v3600
        %v4821 = vpop.permute.xlu0 %4820
        %4823 = vset.pattern.permute.xlu0 4
        %4824 = vperm.xlu0 %4823, %v3601
        %v4825 = vpop.permute.xlu0 %4824
        %4827 = vset.pattern.permute.xlu0 4
        %4828 = vperm.xlu0 %4827, %v3602
        %v4829 = vpop.permute.xlu0 %4828
        %4831 = vset.pattern.permute.xlu0 4
        %4832 = vperm.xlu0 %4831, %v3603
        %v4833 = vpop.permute.xlu0 %4832
        %4835 = vset.pattern.permute.xlu0 4
        %4836 = vperm.xlu0 %4835, %v3604
        %v4837 = vpop.permute.xlu0 %4836
        %4839 = vset.pattern.permute.xlu0 4
        %4840 = vperm.xlu0 %4839, %v3605
        %v4841 = vpop.permute.xlu0 %4840
        %4843 = vset.pattern.permute.xlu0 4
        %4844 = vperm.xlu0 %4843, %v3606
        %v4845 = vpop.permute.xlu0 %4844
        %4847 = vset.pattern.permute.xlu0 4
        %4848 = vperm.xlu0 %4847, %v3607
        %v4849 = vpop.permute.xlu0 %4848
        %4851 = vset.pattern.permute.xlu0 4
        %4852 = vperm.xlu0 %4851, %v3608
        %v4853 = vpop.permute.xlu0 %4852
        %4855 = vset.pattern.permute.xlu0 4
        %4856 = vperm.xlu0 %4855, %v3609
        %v4857 = vpop.permute.xlu0 %4856
        %4859 = vset.pattern.permute.xlu0 4
        %4860 = vperm.xlu0 %4859, %v3610
        %v4861 = vpop.permute.xlu0 %4860
        %4863 = vset.pattern.permute.xlu0 4
        %4864 = vperm.xlu0 %4863, %v3611
        %v4865 = vpop.permute.xlu0 %4864
        %4867 = vset.pattern.permute.xlu0 4
        %4868 = vperm.xlu0 %4867, %v3612
        %v4869 = vpop.permute.xlu0 %4868
        %4871 = vset.pattern.permute.xlu0 4
        %4872 = vperm.xlu0 %4871, %v3613
        %v4873 = vpop.permute.xlu0 %4872
        %4875 = vset.pattern.permute.xlu0 4
        %4876 = vperm.xlu0 %4875, %v3614
        %v4877 = vpop.permute.xlu0 %4876
        %4879 = vset.pattern.permute.xlu0 4
        %4880 = vperm.xlu0 %4879, %v3615
        %v4881 = vpop.permute.xlu0 %4880
        %4883 = vset.pattern.permute.xlu0 4
        %4884 = vperm.xlu0 %4883, %v3616
        %v4885 = vpop.permute.xlu0 %4884
        %4887 = vset.pattern.permute.xlu0 4
        %4888 = vperm.xlu0 %4887, %v3617
        %v4889 = vpop.permute.xlu0 %4888
        %4891 = vset.pattern.permute.xlu0 4
        %4892 = vperm.xlu0 %4891, %v3618
        %v4893 = vpop.permute.xlu0 %4892
        %4895 = vset.pattern.permute.xlu0 4
        %4896 = vperm.xlu0 %4895, %v3619
        %v4897 = vpop.permute.xlu0 %4896
        %4899 = vset.pattern.permute.xlu0 4
        %4900 = vperm.xlu0 %4899, %v3620
        %v4901 = vpop.permute.xlu0 %4900
        %4903 = vset.pattern.permute.xlu0 4
        %4904 = vperm.xlu0 %4903, %v3621
        %v4905 = vpop.permute.xlu0 %4904
        %4907 = vset.pattern.permute.xlu0 4
        %4908 = vperm.xlu0 %4907, %v3622
        %v4909 = vpop.permute.xlu0 %4908
        %4911 = vset.pattern.permute.xlu0 4
        %4912 = vperm.xlu0 %4911, %v3623
        %v4913 = vpop.permute.xlu0 %4912
        %4915 = vset.pattern.permute.xlu0 4
        %4916 = vperm.xlu0 %4915, %v3624
        %v4917 = vpop.permute.xlu0 %4916
        %4919 = vset.pattern.permute.xlu0 4
        %4920 = vperm.xlu0 %4919, %v3625
        %v4921 = vpop.permute.xlu0 %4920
        %4923 = vset.pattern.permute.xlu0 4
        %4924 = vperm.xlu0 %4923, %v3626
        %v4925 = vpop.permute.xlu0 %4924
        %4927 = vset.pattern.permute.xlu0 4
        %4928 = vperm.xlu0 %4927, %v3627
        %v4929 = vpop.permute.xlu0 %4928
        %4931 = vset.pattern.permute.xlu0 4
        %4932 = vperm.xlu0 %4931, %v3628
        %v4933 = vpop.permute.xlu0 %4932
        %4935 = vset.pattern.permute.xlu0 4
        %4936 = vperm.xlu0 %4935, %v3629
        %v4937 = vpop.permute.xlu0 %4936
        %4939 = vset.pattern.permute.xlu0 4
        %4940 = vperm.xlu0 %4939, %v3630
        %v4941 = vpop.permute.xlu0 %4940
        %v4943 = vmul.f32 %v4817, %v3631
        %v4944 = vmul.f32 %v4821, %v3632
        %v4945 = vmul.f32 %v4825, %v3633
        %v4946 = vmul.f32 %v4829, %v3634
        %v4947 = vmul.f32 %v4833, %v3635
        %v4948 = vmul.f32 %v4837, %v3636
        %v4949 = vmul.f32 %v4841, %v3637
        %v4950 = vmul.f32 %v4845, %v3638
        %v4951 = vmul.f32 %v4849, %v3639
        %v4952 = vmul.f32 %v4853, %v3640
        %v4953 = vmul.f32 %v4857, %v3641
        %v4954 = vmul.f32 %v4861, %v3642
        %v4955 = vmul.f32 %v4865, %v3643
        %v4956 = vmul.f32 %v4869, %v3644
        %v4957 = vmul.f32 %v4873, %v3645
        %v4958 = vmul.f32 %v4877, %v3646
        %v4959 = vmul.f32 %v4881, %v3647
        %v4960 = vmul.f32 %v4885, %v3648
        %v4961 = vmul.f32 %v4889, %v3649
        %v4962 = vmul.f32 %v4893, %v3650
        %v4963 = vmul.f32 %v4897, %v3651
        %v4964 = vmul.f32 %v4901, %v3652
        %v4965 = vmul.f32 %v4905, %v3653
        %v4966 = vmul.f32 %v4909, %v3654
        %v4967 = vmul.f32 %v4913, %v3655
        %v4968 = vmul.f32 %v4917, %v3656
        %v4969 = vmul.f32 %v4921, %v3657
        %v4970 = vmul.f32 %v4925, %v3658
        %v4971 = vmul.f32 %v4929, %v3659
        %v4972 = vmul.f32 %v4933, %v3660
        %v4973 = vmul.f32 %v4937, %v3661
        %v4974 = vmul.f32 %v4941, %v3662
        %5007 = vrot.lane.b32.xlu0 %v4943, 116
        %v5008 = vpop.permute.xlu0 %5007
        %5009 = vrot.lane.b32.xlu0 %v4944, 116
        %v5010 = vpop.permute.xlu0 %5009
        %5011 = vrot.lane.b32.xlu0 %v4945, 116
        %v5012 = vpop.permute.xlu0 %5011
        %5013 = vrot.lane.b32.xlu0 %v4946, 116
        %v5014 = vpop.permute.xlu0 %5013
        %5015 = vrot.lane.b32.xlu0 %v4947, 116
        %v5016 = vpop.permute.xlu0 %5015
        %5017 = vrot.lane.b32.xlu0 %v4948, 116
        %v5018 = vpop.permute.xlu0 %5017
        %5019 = vrot.lane.b32.xlu0 %v4949, 116
        %v5020 = vpop.permute.xlu0 %5019
        %5021 = vrot.lane.b32.xlu0 %v4950, 116
        %v5022 = vpop.permute.xlu0 %5021
        %5023 = vrot.lane.b32.xlu0 %v4951, 116
        %v5024 = vpop.permute.xlu0 %5023
        %5025 = vrot.lane.b32.xlu0 %v4952, 116
        %v5026 = vpop.permute.xlu0 %5025
        %5027 = vrot.lane.b32.xlu0 %v4953, 116
        %v5028 = vpop.permute.xlu0 %5027
        %5029 = vrot.lane.b32.xlu0 %v4954, 116
        %v5030 = vpop.permute.xlu0 %5029
        %5031 = vrot.lane.b32.xlu0 %v4955, 116
        %v5032 = vpop.permute.xlu0 %5031
        %5033 = vrot.lane.b32.xlu0 %v4956, 116
        %v5034 = vpop.permute.xlu0 %5033
        %5035 = vrot.lane.b32.xlu0 %v4957, 116
        %v5036 = vpop.permute.xlu0 %5035
        %5037 = vrot.lane.b32.xlu0 %v4958, 116
        %v5038 = vpop.permute.xlu0 %5037
        %5039 = vrot.lane.b32.xlu0 %v4959, 116
        %v5040 = vpop.permute.xlu0 %5039
        %5041 = vrot.lane.b32.xlu0 %v4960, 116
        %v5042 = vpop.permute.xlu0 %5041
        %5043 = vrot.lane.b32.xlu0 %v4961, 116
        %v5044 = vpop.permute.xlu0 %5043
        %5045 = vrot.lane.b32.xlu0 %v4962, 116
        %v5046 = vpop.permute.xlu0 %5045
        %5047 = vrot.lane.b32.xlu0 %v4963, 116
        %v5048 = vpop.permute.xlu0 %5047
        %5049 = vrot.lane.b32.xlu0 %v4964, 116
        %v5050 = vpop.permute.xlu0 %5049
        %5051 = vrot.lane.b32.xlu0 %v4965, 116
        %v5052 = vpop.permute.xlu0 %5051
        %5053 = vrot.lane.b32.xlu0 %v4966, 116
        %v5054 = vpop.permute.xlu0 %5053
        %5055 = vrot.lane.b32.xlu0 %v4967, 116
        %v5056 = vpop.permute.xlu0 %5055
        %5057 = vrot.lane.b32.xlu0 %v4968, 116
        %v5058 = vpop.permute.xlu0 %5057
        %5059 = vrot.lane.b32.xlu0 %v4969, 116
        %v5060 = vpop.permute.xlu0 %5059
        %5061 = vrot.lane.b32.xlu0 %v4970, 116
        %v5062 = vpop.permute.xlu0 %5061
        %5063 = vrot.lane.b32.xlu0 %v4971, 116
        %v5064 = vpop.permute.xlu0 %5063
        %5065 = vrot.lane.b32.xlu0 %v4972, 116
        %v5066 = vpop.permute.xlu0 %5065
        %5067 = vrot.lane.b32.xlu0 %v4973, 116
        %v5068 = vpop.permute.xlu0 %5067
        %5069 = vrot.lane.b32.xlu0 %v4974, 116
        %v5070 = vpop.permute.xlu0 %5069
        %v5103 = vadd.f32 %v4783, %v5008
        %v5104 = vadd.f32 %v4784, %v5010
        %v5105 = vadd.f32 %v4785, %v5012
        %v5106 = vadd.f32 %v4786, %v5014
        %v5107 = vadd.f32 %v4787, %v5016
        %v5108 = vadd.f32 %v4788, %v5018
        %v5109 = vadd.f32 %v4789, %v5020
        %v5110 = vadd.f32 %v4790, %v5022
        %v5111 = vadd.f32 %v4791, %v5024
        %v5112 = vadd.f32 %v4792, %v5026
        %v5113 = vadd.f32 %v4793, %v5028
        %v5114 = vadd.f32 %v4794, %v5030
        %v5115 = vadd.f32 %v4795, %v5032
        %v5116 = vadd.f32 %v4796, %v5034
        %v5117 = vadd.f32 %v4797, %v5036
        %v5118 = vadd.f32 %v4798, %v5038
        %v5119 = vadd.f32 %v4799, %v5040
        %v5120 = vadd.f32 %v4800, %v5042
        %v5121 = vadd.f32 %v4801, %v5044
        %v5122 = vadd.f32 %v4802, %v5046
        %v5123 = vadd.f32 %v4803, %v5048
        %v5124 = vadd.f32 %v4804, %v5050
        %v5125 = vadd.f32 %v4805, %v5052
        %v5126 = vadd.f32 %v4806, %v5054
        %v5127 = vadd.f32 %v4807, %v5056
        %v5128 = vadd.f32 %v4808, %v5058
        %v5129 = vadd.f32 %v4809, %v5060
        %v5130 = vadd.f32 %v4810, %v5062
        %v5131 = vadd.f32 %v4811, %v5064
        %v5132 = vadd.f32 %v4812, %v5066
        %v5133 = vadd.f32 %v4813, %v5068
        %v5134 = vadd.f32 %v4814, %v5070
        %5135 = vset.pattern.permute.xlu0 5
        %5136 = vperm.xlu0 %5135, %v3599
        %v5137 = vpop.permute.xlu0 %5136
        %5139 = vset.pattern.permute.xlu0 5
        %5140 = vperm.xlu0 %5139, %v3600
        %v5141 = vpop.permute.xlu0 %5140
        %5143 = vset.pattern.permute.xlu0 5
        %5144 = vperm.xlu0 %5143, %v3601
        %v5145 = vpop.permute.xlu0 %5144
        %5147 = vset.pattern.permute.xlu0 5
        %5148 = vperm.xlu0 %5147, %v3602
        %v5149 = vpop.permute.xlu0 %5148
        %5151 = vset.pattern.permute.xlu0 5
        %5152 = vperm.xlu0 %5151, %v3603
        %v5153 = vpop.permute.xlu0 %5152
        %5155 = vset.pattern.permute.xlu0 5
        %5156 = vperm.xlu0 %5155, %v3604
        %v5157 = vpop.permute.xlu0 %5156
        %5159 = vset.pattern.permute.xlu0 5
        %5160 = vperm.xlu0 %5159, %v3605
        %v5161 = vpop.permute.xlu0 %5160
        %5163 = vset.pattern.permute.xlu0 5
        %5164 = vperm.xlu0 %5163, %v3606
        %v5165 = vpop.permute.xlu0 %5164
        %5167 = vset.pattern.permute.xlu0 5
        %5168 = vperm.xlu0 %5167, %v3607
        %v5169 = vpop.permute.xlu0 %5168
        %5171 = vset.pattern.permute.xlu0 5
        %5172 = vperm.xlu0 %5171, %v3608
        %v5173 = vpop.permute.xlu0 %5172
        %5175 = vset.pattern.permute.xlu0 5
        %5176 = vperm.xlu0 %5175, %v3609
        %v5177 = vpop.permute.xlu0 %5176
        %5179 = vset.pattern.permute.xlu0 5
        %5180 = vperm.xlu0 %5179, %v3610
        %v5181 = vpop.permute.xlu0 %5180
        %5183 = vset.pattern.permute.xlu0 5
        %5184 = vperm.xlu0 %5183, %v3611
        %v5185 = vpop.permute.xlu0 %5184
        %5187 = vset.pattern.permute.xlu0 5
        %5188 = vperm.xlu0 %5187, %v3612
        %v5189 = vpop.permute.xlu0 %5188
        %5191 = vset.pattern.permute.xlu0 5
        %5192 = vperm.xlu0 %5191, %v3613
        %v5193 = vpop.permute.xlu0 %5192
        %5195 = vset.pattern.permute.xlu0 5
        %5196 = vperm.xlu0 %5195, %v3614
        %v5197 = vpop.permute.xlu0 %5196
        %5199 = vset.pattern.permute.xlu0 5
        %5200 = vperm.xlu0 %5199, %v3615
        %v5201 = vpop.permute.xlu0 %5200
        %5203 = vset.pattern.permute.xlu0 5
        %5204 = vperm.xlu0 %5203, %v3616
        %v5205 = vpop.permute.xlu0 %5204
        %5207 = vset.pattern.permute.xlu0 5
        %5208 = vperm.xlu0 %5207, %v3617
        %v5209 = vpop.permute.xlu0 %5208
        %5211 = vset.pattern.permute.xlu0 5
        %5212 = vperm.xlu0 %5211, %v3618
        %v5213 = vpop.permute.xlu0 %5212
        %5215 = vset.pattern.permute.xlu0 5
        %5216 = vperm.xlu0 %5215, %v3619
        %v5217 = vpop.permute.xlu0 %5216
        %5219 = vset.pattern.permute.xlu0 5
        %5220 = vperm.xlu0 %5219, %v3620
        %v5221 = vpop.permute.xlu0 %5220
        %5223 = vset.pattern.permute.xlu0 5
        %5224 = vperm.xlu0 %5223, %v3621
        %v5225 = vpop.permute.xlu0 %5224
        %5227 = vset.pattern.permute.xlu0 5
        %5228 = vperm.xlu0 %5227, %v3622
        %v5229 = vpop.permute.xlu0 %5228
        %5231 = vset.pattern.permute.xlu0 5
        %5232 = vperm.xlu0 %5231, %v3623
        %v5233 = vpop.permute.xlu0 %5232
        %5235 = vset.pattern.permute.xlu0 5
        %5236 = vperm.xlu0 %5235, %v3624
        %v5237 = vpop.permute.xlu0 %5236
        %5239 = vset.pattern.permute.xlu0 5
        %5240 = vperm.xlu0 %5239, %v3625
        %v5241 = vpop.permute.xlu0 %5240
        %5243 = vset.pattern.permute.xlu0 5
        %5244 = vperm.xlu0 %5243, %v3626
        %v5245 = vpop.permute.xlu0 %5244
        %5247 = vset.pattern.permute.xlu0 5
        %5248 = vperm.xlu0 %5247, %v3627
        %v5249 = vpop.permute.xlu0 %5248
        %5251 = vset.pattern.permute.xlu0 5
        %5252 = vperm.xlu0 %5251, %v3628
        %v5253 = vpop.permute.xlu0 %5252
        %5255 = vset.pattern.permute.xlu0 5
        %5256 = vperm.xlu0 %5255, %v3629
        %v5257 = vpop.permute.xlu0 %5256
        %5259 = vset.pattern.permute.xlu0 5
        %5260 = vperm.xlu0 %5259, %v3630
        %v5261 = vpop.permute.xlu0 %5260
        %v5263 = vmul.f32 %v5137, %v3631
        %v5264 = vmul.f32 %v5141, %v3632
        %v5265 = vmul.f32 %v5145, %v3633
        %v5266 = vmul.f32 %v5149, %v3634
        %v5267 = vmul.f32 %v5153, %v3635
        %v5268 = vmul.f32 %v5157, %v3636
        %v5269 = vmul.f32 %v5161, %v3637
        %v5270 = vmul.f32 %v5165, %v3638
        %v5271 = vmul.f32 %v5169, %v3639
        %v5272 = vmul.f32 %v5173, %v3640
        %v5273 = vmul.f32 %v5177, %v3641
        %v5274 = vmul.f32 %v5181, %v3642
        %v5275 = vmul.f32 %v5185, %v3643
        %v5276 = vmul.f32 %v5189, %v3644
        %v5277 = vmul.f32 %v5193, %v3645
        %v5278 = vmul.f32 %v5197, %v3646
        %v5279 = vmul.f32 %v5201, %v3647
        %v5280 = vmul.f32 %v5205, %v3648
        %v5281 = vmul.f32 %v5209, %v3649
        %v5282 = vmul.f32 %v5213, %v3650
        %v5283 = vmul.f32 %v5217, %v3651
        %v5284 = vmul.f32 %v5221, %v3652
        %v5285 = vmul.f32 %v5225, %v3653
        %v5286 = vmul.f32 %v5229, %v3654
        %v5287 = vmul.f32 %v5233, %v3655
        %v5288 = vmul.f32 %v5237, %v3656
        %v5289 = vmul.f32 %v5241, %v3657
        %v5290 = vmul.f32 %v5245, %v3658
        %v5291 = vmul.f32 %v5249, %v3659
        %v5292 = vmul.f32 %v5253, %v3660
        %v5293 = vmul.f32 %v5257, %v3661
        %v5294 = vmul.f32 %v5261, %v3662
        %5327 = vrot.lane.b32.xlu0 %v5263, 113
        %v5328 = vpop.permute.xlu0 %5327
        %5329 = vrot.lane.b32.xlu0 %v5264, 113
        %v5330 = vpop.permute.xlu0 %5329
        %5331 = vrot.lane.b32.xlu0 %v5265, 113
        %v5332 = vpop.permute.xlu0 %5331
        %5333 = vrot.lane.b32.xlu0 %v5266, 113
        %v5334 = vpop.permute.xlu0 %5333
        %5335 = vrot.lane.b32.xlu0 %v5267, 113
        %v5336 = vpop.permute.xlu0 %5335
        %5337 = vrot.lane.b32.xlu0 %v5268, 113
        %v5338 = vpop.permute.xlu0 %5337
        %5339 = vrot.lane.b32.xlu0 %v5269, 113
        %v5340 = vpop.permute.xlu0 %5339
        %5341 = vrot.lane.b32.xlu0 %v5270, 113
        %v5342 = vpop.permute.xlu0 %5341
        %5343 = vrot.lane.b32.xlu0 %v5271, 113
        %v5344 = vpop.permute.xlu0 %5343
        %5345 = vrot.lane.b32.xlu0 %v5272, 113
        %v5346 = vpop.permute.xlu0 %5345
        %5347 = vrot.lane.b32.xlu0 %v5273, 113
        %v5348 = vpop.permute.xlu0 %5347
        %5349 = vrot.lane.b32.xlu0 %v5274, 113
        %v5350 = vpop.permute.xlu0 %5349
        %5351 = vrot.lane.b32.xlu0 %v5275, 113
        %v5352 = vpop.permute.xlu0 %5351
        %5353 = vrot.lane.b32.xlu0 %v5276, 113
        %v5354 = vpop.permute.xlu0 %5353
        %5355 = vrot.lane.b32.xlu0 %v5277, 113
        %v5356 = vpop.permute.xlu0 %5355
        %5357 = vrot.lane.b32.xlu0 %v5278, 113
        %v5358 = vpop.permute.xlu0 %5357
        %5359 = vrot.lane.b32.xlu0 %v5279, 113
        %v5360 = vpop.permute.xlu0 %5359
        %5361 = vrot.lane.b32.xlu0 %v5280, 113
        %v5362 = vpop.permute.xlu0 %5361
        %5363 = vrot.lane.b32.xlu0 %v5281, 113
        %v5364 = vpop.permute.xlu0 %5363
        %5365 = vrot.lane.b32.xlu0 %v5282, 113
        %v5366 = vpop.permute.xlu0 %5365
        %5367 = vrot.lane.b32.xlu0 %v5283, 113
        %v5368 = vpop.permute.xlu0 %5367
        %5369 = vrot.lane.b32.xlu0 %v5284, 113
        %v5370 = vpop.permute.xlu0 %5369
        %5371 = vrot.lane.b32.xlu0 %v5285, 113
        %v5372 = vpop.permute.xlu0 %5371
        %5373 = vrot.lane.b32.xlu0 %v5286, 113
        %v5374 = vpop.permute.xlu0 %5373
        %5375 = vrot.lane.b32.xlu0 %v5287, 113
        %v5376 = vpop.permute.xlu0 %5375
        %5377 = vrot.lane.b32.xlu0 %v5288, 113
        %v5378 = vpop.permute.xlu0 %5377
        %5379 = vrot.lane.b32.xlu0 %v5289, 113
        %v5380 = vpop.permute.xlu0 %5379
        %5381 = vrot.lane.b32.xlu0 %v5290, 113
        %v5382 = vpop.permute.xlu0 %5381
        %5383 = vrot.lane.b32.xlu0 %v5291, 113
        %v5384 = vpop.permute.xlu0 %5383
        %5385 = vrot.lane.b32.xlu0 %v5292, 113
        %v5386 = vpop.permute.xlu0 %5385
        %5387 = vrot.lane.b32.xlu0 %v5293, 113
        %v5388 = vpop.permute.xlu0 %5387
        %5389 = vrot.lane.b32.xlu0 %v5294, 113
        %v5390 = vpop.permute.xlu0 %5389
        %v5423 = vadd.f32 %v5103, %v5328
        %v5424 = vadd.f32 %v5104, %v5330
        %v5425 = vadd.f32 %v5105, %v5332
        %v5426 = vadd.f32 %v5106, %v5334
        %v5427 = vadd.f32 %v5107, %v5336
        %v5428 = vadd.f32 %v5108, %v5338
        %v5429 = vadd.f32 %v5109, %v5340
        %v5430 = vadd.f32 %v5110, %v5342
        %v5431 = vadd.f32 %v5111, %v5344
        %v5432 = vadd.f32 %v5112, %v5346
        %v5433 = vadd.f32 %v5113, %v5348
        %v5434 = vadd.f32 %v5114, %v5350
        %v5435 = vadd.f32 %v5115, %v5352
        %v5436 = vadd.f32 %v5116, %v5354
        %v5437 = vadd.f32 %v5117, %v5356
        %v5438 = vadd.f32 %v5118, %v5358
        %v5439 = vadd.f32 %v5119, %v5360
        %v5440 = vadd.f32 %v5120, %v5362
        %v5441 = vadd.f32 %v5121, %v5364
        %v5442 = vadd.f32 %v5122, %v5366
        %v5443 = vadd.f32 %v5123, %v5368
        %v5444 = vadd.f32 %v5124, %v5370
        %v5445 = vadd.f32 %v5125, %v5372
        %v5446 = vadd.f32 %v5126, %v5374
        %v5447 = vadd.f32 %v5127, %v5376
        %v5448 = vadd.f32 %v5128, %v5378
        %v5449 = vadd.f32 %v5129, %v5380
        %v5450 = vadd.f32 %v5130, %v5382
        %v5451 = vadd.f32 %v5131, %v5384
        %v5452 = vadd.f32 %v5132, %v5386
        %v5453 = vadd.f32 %v5133, %v5388
        %v5454 = vadd.f32 %v5134, %v5390
        %5455 = vset.pattern.permute.xlu0 6
        %5456 = vperm.xlu0 %5455, %v3599
        %v5457 = vpop.permute.xlu0 %5456
        %5459 = vset.pattern.permute.xlu0 6
        %5460 = vperm.xlu0 %5459, %v3600
        %v5461 = vpop.permute.xlu0 %5460
        %5463 = vset.pattern.permute.xlu0 6
        %5464 = vperm.xlu0 %5463, %v3601
        %v5465 = vpop.permute.xlu0 %5464
        %5467 = vset.pattern.permute.xlu0 6
        %5468 = vperm.xlu0 %5467, %v3602
        %v5469 = vpop.permute.xlu0 %5468
        %5471 = vset.pattern.permute.xlu0 6
        %5472 = vperm.xlu0 %5471, %v3603
        %v5473 = vpop.permute.xlu0 %5472
        %5475 = vset.pattern.permute.xlu0 6
        %5476 = vperm.xlu0 %5475, %v3604
        %v5477 = vpop.permute.xlu0 %5476
        %5479 = vset.pattern.permute.xlu0 6
        %5480 = vperm.xlu0 %5479, %v3605
        %v5481 = vpop.permute.xlu0 %5480
        %5483 = vset.pattern.permute.xlu0 6
        %5484 = vperm.xlu0 %5483, %v3606
        %v5485 = vpop.permute.xlu0 %5484
        %5487 = vset.pattern.permute.xlu0 6
        %5488 = vperm.xlu0 %5487, %v3607
        %v5489 = vpop.permute.xlu0 %5488
        %5491 = vset.pattern.permute.xlu0 6
        %5492 = vperm.xlu0 %5491, %v3608
        %v5493 = vpop.permute.xlu0 %5492
        %5495 = vset.pattern.permute.xlu0 6
        %5496 = vperm.xlu0 %5495, %v3609
        %v5497 = vpop.permute.xlu0 %5496
        %5499 = vset.pattern.permute.xlu0 6
        %5500 = vperm.xlu0 %5499, %v3610
        %v5501 = vpop.permute.xlu0 %5500
        %5503 = vset.pattern.permute.xlu0 6
        %5504 = vperm.xlu0 %5503, %v3611
        %v5505 = vpop.permute.xlu0 %5504
        %5507 = vset.pattern.permute.xlu0 6
        %5508 = vperm.xlu0 %5507, %v3612
        %v5509 = vpop.permute.xlu0 %5508
        %5511 = vset.pattern.permute.xlu0 6
        %5512 = vperm.xlu0 %5511, %v3613
        %v5513 = vpop.permute.xlu0 %5512
        %5515 = vset.pattern.permute.xlu0 6
        %5516 = vperm.xlu0 %5515, %v3614
        %v5517 = vpop.permute.xlu0 %5516
        %5519 = vset.pattern.permute.xlu0 6
        %5520 = vperm.xlu0 %5519, %v3615
        %v5521 = vpop.permute.xlu0 %5520
        %5523 = vset.pattern.permute.xlu0 6
        %5524 = vperm.xlu0 %5523, %v3616
        %v5525 = vpop.permute.xlu0 %5524
        %5527 = vset.pattern.permute.xlu0 6
        %5528 = vperm.xlu0 %5527, %v3617
        %v5529 = vpop.permute.xlu0 %5528
        %5531 = vset.pattern.permute.xlu0 6
        %5532 = vperm.xlu0 %5531, %v3618
        %v5533 = vpop.permute.xlu0 %5532
        %5535 = vset.pattern.permute.xlu0 6
        %5536 = vperm.xlu0 %5535, %v3619
        %v5537 = vpop.permute.xlu0 %5536
        %5539 = vset.pattern.permute.xlu0 6
        %5540 = vperm.xlu0 %5539, %v3620
        %v5541 = vpop.permute.xlu0 %5540
        %5543 = vset.pattern.permute.xlu0 6
        %5544 = vperm.xlu0 %5543, %v3621
        %v5545 = vpop.permute.xlu0 %5544
        %5547 = vset.pattern.permute.xlu0 6
        %5548 = vperm.xlu0 %5547, %v3622
        %v5549 = vpop.permute.xlu0 %5548
        %5551 = vset.pattern.permute.xlu0 6
        %5552 = vperm.xlu0 %5551, %v3623
        %v5553 = vpop.permute.xlu0 %5552
        %5555 = vset.pattern.permute.xlu0 6
        %5556 = vperm.xlu0 %5555, %v3624
        %v5557 = vpop.permute.xlu0 %5556
        %5559 = vset.pattern.permute.xlu0 6
        %5560 = vperm.xlu0 %5559, %v3625
        %v5561 = vpop.permute.xlu0 %5560
        %5563 = vset.pattern.permute.xlu0 6
        %5564 = vperm.xlu0 %5563, %v3626
        %v5565 = vpop.permute.xlu0 %5564
        %5567 = vset.pattern.permute.xlu0 6
        %5568 = vperm.xlu0 %5567, %v3627
        %v5569 = vpop.permute.xlu0 %5568
        %5571 = vset.pattern.permute.xlu0 6
        %5572 = vperm.xlu0 %5571, %v3628
        %v5573 = vpop.permute.xlu0 %5572
        %5575 = vset.pattern.permute.xlu0 6
        %5576 = vperm.xlu0 %5575, %v3629
        %v5577 = vpop.permute.xlu0 %5576
        %5579 = vset.pattern.permute.xlu0 6
        %5580 = vperm.xlu0 %5579, %v3630
        %v5581 = vpop.permute.xlu0 %5580
        %v5583 = vmul.f32 %v5457, %v3631
        %v5584 = vmul.f32 %v5461, %v3632
        %v5585 = vmul.f32 %v5465, %v3633
        %v5586 = vmul.f32 %v5469, %v3634
        %v5587 = vmul.f32 %v5473, %v3635
        %v5588 = vmul.f32 %v5477, %v3636
        %v5589 = vmul.f32 %v5481, %v3637
        %v5590 = vmul.f32 %v5485, %v3638
        %v5591 = vmul.f32 %v5489, %v3639
        %v5592 = vmul.f32 %v5493, %v3640
        %v5593 = vmul.f32 %v5497, %v3641
        %v5594 = vmul.f32 %v5501, %v3642
        %v5595 = vmul.f32 %v5505, %v3643
        %v5596 = vmul.f32 %v5509, %v3644
        %v5597 = vmul.f32 %v5513, %v3645
        %v5598 = vmul.f32 %v5517, %v3646
        %v5599 = vmul.f32 %v5521, %v3647
        %v5600 = vmul.f32 %v5525, %v3648
        %v5601 = vmul.f32 %v5529, %v3649
        %v5602 = vmul.f32 %v5533, %v3650
        %v5603 = vmul.f32 %v5537, %v3651
        %v5604 = vmul.f32 %v5541, %v3652
        %v5605 = vmul.f32 %v5545, %v3653
        %v5606 = vmul.f32 %v5549, %v3654
        %v5607 = vmul.f32 %v5553, %v3655
        %v5608 = vmul.f32 %v5557, %v3656
        %v5609 = vmul.f32 %v5561, %v3657
        %v5610 = vmul.f32 %v5565, %v3658
        %v5611 = vmul.f32 %v5569, %v3659
        %v5612 = vmul.f32 %v5573, %v3660
        %v5613 = vmul.f32 %v5577, %v3661
        %v5614 = vmul.f32 %v5581, %v3662
        %5647 = vrot.lane.b32.xlu0 %v5583, 110
        %v5648 = vpop.permute.xlu0 %5647
        %5649 = vrot.lane.b32.xlu0 %v5584, 110
        %v5650 = vpop.permute.xlu0 %5649
        %5651 = vrot.lane.b32.xlu0 %v5585, 110
        %v5652 = vpop.permute.xlu0 %5651
        %5653 = vrot.lane.b32.xlu0 %v5586, 110
        %v5654 = vpop.permute.xlu0 %5653
        %5655 = vrot.lane.b32.xlu0 %v5587, 110
        %v5656 = vpop.permute.xlu0 %5655
        %5657 = vrot.lane.b32.xlu0 %v5588, 110
        %v5658 = vpop.permute.xlu0 %5657
        %5659 = vrot.lane.b32.xlu0 %v5589, 110
        %v5660 = vpop.permute.xlu0 %5659
        %5661 = vrot.lane.b32.xlu0 %v5590, 110
        %v5662 = vpop.permute.xlu0 %5661
        %5663 = vrot.lane.b32.xlu0 %v5591, 110
        %v5664 = vpop.permute.xlu0 %5663
        %5665 = vrot.lane.b32.xlu0 %v5592, 110
        %v5666 = vpop.permute.xlu0 %5665
        %5667 = vrot.lane.b32.xlu0 %v5593, 110
        %v5668 = vpop.permute.xlu0 %5667
        %5669 = vrot.lane.b32.xlu0 %v5594, 110
        %v5670 = vpop.permute.xlu0 %5669
        %5671 = vrot.lane.b32.xlu0 %v5595, 110
        %v5672 = vpop.permute.xlu0 %5671
        %5673 = vrot.lane.b32.xlu0 %v5596, 110
        %v5674 = vpop.permute.xlu0 %5673
        %5675 = vrot.lane.b32.xlu0 %v5597, 110
        %v5676 = vpop.permute.xlu0 %5675
        %5677 = vrot.lane.b32.xlu0 %v5598, 110
        %v5678 = vpop.permute.xlu0 %5677
        %5679 = vrot.lane.b32.xlu0 %v5599, 110
        %v5680 = vpop.permute.xlu0 %5679
        %5681 = vrot.lane.b32.xlu0 %v5600, 110
        %v5682 = vpop.permute.xlu0 %5681
        %5683 = vrot.lane.b32.xlu0 %v5601, 110
        %v5684 = vpop.permute.xlu0 %5683
        %5685 = vrot.lane.b32.xlu0 %v5602, 110
        %v5686 = vpop.permute.xlu0 %5685
        %5687 = vrot.lane.b32.xlu0 %v5603, 110
        %v5688 = vpop.permute.xlu0 %5687
        %5689 = vrot.lane.b32.xlu0 %v5604, 110
        %v5690 = vpop.permute.xlu0 %5689
        %5691 = vrot.lane.b32.xlu0 %v5605, 110
        %v5692 = vpop.permute.xlu0 %5691
        %5693 = vrot.lane.b32.xlu0 %v5606, 110
        %v5694 = vpop.permute.xlu0 %5693
        %5695 = vrot.lane.b32.xlu0 %v5607, 110
        %v5696 = vpop.permute.xlu0 %5695
        %5697 = vrot.lane.b32.xlu0 %v5608, 110
        %v5698 = vpop.permute.xlu0 %5697
        %5699 = vrot.lane.b32.xlu0 %v5609, 110
        %v5700 = vpop.permute.xlu0 %5699
        %5701 = vrot.lane.b32.xlu0 %v5610, 110
        %v5702 = vpop.permute.xlu0 %5701
        %5703 = vrot.lane.b32.xlu0 %v5611, 110
        %v5704 = vpop.permute.xlu0 %5703
        %5705 = vrot.lane.b32.xlu0 %v5612, 110
        %v5706 = vpop.permute.xlu0 %5705
        %5707 = vrot.lane.b32.xlu0 %v5613, 110
        %v5708 = vpop.permute.xlu0 %5707
        %5709 = vrot.lane.b32.xlu0 %v5614, 110
        %v5710 = vpop.permute.xlu0 %5709
        %v5743 = vadd.f32 %v5423, %v5648
        %v5744 = vadd.f32 %v5424, %v5650
        %v5745 = vadd.f32 %v5425, %v5652
        %v5746 = vadd.f32 %v5426, %v5654
        %v5747 = vadd.f32 %v5427, %v5656
        %v5748 = vadd.f32 %v5428, %v5658
        %v5749 = vadd.f32 %v5429, %v5660
        %v5750 = vadd.f32 %v5430, %v5662
        %v5751 = vadd.f32 %v5431, %v5664
        %v5752 = vadd.f32 %v5432, %v5666
        %v5753 = vadd.f32 %v5433, %v5668
        %v5754 = vadd.f32 %v5434, %v5670
        %v5755 = vadd.f32 %v5435, %v5672
        %v5756 = vadd.f32 %v5436, %v5674
        %v5757 = vadd.f32 %v5437, %v5676
        %v5758 = vadd.f32 %v5438, %v5678
        %v5759 = vadd.f32 %v5439, %v5680
        %v5760 = vadd.f32 %v5440, %v5682
        %v5761 = vadd.f32 %v5441, %v5684
        %v5762 = vadd.f32 %v5442, %v5686
        %v5763 = vadd.f32 %v5443, %v5688
        %v5764 = vadd.f32 %v5444, %v5690
        %v5765 = vadd.f32 %v5445, %v5692
        %v5766 = vadd.f32 %v5446, %v5694
        %v5767 = vadd.f32 %v5447, %v5696
        %v5768 = vadd.f32 %v5448, %v5698
        %v5769 = vadd.f32 %v5449, %v5700
        %v5770 = vadd.f32 %v5450, %v5702
        %v5771 = vadd.f32 %v5451, %v5704
        %v5772 = vadd.f32 %v5452, %v5706
        %v5773 = vadd.f32 %v5453, %v5708
        %v5774 = vadd.f32 %v5454, %v5710
        %5775 = vset.pattern.permute.xlu0 7
        %5776 = vperm.xlu0 %5775, %v3599
        %v5777 = vpop.permute.xlu0 %5776
        %5779 = vset.pattern.permute.xlu0 7
        %5780 = vperm.xlu0 %5779, %v3600
        %v5781 = vpop.permute.xlu0 %5780
        %5783 = vset.pattern.permute.xlu0 7
        %5784 = vperm.xlu0 %5783, %v3601
        %v5785 = vpop.permute.xlu0 %5784
        %5787 = vset.pattern.permute.xlu0 7
        %5788 = vperm.xlu0 %5787, %v3602
        %v5789 = vpop.permute.xlu0 %5788
        %5791 = vset.pattern.permute.xlu0 7
        %5792 = vperm.xlu0 %5791, %v3603
        %v5793 = vpop.permute.xlu0 %5792
        %5795 = vset.pattern.permute.xlu0 7
        %5796 = vperm.xlu0 %5795, %v3604
        %v5797 = vpop.permute.xlu0 %5796
        %5799 = vset.pattern.permute.xlu0 7
        %5800 = vperm.xlu0 %5799, %v3605
        %v5801 = vpop.permute.xlu0 %5800
        %5803 = vset.pattern.permute.xlu0 7
        %5804 = vperm.xlu0 %5803, %v3606
        %v5805 = vpop.permute.xlu0 %5804
        %5807 = vset.pattern.permute.xlu0 7
        %5808 = vperm.xlu0 %5807, %v3607
        %v5809 = vpop.permute.xlu0 %5808
        %5811 = vset.pattern.permute.xlu0 7
        %5812 = vperm.xlu0 %5811, %v3608
        %v5813 = vpop.permute.xlu0 %5812
        %5815 = vset.pattern.permute.xlu0 7
        %5816 = vperm.xlu0 %5815, %v3609
        %v5817 = vpop.permute.xlu0 %5816
        %5819 = vset.pattern.permute.xlu0 7
        %5820 = vperm.xlu0 %5819, %v3610
        %v5821 = vpop.permute.xlu0 %5820
        %5823 = vset.pattern.permute.xlu0 7
        %5824 = vperm.xlu0 %5823, %v3611
        %v5825 = vpop.permute.xlu0 %5824
        %5827 = vset.pattern.permute.xlu0 7
        %5828 = vperm.xlu0 %5827, %v3612
        %v5829 = vpop.permute.xlu0 %5828
        %5831 = vset.pattern.permute.xlu0 7
        %5832 = vperm.xlu0 %5831, %v3613
        %v5833 = vpop.permute.xlu0 %5832
        %5835 = vset.pattern.permute.xlu0 7
        %5836 = vperm.xlu0 %5835, %v3614
        %v5837 = vpop.permute.xlu0 %5836
        %5839 = vset.pattern.permute.xlu0 7
        %5840 = vperm.xlu0 %5839, %v3615
        %v5841 = vpop.permute.xlu0 %5840
        %5843 = vset.pattern.permute.xlu0 7
        %5844 = vperm.xlu0 %5843, %v3616
        %v5845 = vpop.permute.xlu0 %5844
        %5847 = vset.pattern.permute.xlu0 7
        %5848 = vperm.xlu0 %5847, %v3617
        %v5849 = vpop.permute.xlu0 %5848
        %5851 = vset.pattern.permute.xlu0 7
        %5852 = vperm.xlu0 %5851, %v3618
        %v5853 = vpop.permute.xlu0 %5852
        %5855 = vset.pattern.permute.xlu0 7
        %5856 = vperm.xlu0 %5855, %v3619
        %v5857 = vpop.permute.xlu0 %5856
        %5859 = vset.pattern.permute.xlu0 7
        %5860 = vperm.xlu0 %5859, %v3620
        %v5861 = vpop.permute.xlu0 %5860
        %5863 = vset.pattern.permute.xlu0 7
        %5864 = vperm.xlu0 %5863, %v3621
        %v5865 = vpop.permute.xlu0 %5864
        %5867 = vset.pattern.permute.xlu0 7
        %5868 = vperm.xlu0 %5867, %v3622
        %v5869 = vpop.permute.xlu0 %5868
        %5871 = vset.pattern.permute.xlu0 7
        %5872 = vperm.xlu0 %5871, %v3623
        %v5873 = vpop.permute.xlu0 %5872
        %5875 = vset.pattern.permute.xlu0 7
        %5876 = vperm.xlu0 %5875, %v3624
        %v5877 = vpop.permute.xlu0 %5876
        %5879 = vset.pattern.permute.xlu0 7
        %5880 = vperm.xlu0 %5879, %v3625
        %v5881 = vpop.permute.xlu0 %5880
        %5883 = vset.pattern.permute.xlu0 7
        %5884 = vperm.xlu0 %5883, %v3626
        %v5885 = vpop.permute.xlu0 %5884
        %5887 = vset.pattern.permute.xlu0 7
        %5888 = vperm.xlu0 %5887, %v3627
        %v5889 = vpop.permute.xlu0 %5888
        %5891 = vset.pattern.permute.xlu0 7
        %5892 = vperm.xlu0 %5891, %v3628
        %v5893 = vpop.permute.xlu0 %5892
        %5895 = vset.pattern.permute.xlu0 7
        %5896 = vperm.xlu0 %5895, %v3629
        %v5897 = vpop.permute.xlu0 %5896
        %5899 = vset.pattern.permute.xlu0 7
        %5900 = vperm.xlu0 %5899, %v3630
        %v5901 = vpop.permute.xlu0 %5900
        %v5903 = vmul.f32 %v5777, %v3631
        %v5904 = vmul.f32 %v5781, %v3632
        %v5905 = vmul.f32 %v5785, %v3633
        %v5906 = vmul.f32 %v5789, %v3634
        %v5907 = vmul.f32 %v5793, %v3635
        %v5908 = vmul.f32 %v5797, %v3636
        %v5909 = vmul.f32 %v5801, %v3637
        %v5910 = vmul.f32 %v5805, %v3638
        %v5911 = vmul.f32 %v5809, %v3639
        %v5912 = vmul.f32 %v5813, %v3640
        %v5913 = vmul.f32 %v5817, %v3641
        %v5914 = vmul.f32 %v5821, %v3642
        %v5915 = vmul.f32 %v5825, %v3643
        %v5916 = vmul.f32 %v5829, %v3644
        %v5917 = vmul.f32 %v5833, %v3645
        %v5918 = vmul.f32 %v5837, %v3646
        %v5919 = vmul.f32 %v5841, %v3647
        %v5920 = vmul.f32 %v5845, %v3648
        %v5921 = vmul.f32 %v5849, %v3649
        %v5922 = vmul.f32 %v5853, %v3650
        %v5923 = vmul.f32 %v5857, %v3651
        %v5924 = vmul.f32 %v5861, %v3652
        %v5925 = vmul.f32 %v5865, %v3653
        %v5926 = vmul.f32 %v5869, %v3654
        %v5927 = vmul.f32 %v5873, %v3655
        %v5928 = vmul.f32 %v5877, %v3656
        %v5929 = vmul.f32 %v5881, %v3657
        %v5930 = vmul.f32 %v5885, %v3658
        %v5931 = vmul.f32 %v5889, %v3659
        %v5932 = vmul.f32 %v5893, %v3660
        %v5933 = vmul.f32 %v5897, %v3661
        %v5934 = vmul.f32 %v5901, %v3662
        %5967 = vrot.lane.b32.xlu0 %v5903, 107
        %v5968 = vpop.permute.xlu0 %5967
        %5969 = vrot.lane.b32.xlu0 %v5904, 107
        %v5970 = vpop.permute.xlu0 %5969
        %5971 = vrot.lane.b32.xlu0 %v5905, 107
        %v5972 = vpop.permute.xlu0 %5971
        %5973 = vrot.lane.b32.xlu0 %v5906, 107
        %v5974 = vpop.permute.xlu0 %5973
        %5975 = vrot.lane.b32.xlu0 %v5907, 107
        %v5976 = vpop.permute.xlu0 %5975
        %5977 = vrot.lane.b32.xlu0 %v5908, 107
        %v5978 = vpop.permute.xlu0 %5977
        %5979 = vrot.lane.b32.xlu0 %v5909, 107
        %v5980 = vpop.permute.xlu0 %5979
        %5981 = vrot.lane.b32.xlu0 %v5910, 107
        %v5982 = vpop.permute.xlu0 %5981
        %5983 = vrot.lane.b32.xlu0 %v5911, 107
        %v5984 = vpop.permute.xlu0 %5983
        %5985 = vrot.lane.b32.xlu0 %v5912, 107
        %v5986 = vpop.permute.xlu0 %5985
        %5987 = vrot.lane.b32.xlu0 %v5913, 107
        %v5988 = vpop.permute.xlu0 %5987
        %5989 = vrot.lane.b32.xlu0 %v5914, 107
        %v5990 = vpop.permute.xlu0 %5989
        %5991 = vrot.lane.b32.xlu0 %v5915, 107
        %v5992 = vpop.permute.xlu0 %5991
        %5993 = vrot.lane.b32.xlu0 %v5916, 107
        %v5994 = vpop.permute.xlu0 %5993
        %5995 = vrot.lane.b32.xlu0 %v5917, 107
        %v5996 = vpop.permute.xlu0 %5995
        %5997 = vrot.lane.b32.xlu0 %v5918, 107
        %v5998 = vpop.permute.xlu0 %5997
        %5999 = vrot.lane.b32.xlu0 %v5919, 107
        %v6000 = vpop.permute.xlu0 %5999
        %6001 = vrot.lane.b32.xlu0 %v5920, 107
        %v6002 = vpop.permute.xlu0 %6001
        %6003 = vrot.lane.b32.xlu0 %v5921, 107
        %v6004 = vpop.permute.xlu0 %6003
        %6005 = vrot.lane.b32.xlu0 %v5922, 107
        %v6006 = vpop.permute.xlu0 %6005
        %6007 = vrot.lane.b32.xlu0 %v5923, 107
        %v6008 = vpop.permute.xlu0 %6007
        %6009 = vrot.lane.b32.xlu0 %v5924, 107
        %v6010 = vpop.permute.xlu0 %6009
        %6011 = vrot.lane.b32.xlu0 %v5925, 107
        %v6012 = vpop.permute.xlu0 %6011
        %6013 = vrot.lane.b32.xlu0 %v5926, 107
        %v6014 = vpop.permute.xlu0 %6013
        %6015 = vrot.lane.b32.xlu0 %v5927, 107
        %v6016 = vpop.permute.xlu0 %6015
        %6017 = vrot.lane.b32.xlu0 %v5928, 107
        %v6018 = vpop.permute.xlu0 %6017
        %6019 = vrot.lane.b32.xlu0 %v5929, 107
        %v6020 = vpop.permute.xlu0 %6019
        %6021 = vrot.lane.b32.xlu0 %v5930, 107
        %v6022 = vpop.permute.xlu0 %6021
        %6023 = vrot.lane.b32.xlu0 %v5931, 107
        %v6024 = vpop.permute.xlu0 %6023
        %6025 = vrot.lane.b32.xlu0 %v5932, 107
        %v6026 = vpop.permute.xlu0 %6025
        %6027 = vrot.lane.b32.xlu0 %v5933, 107
        %v6028 = vpop.permute.xlu0 %6027
        %6029 = vrot.lane.b32.xlu0 %v5934, 107
        %v6030 = vpop.permute.xlu0 %6029
        %v6063 = vadd.f32 %v5743, %v5968
        %v6064 = vadd.f32 %v5744, %v5970
        %v6065 = vadd.f32 %v5745, %v5972
        %v6066 = vadd.f32 %v5746, %v5974
        %v6067 = vadd.f32 %v5747, %v5976
        %v6068 = vadd.f32 %v5748, %v5978
        %v6069 = vadd.f32 %v5749, %v5980
        %v6070 = vadd.f32 %v5750, %v5982
        %v6071 = vadd.f32 %v5751, %v5984
        %v6072 = vadd.f32 %v5752, %v5986
        %v6073 = vadd.f32 %v5753, %v5988
        %v6074 = vadd.f32 %v5754, %v5990
        %v6075 = vadd.f32 %v5755, %v5992
        %v6076 = vadd.f32 %v5756, %v5994
        %v6077 = vadd.f32 %v5757, %v5996
        %v6078 = vadd.f32 %v5758, %v5998
        %v6079 = vadd.f32 %v5759, %v6000
        %v6080 = vadd.f32 %v5760, %v6002
        %v6081 = vadd.f32 %v5761, %v6004
        %v6082 = vadd.f32 %v5762, %v6006
        %v6083 = vadd.f32 %v5763, %v6008
        %v6084 = vadd.f32 %v5764, %v6010
        %v6085 = vadd.f32 %v5765, %v6012
        %v6086 = vadd.f32 %v5766, %v6014
        %v6087 = vadd.f32 %v5767, %v6016
        %v6088 = vadd.f32 %v5768, %v6018
        %v6089 = vadd.f32 %v5769, %v6020
        %v6090 = vadd.f32 %v5770, %v6022
        %v6091 = vadd.f32 %v5771, %v6024
        %v6092 = vadd.f32 %v5772, %v6026
        %v6093 = vadd.f32 %v5773, %v6028
        %v6094 = vadd.f32 %v5774, %v6030
        %v6095 = vsel %vm3054, %v3247, 0.0
        %6096 = vadd.xlane.f32.xlu0 %v6095
        %v6097 = vpop.xlane.xlu0 %6096
        %v6098 = vsel %vm3054, %v3248, 0.0
        %6099 = vadd.xlane.f32.xlu0 %v6098
        %v6100 = vpop.xlane.xlu0 %6099
        %v6101 = vsel %vm3054, %v3249, 0.0
        %6102 = vadd.xlane.f32.xlu0 %v6101
        %v6103 = vpop.xlane.xlu0 %6102
        %v6104 = vsel %vm3054, %v3250, 0.0
        %6105 = vadd.xlane.f32.xlu0 %v6104
        %v6106 = vpop.xlane.xlu0 %6105
        %v6107 = vsel %vm3054, %v3251, 0.0
        %6108 = vadd.xlane.f32.xlu0 %v6107
        %v6109 = vpop.xlane.xlu0 %6108
        %v6110 = vsel %vm3054, %v3252, 0.0
        %6111 = vadd.xlane.f32.xlu0 %v6110
        %v6112 = vpop.xlane.xlu0 %6111
        %v6113 = vsel %vm3054, %v3253, 0.0
        %6114 = vadd.xlane.f32.xlu0 %v6113
        %v6115 = vpop.xlane.xlu0 %6114
        %v6116 = vsel %vm3054, %v3254, 0.0
        %6117 = vadd.xlane.f32.xlu0 %v6116
        %v6118 = vpop.xlane.xlu0 %6117
        %v6119 = vsel %vm3054, %v3255, 0.0
        %6120 = vadd.xlane.f32.xlu0 %v6119
        %v6121 = vpop.xlane.xlu0 %6120
        %v6122 = vsel %vm3054, %v3256, 0.0
        %6123 = vadd.xlane.f32.xlu0 %v6122
        %v6124 = vpop.xlane.xlu0 %6123
        %v6125 = vsel %vm3054, %v3257, 0.0
        %6126 = vadd.xlane.f32.xlu0 %v6125
        %v6127 = vpop.xlane.xlu0 %6126
        %v6128 = vsel %vm3054, %v3258, 0.0
        %6129 = vadd.xlane.f32.xlu0 %v6128
        %v6130 = vpop.xlane.xlu0 %6129
        %v6131 = vsel %vm3054, %v3259, 0.0
        %6132 = vadd.xlane.f32.xlu0 %v6131
        %v6133 = vpop.xlane.xlu0 %6132
        %v6134 = vsel %vm3054, %v3260, 0.0
        %6135 = vadd.xlane.f32.xlu0 %v6134
        %v6136 = vpop.xlane.xlu0 %6135
        %v6137 = vsel %vm3054, %v3261, 0.0
        %6138 = vadd.xlane.f32.xlu0 %v6137
        %v6139 = vpop.xlane.xlu0 %6138
        %v6140 = vsel %vm3054, %v3262, 0.0
        %6141 = vadd.xlane.f32.xlu0 %v6140
        %v6142 = vpop.xlane.xlu0 %6141
        %v6143 = vsel %vm3054, %v3263, 0.0
        %6144 = vadd.xlane.f32.xlu0 %v6143
        %v6145 = vpop.xlane.xlu0 %6144
        %v6146 = vsel %vm3054, %v3264, 0.0
        %6147 = vadd.xlane.f32.xlu0 %v6146
        %v6148 = vpop.xlane.xlu0 %6147
        %v6149 = vsel %vm3054, %v3265, 0.0
        %6150 = vadd.xlane.f32.xlu0 %v6149
        %v6151 = vpop.xlane.xlu0 %6150
        %v6152 = vsel %vm3054, %v3266, 0.0
        %6153 = vadd.xlane.f32.xlu0 %v6152
        %v6154 = vpop.xlane.xlu0 %6153
        %v6155 = vsel %vm3054, %v3267, 0.0
        %6156 = vadd.xlane.f32.xlu0 %v6155
        %v6157 = vpop.xlane.xlu0 %6156
        %v6158 = vsel %vm3054, %v3268, 0.0
        %6159 = vadd.xlane.f32.xlu0 %v6158
        %v6160 = vpop.xlane.xlu0 %6159
        %v6161 = vsel %vm3054, %v3269, 0.0
        %6162 = vadd.xlane.f32.xlu0 %v6161
        %v6163 = vpop.xlane.xlu0 %6162
        %v6164 = vsel %vm3054, %v3270, 0.0
        %6165 = vadd.xlane.f32.xlu0 %v6164
        %v6166 = vpop.xlane.xlu0 %6165
        %v6167 = vsel %vm3054, %v3271, 0.0
        %6168 = vadd.xlane.f32.xlu0 %v6167
        %v6169 = vpop.xlane.xlu0 %6168
        %v6170 = vsel %vm3054, %v3272, 0.0
        %6171 = vadd.xlane.f32.xlu0 %v6170
        %v6172 = vpop.xlane.xlu0 %6171
        %v6173 = vsel %vm3054, %v3273, 0.0
        %6174 = vadd.xlane.f32.xlu0 %v6173
        %v6175 = vpop.xlane.xlu0 %6174
        %v6176 = vsel %vm3054, %v3274, 0.0
        %6177 = vadd.xlane.f32.xlu0 %v6176
        %v6178 = vpop.xlane.xlu0 %6177
        %v6179 = vsel %vm3054, %v3275, 0.0
        %6180 = vadd.xlane.f32.xlu0 %v6179
        %v6181 = vpop.xlane.xlu0 %6180
        %v6182 = vsel %vm3054, %v3276, 0.0
        %6183 = vadd.xlane.f32.xlu0 %v6182
        %v6184 = vpop.xlane.xlu0 %6183
        %v6185 = vsel %vm3054, %v3277, 0.0
        %6186 = vadd.xlane.f32.xlu0 %v6185
        %v6187 = vpop.xlane.xlu0 %6186
        %v6188 = vsel %vm3054, %v3278, 0.0
        %6189 = vadd.xlane.f32.xlu0 %v6188
        %v6190 = vpop.xlane.xlu0 %6189
        %v6191 = vsel %vm819, %v6063, %v6097
        %v6192 = vsel %vm819, %v6064, %v6100
        %v6193 = vsel %vm819, %v6065, %v6103
        %v6194 = vsel %vm819, %v6066, %v6106
        %v6195 = vsel %vm819, %v6067, %v6109
        %v6196 = vsel %vm819, %v6068, %v6112
        %v6197 = vsel %vm819, %v6069, %v6115
        %v6198 = vsel %vm819, %v6070, %v6118
        %v6199 = vsel %vm819, %v6071, %v6121
        %v6200 = vsel %vm819, %v6072, %v6124
        %v6201 = vsel %vm819, %v6073, %v6127
        %v6202 = vsel %vm819, %v6074, %v6130
        %v6203 = vsel %vm819, %v6075, %v6133
        %v6204 = vsel %vm819, %v6076, %v6136
        %v6205 = vsel %vm819, %v6077, %v6139
        %v6206 = vsel %vm819, %v6078, %v6142
        %v6207 = vsel %vm819, %v6079, %v6145
        %v6208 = vsel %vm819, %v6080, %v6148
        %v6209 = vsel %vm819, %v6081, %v6151
        %v6210 = vsel %vm819, %v6082, %v6154
        %v6211 = vsel %vm819, %v6083, %v6157
        %v6212 = vsel %vm819, %v6084, %v6160
        %v6213 = vsel %vm819, %v6085, %v6163
        %v6214 = vsel %vm819, %v6086, %v6166
        %v6215 = vsel %vm819, %v6087, %v6169
        %v6216 = vsel %vm819, %v6088, %v6172
        %v6217 = vsel %vm819, %v6089, %v6175
        %v6218 = vsel %vm819, %v6090, %v6178
        %v6219 = vsel %vm819, %v6091, %v6181
        %v6220 = vsel %vm819, %v6092, %v6184
        %v6221 = vsel %vm819, %v6093, %v6187
        %v6222 = vsel %vm819, %v6094, %v6190
        %vm6223 = vcmask 31744
        %6224 = vst.msk [vmem:[%s663] sm:$0xff] %vm6223, %v6191
        %6225 = vst.msk [vmem:[%s663 + $0x8] sm:$0xff] %vm6223, %v6192
        %6226 = vst.msk [vmem:[%s663 + $0x10] sm:$0xff] %vm6223, %v6193
        %6227 = vst.msk [vmem:[%s663 + $0x18] sm:$0xff] %vm6223, %v6194
        %6228 = vst.msk [vmem:[%s663 + $0x20] sm:$0xff] %vm6223, %v6195
        %6229 = vst.msk [vmem:[%s663 + $0x28] sm:$0xff] %vm6223, %v6196
        %6230 = vst.msk [vmem:[%s663 + $0x30] sm:$0xff] %vm6223, %v6197
        %6231 = vst.msk [vmem:[%s663 + $0x38] sm:$0xff] %vm6223, %v6198
        %6232 = vst.msk [vmem:[%s663 + $0x40] sm:$0xff] %vm6223, %v6199
        %6233 = vst.msk [vmem:[%s663 + $0x48] sm:$0xff] %vm6223, %v6200
        %6234 = vst.msk [vmem:[%s663 + $0x50] sm:$0xff] %vm6223, %v6201
        %6235 = vst.msk [vmem:[%s663 + $0x58] sm:$0xff] %vm6223, %v6202
        %6236 = vst.msk [vmem:[%s663 + $0x60] sm:$0xff] %vm6223, %v6203
        %6237 = vst.msk [vmem:[%s663 + $0x68] sm:$0xff] %vm6223, %v6204
        %6238 = vst.msk [vmem:[%s663 + $0x70] sm:$0xff] %vm6223, %v6205
        %6239 = vst.msk [vmem:[%s663 + $0x78] sm:$0xff] %vm6223, %v6206
        %6240 = vst.msk [vmem:[%s663 + $0x80] sm:$0xff] %vm6223, %v6207
        %6241 = vst.msk [vmem:[%s663 + $0x88] sm:$0xff] %vm6223, %v6208
        %6242 = vst.msk [vmem:[%s663 + $0x90] sm:$0xff] %vm6223, %v6209
        %6243 = vst.msk [vmem:[%s663 + $0x98] sm:$0xff] %vm6223, %v6210
        %6244 = vst.msk [vmem:[%s663 + $0xa0] sm:$0xff] %vm6223, %v6211
        %6245 = vst.msk [vmem:[%s663 + $0xa8] sm:$0xff] %vm6223, %v6212
        %6246 = vst.msk [vmem:[%s663 + $0xb0] sm:$0xff] %vm6223, %v6213
        %6247 = vst.msk [vmem:[%s663 + $0xb8] sm:$0xff] %vm6223, %v6214
        %6248 = vst.msk [vmem:[%s663 + $0xc0] sm:$0xff] %vm6223, %v6215
        %6249 = vst.msk [vmem:[%s663 + $0xc8] sm:$0xff] %vm6223, %v6216
        %6250 = vst.msk [vmem:[%s663 + $0xd0] sm:$0xff] %vm6223, %v6217
        %6251 = vst.msk [vmem:[%s663 + $0xd8] sm:$0xff] %vm6223, %v6218
        %6252 = vst.msk [vmem:[%s663 + $0xe0] sm:$0xff] %vm6223, %v6219
        %6253 = vst.msk [vmem:[%s663 + $0xe8] sm:$0xff] %vm6223, %v6220
        %6254 = vst.msk [vmem:[%s663 + $0xf0] sm:$0xff] %vm6223, %v6221
        %6255 = vst.msk [vmem:[%s663 + $0xf8] sm:$0xff] %vm6223, %v6222
        %s6256 = sand.u32 %s401, 1
        %s6257 = sand.u32 %s401, 1
        %s6258 = smul.addr %s6257, 256
        %s6259 = scalar_lea.vmem [#allocation2], %s6258
        // Predicated region
        $region85: #{tpu_custom_call.1} parent=83 // pred_check
          %p6260 = pneg %p411
        $region86: #{tpu_custom_call.1} parent=83 // pred_check_branch
          %6262 = sbr.rel (%p6260) target = $region88
        $region87: #{tpu_custom_call.1} parent=83 // pred_region
          %s6263 = smul.u32 32, %s27
          %s6264 = ssub.s32 63, %s6263
          %p6265 = scmp.lt.s32.totalorder %s6264, 32
          %s6266 = scalar_select %p6265, %s6264, 32
          %s6267 = smul.u32 128, %s6266
          %p6268 = scmp.ne.s32.totalorder 0, %s6267
          %s6269 = smul.addr %s6263, 8
          %s6270 = scalar_lea.vmem %s16, %s6269
          // Predicated region
          $region89: #{tpu_custom_call.1} parent=87 // pred_check
            %p6271 = pneg %p6268
          $region90: #{tpu_custom_call.1} parent=87 // pred_check_branch
            %6273 = sbr.rel (%p6271) target = $region92
          $region91: #{tpu_custom_call.1} parent=87 // pred_region
            // Predicated region
            $region93: #{tpu_custom_call.1} parent=91 // pred_check
              _
            $region94: #{tpu_custom_call.1} parent=91 // pred_check_branch
              %6275 = sbr.rel (0) target = $region96
            $region95: #{tpu_custom_call.1} parent=91 // pred_region
              // Predicated region
              $region115: #{tpu_custom_call.1} parent=95 // pred_check
                _
              $region116: #{tpu_custom_call.1} parent=95 // pred_check_branch
                %6386 = sbr.rel (0) target = $region118
              $region117: #{tpu_custom_call.1} parent=95 // pred_region
                %s6387 = sshrl.u32 %s6266, 5
                // While loop
                $region119: #{tpu_custom_call.1} parent=117 // loop_pre_header
                  _
                $region120: #{tpu_custom_call.1} parent=117 // loop_header
                  %s6389 = sphi 0, %s6391
                  %p6390 = scmp.ge.s32.totalorder %s6389, %s6387
                  %s6394 = sphi 0, %s6463
                  %s6395 = sphi %s6259, %s6466
                  %s6396 = sphi %s6270, %s6467
                $region121: #{tpu_custom_call.1} parent=117 // loop_header_branch
                  %6393 = sbr.rel (%p6390) target = $region125
                $region122: #{tpu_custom_call.1} parent=117 // loop_body
                  %v6397 = vld [vmem:[%s6395] sm:$0xff]
                  %6398 = vst [vmem:[%s6396] sm:$0xff] %v6397
                  %v6399 = vld [vmem:[%s6395 + $0x8] sm:$0xff]
                  %6400 = vst [vmem:[%s6396 + $0x8] sm:$0xff] %v6399
                  %v6401 = vld [vmem:[%s6395 + $0x10] sm:$0xff]
                  %6402 = vst [vmem:[%s6396 + $0x10] sm:$0xff] %v6401
                  %v6403 = vld [vmem:[%s6395 + $0x18] sm:$0xff]
                  %6404 = vst [vmem:[%s6396 + $0x18] sm:$0xff] %v6403
                  %v6405 = vld [vmem:[%s6395 + $0x20] sm:$0xff]
                  %6406 = vst [vmem:[%s6396 + $0x20] sm:$0xff] %v6405
                  %v6407 = vld [vmem:[%s6395 + $0x28] sm:$0xff]
                  %6408 = vst [vmem:[%s6396 + $0x28] sm:$0xff] %v6407
                  %v6409 = vld [vmem:[%s6395 + $0x30] sm:$0xff]
                  %6410 = vst [vmem:[%s6396 + $0x30] sm:$0xff] %v6409
                  %v6411 = vld [vmem:[%s6395 + $0x38] sm:$0xff]
                  %6412 = vst [vmem:[%s6396 + $0x38] sm:$0xff] %v6411
                  %v6413 = vld [vmem:[%s6395 + $0x40] sm:$0xff]
                  %6414 = vst [vmem:[%s6396 + $0x40] sm:$0xff] %v6413
                  %v6415 = vld [vmem:[%s6395 + $0x48] sm:$0xff]
                  %6416 = vst [vmem:[%s6396 + $0x48] sm:$0xff] %v6415
                  %v6417 = vld [vmem:[%s6395 + $0x50] sm:$0xff]
                  %6418 = vst [vmem:[%s6396 + $0x50] sm:$0xff] %v6417
                  %v6419 = vld [vmem:[%s6395 + $0x58] sm:$0xff]
                  %6420 = vst [vmem:[%s6396 + $0x58] sm:$0xff] %v6419
                  %v6421 = vld [vmem:[%s6395 + $0x60] sm:$0xff]
                  %6422 = vst [vmem:[%s6396 + $0x60] sm:$0xff] %v6421
                  %v6423 = vld [vmem:[%s6395 + $0x68] sm:$0xff]
                  %6424 = vst [vmem:[%s6396 + $0x68] sm:$0xff] %v6423
                  %v6425 = vld [vmem:[%s6395 + $0x70] sm:$0xff]
                  %6426 = vst [vmem:[%s6396 + $0x70] sm:$0xff] %v6425
                  %v6427 = vld [vmem:[%s6395 + $0x78] sm:$0xff]
                  %6428 = vst [vmem:[%s6396 + $0x78] sm:$0xff] %v6427
                  %v6429 = vld [vmem:[%s6395 + $0x80] sm:$0xff]
                  %6430 = vst [vmem:[%s6396 + $0x80] sm:$0xff] %v6429
                  %v6431 = vld [vmem:[%s6395 + $0x88] sm:$0xff]
                  %6432 = vst [vmem:[%s6396 + $0x88] sm:$0xff] %v6431
                  %v6433 = vld [vmem:[%s6395 + $0x90] sm:$0xff]
                  %6434 = vst [vmem:[%s6396 + $0x90] sm:$0xff] %v6433
                  %v6435 = vld [vmem:[%s6395 + $0x98] sm:$0xff]
                  %6436 = vst [vmem:[%s6396 + $0x98] sm:$0xff] %v6435
                  %v6437 = vld [vmem:[%s6395 + $0xa0] sm:$0xff]
                  %6438 = vst [vmem:[%s6396 + $0xa0] sm:$0xff] %v6437
                  %v6439 = vld [vmem:[%s6395 + $0xa8] sm:$0xff]
                  %6440 = vst [vmem:[%s6396 + $0xa8] sm:$0xff] %v6439
                  %v6441 = vld [vmem:[%s6395 + $0xb0] sm:$0xff]
                  %6442 = vst [vmem:[%s6396 + $0xb0] sm:$0xff] %v6441
                  %v6443 = vld [vmem:[%s6395 + $0xb8] sm:$0xff]
                  %6444 = vst [vmem:[%s6396 + $0xb8] sm:$0xff] %v6443
                  %v6445 = vld [vmem:[%s6395 + $0xc0] sm:$0xff]
                  %6446 = vst [vmem:[%s6396 + $0xc0] sm:$0xff] %v6445
                  %v6447 = vld [vmem:[%s6395 + $0xc8] sm:$0xff]
                  %6448 = vst [vmem:[%s6396 + $0xc8] sm:$0xff] %v6447
                  %v6449 = vld [vmem:[%s6395 + $0xd0] sm:$0xff]
                  %6450 = vst [vmem:[%s6396 + $0xd0] sm:$0xff] %v6449
                  %v6451 = vld [vmem:[%s6395 + $0xd8] sm:$0xff]
                  %6452 = vst [vmem:[%s6396 + $0xd8] sm:$0xff] %v6451
                  %v6453 = vld [vmem:[%s6395 + $0xe0] sm:$0xff]
                  %6454 = vst [vmem:[%s6396 + $0xe0] sm:$0xff] %v6453
                  %v6455 = vld [vmem:[%s6395 + $0xe8] sm:$0xff]
                  %6456 = vst [vmem:[%s6396 + $0xe8] sm:$0xff] %v6455
                  %v6457 = vld [vmem:[%s6395 + $0xf0] sm:$0xff]
                  %6458 = vst [vmem:[%s6396 + $0xf0] sm:$0xff] %v6457
                  %v6459 = vld [vmem:[%s6395 + $0xf8] sm:$0xff]
                  %6460 = vst [vmem:[%s6396 + $0xf8] sm:$0xff] %v6459
                  %s6461 = sadd.s32 1, %s6394
                  %p6462 = scmp.ge.s32.totalorder %s6461, %s6387
                  %s6463 = scalar_select %p6462, 0, %s6461
                  %s6464 = smul.u32 %s6463, 256
                  %s6465 = smul.u32 %s6463, 256
                  %s6466 = scalar_lea.vmem %s6259, %s6464 [#allocation2]
                  %s6467 = scalar_lea.vmem %s6270, %s6465
                $region123: #{tpu_custom_call.1} parent=117 // loop_footer
                  %s6391 = sadd.s32 %s6389, 1
                $region124: #{tpu_custom_call.1} parent=117 // loop_footer_branch
                  %6388 = sbr.rel target = $region120
                $region125: #{tpu_custom_call.1} parent=117 // loop_exit
                  _
                %s6468 = sshrl.u32 %s6266, 5
                %s6469 = sand.u32 %s6266, 31
                %s6470 = smul.u32 %s6468, 32
                %s6471 = smul.u32 8, %s6470
                %s6472 = scalar_lea.vmem %s6259, %s6471 [#allocation2]
                %s6473 = smul.u32 8, %s6470
                %s6474 = scalar_lea.vmem %s6270, %s6473
                // While loop
                $region126: #{tpu_custom_call.1} parent=117 // loop_pre_header
                  _
                $region127: #{tpu_custom_call.1} parent=117 // loop_header
                  %s6476 = sphi 0, %s6478
                  %p6477 = scmp.ge.s32.totalorder %s6476, %s6469
                  %s6481 = sphi 0, %s6488
                  %s6482 = sphi %s6472, %s6491
                  %s6483 = sphi %s6474, %s6492
                $region128: #{tpu_custom_call.1} parent=117 // loop_header_branch
                  %6480 = sbr.rel (%p6477) target = $region132
                $region129: #{tpu_custom_call.1} parent=117 // loop_body
                  %v6484 = vld [vmem:[%s6482] sm:$0xff]
                  %6485 = vst [vmem:[%s6483] sm:$0xff] %v6484
                  %s6486 = sadd.s32 1, %s6481
                  %p6487 = scmp.ge.s32.totalorder %s6486, %s6469
                  %s6488 = scalar_select %p6487, 0, %s6486
                  %s6489 = smul.u32 %s6488, 8
                  %s6490 = smul.u32 %s6488, 8
                  %s6491 = scalar_lea.vmem %s6472, %s6489 [#allocation2]
                  %s6492 = scalar_lea.vmem %s6474, %s6490
                $region130: #{tpu_custom_call.1} parent=117 // loop_footer
                  %s6478 = sadd.s32 %s6476, 1
                $region131: #{tpu_custom_call.1} parent=117 // loop_footer_branch
                  %6475 = sbr.rel target = $region127
                $region132: #{tpu_custom_call.1} parent=117 // loop_exit
                  _
              $region118: #{tpu_custom_call.1} parent=95 // pred_fallthru
                _
              // Predicated region
              $region133: #{tpu_custom_call.1} parent=95 // pred_check
                _
              $region134: #{tpu_custom_call.1} parent=95 // pred_check_branch
                %6494 = sbr.rel target = $region136
              $region135: #{tpu_custom_call.1} parent=95 // pred_region
                _
              $region136: #{tpu_custom_call.1} parent=95 // pred_fallthru
                _
            $region96: #{tpu_custom_call.1} parent=91 // pred_fallthru
              _
            // Predicated region
            $region97: #{tpu_custom_call.1} parent=91 // pred_check
              _
            $region98: #{tpu_custom_call.1} parent=91 // pred_check_branch
              %6277 = sbr.rel target = $region100
            $region99: #{tpu_custom_call.1} parent=91 // pred_region
              %s6279 = sshrl.u32 %s6266, 5
              // While loop
              $region101: #{tpu_custom_call.1} parent=99 // loop_pre_header
                _
              $region102: #{tpu_custom_call.1} parent=99 // loop_header
                %s6281 = sphi 0, %s6283
                %p6282 = scmp.ge.s32.totalorder %s6281, %s6279
                %s6286 = sphi 0, %s6355
                %s6287 = sphi %s6259, %s6358
                %s6288 = sphi %s6270, %s6359
              $region103: #{tpu_custom_call.1} parent=99 // loop_header_branch
                %6285 = sbr.rel (%p6282) target = $region107
              $region104: #{tpu_custom_call.1} parent=99 // loop_body
                %v6289 = vld [vmem:[%s6287] sm:$0xff]
                %6290 = vst [vmem:[%s6288] sm:$0xff] %v6289
                %v6291 = vld [vmem:[%s6287 + $0x8] sm:$0xff]
                %6292 = vst [vmem:[%s6288 + $0x8] sm:$0xff] %v6291
                %v6293 = vld [vmem:[%s6287 + $0x10] sm:$0xff]
                %6294 = vst [vmem:[%s6288 + $0x10] sm:$0xff] %v6293
                %v6295 = vld [vmem:[%s6287 + $0x18] sm:$0xff]
                %6296 = vst [vmem:[%s6288 + $0x18] sm:$0xff] %v6295
                %v6297 = vld [vmem:[%s6287 + $0x20] sm:$0xff]
                %6298 = vst [vmem:[%s6288 + $0x20] sm:$0xff] %v6297
                %v6299 = vld [vmem:[%s6287 + $0x28] sm:$0xff]
                %6300 = vst [vmem:[%s6288 + $0x28] sm:$0xff] %v6299
                %v6301 = vld [vmem:[%s6287 + $0x30] sm:$0xff]
                %6302 = vst [vmem:[%s6288 + $0x30] sm:$0xff] %v6301
                %v6303 = vld [vmem:[%s6287 + $0x38] sm:$0xff]
                %6304 = vst [vmem:[%s6288 + $0x38] sm:$0xff] %v6303
                %v6305 = vld [vmem:[%s6287 + $0x40] sm:$0xff]
                %6306 = vst [vmem:[%s6288 + $0x40] sm:$0xff] %v6305
                %v6307 = vld [vmem:[%s6287 + $0x48] sm:$0xff]
                %6308 = vst [vmem:[%s6288 + $0x48] sm:$0xff] %v6307
                %v6309 = vld [vmem:[%s6287 + $0x50] sm:$0xff]
                %6310 = vst [vmem:[%s6288 + $0x50] sm:$0xff] %v6309
                %v6311 = vld [vmem:[%s6287 + $0x58] sm:$0xff]
                %6312 = vst [vmem:[%s6288 + $0x58] sm:$0xff] %v6311
                %v6313 = vld [vmem:[%s6287 + $0x60] sm:$0xff]
                %6314 = vst [vmem:[%s6288 + $0x60] sm:$0xff] %v6313
                %v6315 = vld [vmem:[%s6287 + $0x68] sm:$0xff]
                %6316 = vst [vmem:[%s6288 + $0x68] sm:$0xff] %v6315
                %v6317 = vld [vmem:[%s6287 + $0x70] sm:$0xff]
                %6318 = vst [vmem:[%s6288 + $0x70] sm:$0xff] %v6317
                %v6319 = vld [vmem:[%s6287 + $0x78] sm:$0xff]
                %6320 = vst [vmem:[%s6288 + $0x78] sm:$0xff] %v6319
                %v6321 = vld [vmem:[%s6287 + $0x80] sm:$0xff]
                %6322 = vst [vmem:[%s6288 + $0x80] sm:$0xff] %v6321
                %v6323 = vld [vmem:[%s6287 + $0x88] sm:$0xff]
                %6324 = vst [vmem:[%s6288 + $0x88] sm:$0xff] %v6323
                %v6325 = vld [vmem:[%s6287 + $0x90] sm:$0xff]
                %6326 = vst [vmem:[%s6288 + $0x90] sm:$0xff] %v6325
                %v6327 = vld [vmem:[%s6287 + $0x98] sm:$0xff]
                %6328 = vst [vmem:[%s6288 + $0x98] sm:$0xff] %v6327
                %v6329 = vld [vmem:[%s6287 + $0xa0] sm:$0xff]
                %6330 = vst [vmem:[%s6288 + $0xa0] sm:$0xff] %v6329
                %v6331 = vld [vmem:[%s6287 + $0xa8] sm:$0xff]
                %6332 = vst [vmem:[%s6288 + $0xa8] sm:$0xff] %v6331
                %v6333 = vld [vmem:[%s6287 + $0xb0] sm:$0xff]
                %6334 = vst [vmem:[%s6288 + $0xb0] sm:$0xff] %v6333
                %v6335 = vld [vmem:[%s6287 + $0xb8] sm:$0xff]
                %6336 = vst [vmem:[%s6288 + $0xb8] sm:$0xff] %v6335
                %v6337 = vld [vmem:[%s6287 + $0xc0] sm:$0xff]
                %6338 = vst [vmem:[%s6288 + $0xc0] sm:$0xff] %v6337
                %v6339 = vld [vmem:[%s6287 + $0xc8] sm:$0xff]
                %6340 = vst [vmem:[%s6288 + $0xc8] sm:$0xff] %v6339
                %v6341 = vld [vmem:[%s6287 + $0xd0] sm:$0xff]
                %6342 = vst [vmem:[%s6288 + $0xd0] sm:$0xff] %v6341
                %v6343 = vld [vmem:[%s6287 + $0xd8] sm:$0xff]
                %6344 = vst [vmem:[%s6288 + $0xd8] sm:$0xff] %v6343
                %v6345 = vld [vmem:[%s6287 + $0xe0] sm:$0xff]
                %6346 = vst [vmem:[%s6288 + $0xe0] sm:$0xff] %v6345
                %v6347 = vld [vmem:[%s6287 + $0xe8] sm:$0xff]
                %6348 = vst [vmem:[%s6288 + $0xe8] sm:$0xff] %v6347
                %v6349 = vld [vmem:[%s6287 + $0xf0] sm:$0xff]
                %6350 = vst [vmem:[%s6288 + $0xf0] sm:$0xff] %v6349
                %v6351 = vld [vmem:[%s6287 + $0xf8] sm:$0xff]
                %6352 = vst [vmem:[%s6288 + $0xf8] sm:$0xff] %v6351
                %s6353 = sadd.s32 1, %s6286
                %p6354 = scmp.ge.s32.totalorder %s6353, %s6279
                %s6355 = scalar_select %p6354, 0, %s6353
                %s6356 = smul.u32 %s6355, 256
                %s6357 = smul.u32 %s6355, 256
                %s6358 = scalar_lea.vmem %s6259, %s6356 [#allocation2]
                %s6359 = scalar_lea.vmem %s6270, %s6357
              $region105: #{tpu_custom_call.1} parent=99 // loop_footer
                %s6283 = sadd.s32 %s6281, 1
              $region106: #{tpu_custom_call.1} parent=99 // loop_footer_branch
                %6280 = sbr.rel target = $region102
              $region107: #{tpu_custom_call.1} parent=99 // loop_exit
                _
              %s6360 = sshrl.u32 %s6266, 5
              %s6361 = sand.u32 %s6266, 31
              %s6362 = smul.u32 %s6360, 32
              %s6363 = smul.u32 8, %s6362
              %s6364 = scalar_lea.vmem %s6259, %s6363 [#allocation2]
              %s6365 = smul.u32 8, %s6362
              %s6366 = scalar_lea.vmem %s6270, %s6365
              // While loop
              $region108: #{tpu_custom_call.1} parent=99 // loop_pre_header
                _
              $region109: #{tpu_custom_call.1} parent=99 // loop_header
                %s6368 = sphi 0, %s6370
                %p6369 = scmp.ge.s32.totalorder %s6368, %s6361
                %s6373 = sphi 0, %s6380
                %s6374 = sphi %s6364, %s6383
                %s6375 = sphi %s6366, %s6384
              $region110: #{tpu_custom_call.1} parent=99 // loop_header_branch
                %6372 = sbr.rel (%p6369) target = $region114
              $region111: #{tpu_custom_call.1} parent=99 // loop_body
                %v6376 = vld [vmem:[%s6374] sm:$0xff]
                %6377 = vst [vmem:[%s6375] sm:$0xff] %v6376
                %s6378 = sadd.s32 1, %s6373
                %p6379 = scmp.ge.s32.totalorder %s6378, %s6361
                %s6380 = scalar_select %p6379, 0, %s6378
                %s6381 = smul.u32 %s6380, 8
                %s6382 = smul.u32 %s6380, 8
                %s6383 = scalar_lea.vmem %s6364, %s6381 [#allocation2]
                %s6384 = scalar_lea.vmem %s6366, %s6382
              $region112: #{tpu_custom_call.1} parent=99 // loop_footer
                %s6370 = sadd.s32 %s6368, 1
              $region113: #{tpu_custom_call.1} parent=99 // loop_footer_branch
                %6367 = sbr.rel target = $region109
              $region114: #{tpu_custom_call.1} parent=99 // loop_exit
                _
            $region100: #{tpu_custom_call.1} parent=91 // pred_fallthru
              _
          $region92: #{tpu_custom_call.1} parent=87 // pred_fallthru
            _
          %6495 = vnop
        $region88: #{tpu_custom_call.1} parent=83 // pred_fallthru
          _
      $region84: #{tpu_custom_call.1} parent=5 // pred_fallthru
        _
      %p6496 = scmp.le.s32.totalorder 2, %s22
      // Predicated region
      $region137: #{tpu_custom_call.1} parent=5 // pred_check
        %p6497 = pneg %p6496
      $region138: #{tpu_custom_call.1} parent=5 // pred_check_branch
        %6499 = sbr.rel (%p6497) target = $region140
      $region139: #{tpu_custom_call.1} parent=5 // pred_region
        %s6500 = ssub.s32 %s22, 2
        // Predicated region
        $region141: #{tpu_custom_call.1} parent=139 // pred_check
          %p6501 = pneg %p417
        $region142: #{tpu_custom_call.1} parent=139 // pred_check_branch
          %6503 = sbr.rel (%p6501) target = $region144
        $region143: #{tpu_custom_call.1} parent=139 // pred_region
          %s6504 = sand.u32 %s402, 1
          %s6505 = sand.u32 %s402, 1
          %s6506 = smul.addr %s6505, 256
          %s6507 = scalar_lea.vmem [#allocation2], %s6506
        $region144: #{tpu_custom_call.1} parent=139 // pred_fallthru
          _
      $region140: #{tpu_custom_call.1} parent=5 // pred_fallthru
        _
    $region6: #{tpu_custom_call.1} parent=1 // loop_footer
      %s26 = sadd.s32 1, %s22
    $region7: #{tpu_custom_call.1} parent=1 // loop_footer_branch
      %21 = sbr.rel target = $region3
    $region8: #{tpu_custom_call.1} parent=1 // loop_exit
      _

</llo_original>
